<compile_context>
chip_gen: v6e
topology: v6e:2x2x1
jax: 0.10.0
libtpu: 0.0.40
codegen_flags: <defaults>
</compile_context>

<pallas_src>
import functools

import jax
import jax.numpy as jnp
from jax import lax
from jax.experimental import pallas as pl
from jax.experimental.pallas import tpu as pltpu

EPS = 1e-5


def _bn_act(h, gamma, beta, inv_p, relu):
    """Single-pass training-mode BatchNorm over rows of (P, C), biased var.

    var = E[x^2] - E[x]^2 computed in f32 in one sweep; optional fused ReLU.
    """
    s = jnp.sum(h, axis=0, keepdims=True)
    ss = jnp.sum(h * h, axis=0, keepdims=True)
    mu = s * inv_p
    var = jnp.maximum(ss * inv_p - mu * mu, 0.0)
    out = (h - mu) * lax.rsqrt(var + EPS) * gamma + beta
    return jnp.maximum(out, 0.0) if relu else out


def bottleneck_kernel(x_ref, w1_ref, g1_ref, b1_ref, w2_ref, g2_ref, b2_ref,
                      w3_ref, g3_ref, b3_ref, o_ref, *, N, H, W, apply_relu):
    P = N * H * W
    Cmid = w1_ref.shape[1]
    inv_p = 1.0 / P

    # Residual path stays in f32.
    xf = x_ref[...].astype(jnp.float32)                    # (P, Cin)

    # ---- conv1 (1x1): bf16 MXU matmul, f32 accumulate; BN + ReLU in f32 ----
    h1 = jnp.dot(xf.astype(jnp.bfloat16), w1_ref[...],
                 preferred_element_type=jnp.float32)        # (P, Cmid)
    h1 = _bn_act(h1, g1_ref[...], b1_ref[...], inv_p, relu=True)

    # ---- conv2 (3x3, stride=1, pad=1) as ONE im2col matmul (K = 9*Cmid) ----
    hb = h1.astype(jnp.bfloat16).reshape(N, H, W, Cmid)
    zrow = jnp.zeros((N, 1, W, Cmid), jnp.bfloat16)
    hp = jnp.concatenate([zrow, hb, zrow], axis=1)          # pad H -> H+2
    zcol = jnp.zeros((N, H + 2, 1, Cmid), jnp.bfloat16)
    hp = jnp.concatenate([zcol, hp, zcol], axis=2)          # pad W -> W+2
    taps = [hp[:, di:di + H, dj:dj + W, :]
            for di in range(3) for dj in range(3)]
    patches = jnp.concatenate(taps, axis=-1)                # (N, H, W, 9*Cmid)
    patches = patches.reshape(P, 9 * Cmid)
    h2 = jnp.dot(patches, w2_ref[...],
                 preferred_element_type=jnp.float32)        # (P, Cmid)
    h2 = _bn_act(h2, g2_ref[...], b2_ref[...], inv_p, relu=True)

    # ---- conv3 (1x1, expansion=2) + BN ----
    h3 = jnp.dot(h2.astype(jnp.bfloat16), w3_ref[...],
                 preferred_element_type=jnp.float32)        # (P, Cout)
    h3 = _bn_act(h3, g3_ref[...], b3_ref[...], inv_p, relu=False)

    # ---- residual add (+ optional ReLU) ----
    out = h3 + xf                                           # downsample=None => Cin == Cout
    if apply_relu:
        out = jnp.maximum(out, 0.0)
    o_ref[...] = out.astype(o_ref.dtype)


def bottleneck(x, params, apply_relu=False):
    """x: (N, H, W, Cin) float32 NHWC. params: (w1,g1,b1,w2,g2,b2,w3,g3,b3)."""
    N, H, W, Cin = x.shape
    w1, g1, b1, w2, g2, b2, w3, g3, b3 = params
    Cmid = w1.shape[1]
    Cout = w3.shape[1]
    assert Cout == Cin, "downsample=None requires in_dim == out_dim * expansion"

    # Weights to bf16 for the MXU; conv2 pre-flattened to im2col layout
    # (tap-major, channel-minor) to match the in-kernel patch construction.
    w1b = w1.astype(jnp.bfloat16)                                  # (Cin,  Cmid)
    w2b = w2.reshape(9 * Cmid, Cmid).astype(jnp.bfloat16)          # (9*Cmid, Cmid)
    w3b = w3.astype(jnp.bfloat16)                                  # (Cmid, Cout)

    # Free contiguous reshape outside the kernel: kernel works on (P, C).
    x2 = x.reshape(N * H * W, Cin)

    kernel = functools.partial(bottleneck_kernel, N=N, H=H, W=W,
                               apply_relu=apply_relu)
    out = pl.pallas_call(
        kernel,
        out_shape=jax.ShapeDtypeStruct((N * H * W, Cout), x.dtype),
        in_specs=[pl.BlockSpec(memory_space=pltpu.MemorySpace.VMEM)] * 10,
        out_specs=pl.BlockSpec(memory_space=pltpu.MemorySpace.VMEM),
    )(x2, w1b, g1, b1, w2b, g2, b2, w3b, g3, b3)
    return out.reshape(N, H, W, Cout)


def bottleneck_ref(x, params, apply_relu=False):
    """Pure-JAX reference (same semantics), for verification."""
    w1, g1, b1, w2, g2, b2, w3, g3, b3 = params

    def bn(h, g, b):
        mu = jnp.mean(h, axis=(0, 1, 2), keepdims=True)
        var = jnp.mean(jnp.square(h - mu), axis=(0, 1, 2), keepdims=True)
        return (h - mu) / jnp.sqrt(var + EPS) * g.reshape(1, 1, 1, -1) \
            + b.reshape(1, 1, 1, -1)

    h = jnp.einsum('nhwc,cd->nhwd', x, w1)
    h = jax.nn.relu(bn(h, g1, b1))
    h = jax.lax.conv_general_dilated(
        h, w2, window_strides=(1, 1), padding='SAME',
        dimension_numbers=('NHWC', 'HWIO', 'NHWC'))
    h = jax.nn.relu(bn(h, g2, b2))
    h = jnp.einsum('nhwc,cd->nhwd', h, w3)
    h = bn(h, g3, b3)
    out = h + x
    return jax.nn.relu(out) if apply_relu else out


if __name__ == "__main__":
    # Module config (Bottleneck defaults: stride=1, downsample=None, apply_relu=False)
    N, H, W = 2, 16, 16
    out_dim = 16
    expansion = 2
    in_dim = out_dim * expansion  # residual add requires Cin == Cout

    key = jax.random.PRNGKey(0)
    ks = jax.random.split(key, 10)

    x = jax.random.normal(ks[0], (N, H, W, in_dim), dtype=jnp.float32)

    # Deterministic synthetic parameters (shapes implied by the module __init__).
    w1 = 0.1 * jax.random.normal(ks[1], (in_dim, out_dim), dtype=jnp.float32)
    w2 = 0.1 * jax.random.normal(ks[2], (3, 3, out_dim, out_dim), dtype=jnp.float32)
    w3 = 0.1 * jax.random.normal(ks[3], (out_dim, out_dim * expansion), dtype=jnp.float32)
    g1 = jax.random.uniform(ks[4], (1, out_dim), jnp.float32, 0.5, 1.5)
    b1 = 0.1 * jax.random.normal(ks[5], (1, out_dim), dtype=jnp.float32)
    g2 = jax.random.uniform(ks[6], (1, out_dim), jnp.float32, 0.5, 1.5)
    b2 = 0.1 * jax.random.normal(ks[7], (1, out_dim), dtype=jnp.float32)
    g3 = jax.random.uniform(ks[8], (1, out_dim * expansion), jnp.float32, 0.5, 1.5)
    b3 = 0.1 * jax.random.normal(ks[9], (1, out_dim * expansion), dtype=jnp.float32)

    params = (w1, g1, b1, w2, g2, b2, w3, g3, b3)

    # Tolerances accommodate bf16 MXU operands (f32 accumulation) per review.
    for relu_flag in (False, True):
        out = jax.block_until_ready(bottleneck(x, params, apply_relu=relu_flag))
        ref = jax.block_until_ready(bottleneck_ref(x, params, apply_relu=relu_flag))
        assert out.shape == (N, H, W, in_dim)
        assert jnp.allclose(out, ref, rtol=2e-2, atol=3e-2), \
            f"apply_relu={relu_flag}: max abs err {jnp.max(jnp.abs(out - ref))}"

    print("KERNEL_OK")
</pallas_src>

<mosaic_0001>
module attributes {stable_mosaic.version = 11 : i64} {
  func.func @bottleneck_kernel(%arg0: memref<512x32xf32, #tpu.memory_space<vmem>>, %arg1: memref<32x16xbf16, #tpu.memory_space<vmem>>, %arg2: memref<1x16xf32, #tpu.memory_space<vmem>>, %arg3: memref<1x16xf32, #tpu.memory_space<vmem>>, %arg4: memref<144x16xbf16, #tpu.memory_space<vmem>>, %arg5: memref<1x16xf32, #tpu.memory_space<vmem>>, %arg6: memref<1x16xf32, #tpu.memory_space<vmem>>, %arg7: memref<16x32xbf16, #tpu.memory_space<vmem>>, %arg8: memref<1x32xf32, #tpu.memory_space<vmem>>, %arg9: memref<1x32xf32, #tpu.memory_space<vmem>>, %arg10: memref<512x32xf32, #tpu.memory_space<vmem>>) attributes {dimension_semantics = [], scalar_prefetch = 0 : i64, scratch_operands = 0 : i64, tpu.core_type = #tpu.core_type<tc>} {
    %c0 = arith.constant 0 : index
    %c0_0 = arith.constant 0 : index
    %0 = vector.load %arg0[%c0, %c0_0] : memref<512x32xf32, #tpu.memory_space<vmem>>, vector<512x32xf32>
    %1 = arith.truncf %0 : vector<512x32xf32> to vector<512x32xbf16>
    %c0_1 = arith.constant 0 : index
    %c0_2 = arith.constant 0 : index
    %2 = vector.load %arg1[%c0_1, %c0_2] : memref<32x16xbf16, #tpu.memory_space<vmem>>, vector<32x16xbf16>
    %cst = arith.constant dense<0.000000e+00> : vector<512x16xf32>
    %3 = tpu.matmul %1, %2, %cst {dimension_numbers = #tpu.dot_dimension_numbers<[1], [0], [0], [1], [0, 0, 1, 1], [], []>} : vector<512x32xbf16>, vector<32x16xbf16>, vector<512x16xf32> -> vector<512x16xf32>
    %c0_3 = arith.constant 0 : index
    %c0_4 = arith.constant 0 : index
    %4 = vector.load %arg2[%c0_3, %c0_4] : memref<1x16xf32, #tpu.memory_space<vmem>>, vector<1x16xf32>
    %c0_5 = arith.constant 0 : index
    %c0_6 = arith.constant 0 : index
    %5 = vector.load %arg3[%c0_5, %c0_6] : memref<1x16xf32, #tpu.memory_space<vmem>>, vector<1x16xf32>
    %cst_7 = arith.constant dense<0.000000e+00> : vector<16xf32>
    %6 = vector.multi_reduction <add>, %3, %cst_7 [0] : vector<512x16xf32> to vector<16xf32>
    %7 = vector.shape_cast %6 : vector<16xf32> to vector<1x16xf32>
    %8 = arith.mulf %3, %3 : vector<512x16xf32>
    %cst_8 = arith.constant dense<0.000000e+00> : vector<16xf32>
    %9 = vector.multi_reduction <add>, %8, %cst_8 [0] : vector<512x16xf32> to vector<16xf32>
    %10 = vector.shape_cast %9 : vector<16xf32> to vector<1x16xf32>
    %cst_9 = arith.constant 0.001953125 : f32
    %11 = vector.broadcast %cst_9 : f32 to vector<1x16xf32>
    %12 = arith.mulf %7, %11 : vector<1x16xf32>
    %cst_10 = arith.constant 0.001953125 : f32
    %13 = vector.broadcast %cst_10 : f32 to vector<1x16xf32>
    %14 = arith.mulf %10, %13 : vector<1x16xf32>
    %15 = arith.mulf %12, %12 : vector<1x16xf32>
    %16 = arith.subf %14, %15 : vector<1x16xf32>
    %cst_11 = arith.constant 0.000000e+00 : f32
    %17 = vector.broadcast %cst_11 : f32 to vector<1x16xf32>
    %18 = arith.maximumf %16, %17 : vector<1x16xf32>
    %19 = vector.broadcast %12 : vector<1x16xf32> to vector<512x16xf32>
    %20 = arith.subf %3, %19 : vector<512x16xf32>
    %cst_12 = arith.constant 9.99999974E-6 : f32
    %21 = vector.broadcast %cst_12 : f32 to vector<1x16xf32>
    %22 = arith.addf %18, %21 : vector<1x16xf32>
    %23 = math.rsqrt %22 : vector<1x16xf32>
    %24 = vector.broadcast %23 : vector<1x16xf32> to vector<512x16xf32>
    %25 = arith.mulf %20, %24 : vector<512x16xf32>
    %26 = vector.broadcast %4 : vector<1x16xf32> to vector<512x16xf32>
    %27 = arith.mulf %25, %26 : vector<512x16xf32>
    %28 = vector.broadcast %5 : vector<1x16xf32> to vector<512x16xf32>
    %29 = arith.addf %27, %28 : vector<512x16xf32>
    %cst_13 = arith.constant 0.000000e+00 : f32
    %30 = vector.broadcast %cst_13 : f32 to vector<512x16xf32>
    %31 = arith.maximumf %29, %30 : vector<512x16xf32>
    %32 = arith.truncf %31 : vector<512x16xf32> to vector<512x16xbf16>
    %33 = vector.shape_cast %32 : vector<512x16xbf16> to vector<2x16x16x16xbf16>
    %cst_14 = arith.constant 0.000000e+00 : bf16
    %34 = vector.broadcast %cst_14 : bf16 to vector<2x1x16x16xbf16>
    %35 = tpu.concatenate %34, %33, %34 in 1 : vector<2x1x16x16xbf16>, vector<2x16x16x16xbf16>, vector<2x1x16x16xbf16> -> vector<2x18x16x16xbf16>
    %cst_15 = arith.constant 0.000000e+00 : bf16
    %36 = vector.broadcast %cst_15 : bf16 to vector<2x18x1x16xbf16>
    %37 = tpu.concatenate %36, %35, %36 in 2 : vector<2x18x1x16xbf16>, vector<2x18x16x16xbf16>, vector<2x18x1x16xbf16> -> vector<2x18x18x16xbf16>
    %38 = vector.extract_strided_slice %37 {offsets = [0, 0, 0, 0], sizes = [2, 16, 16, 16], strides = [1, 1, 1, 1]} : vector<2x18x18x16xbf16> to vector<2x16x16x16xbf16>
    %39 = vector.extract_strided_slice %37 {offsets = [0, 0, 1, 0], sizes = [2, 16, 16, 16], strides = [1, 1, 1, 1]} : vector<2x18x18x16xbf16> to vector<2x16x16x16xbf16>
    %40 = vector.extract_strided_slice %37 {offsets = [0, 0, 2, 0], sizes = [2, 16, 16, 16], strides = [1, 1, 1, 1]} : vector<2x18x18x16xbf16> to vector<2x16x16x16xbf16>
    %41 = vector.extract_strided_slice %37 {offsets = [0, 1, 0, 0], sizes = [2, 16, 16, 16], strides = [1, 1, 1, 1]} : vector<2x18x18x16xbf16> to vector<2x16x16x16xbf16>
    %42 = vector.extract_strided_slice %37 {offsets = [0, 1, 1, 0], sizes = [2, 16, 16, 16], strides = [1, 1, 1, 1]} : vector<2x18x18x16xbf16> to vector<2x16x16x16xbf16>
    %43 = vector.extract_strided_slice %37 {offsets = [0, 1, 2, 0], sizes = [2, 16, 16, 16], strides = [1, 1, 1, 1]} : vector<2x18x18x16xbf16> to vector<2x16x16x16xbf16>
    %44 = vector.extract_strided_slice %37 {offsets = [0, 2, 0, 0], sizes = [2, 16, 16, 16], strides = [1, 1, 1, 1]} : vector<2x18x18x16xbf16> to vector<2x16x16x16xbf16>
    %45 = vector.extract_strided_slice %37 {offsets = [0, 2, 1, 0], sizes = [2, 16, 16, 16], strides = [1, 1, 1, 1]} : vector<2x18x18x16xbf16> to vector<2x16x16x16xbf16>
    %46 = vector.extract_strided_slice %37 {offsets = [0, 2, 2, 0], sizes = [2, 16, 16, 16], strides = [1, 1, 1, 1]} : vector<2x18x18x16xbf16> to vector<2x16x16x16xbf16>
    %47 = tpu.concatenate %38, %39, %40, %41, %42, %43, %44, %45, %46 in 3 : vector<2x16x16x16xbf16>, vector<2x16x16x16xbf16>, vector<2x16x16x16xbf16>, vector<2x16x16x16xbf16>, vector<2x16x16x16xbf16>, vector<2x16x16x16xbf16>, vector<2x16x16x16xbf16>, vector<2x16x16x16xbf16>, vector<2x16x16x16xbf16> -> vector<2x16x16x144xbf16>
    %48 = vector.shape_cast %47 : vector<2x16x16x144xbf16> to vector<512x144xbf16>
    %c0_16 = arith.constant 0 : index
    %c0_17 = arith.constant 0 : index
    %49 = vector.load %arg4[%c0_16, %c0_17] : memref<144x16xbf16, #tpu.memory_space<vmem>>, vector<144x16xbf16>
    %cst_18 = arith.constant dense<0.000000e+00> : vector<512x16xf32>
    %50 = tpu.matmul %48, %49, %cst_18 {dimension_numbers = #tpu.dot_dimension_numbers<[1], [0], [0], [1], [0, 0, 1, 1], [], []>} : vector<512x144xbf16>, vector<144x16xbf16>, vector<512x16xf32> -> vector<512x16xf32>
    %c0_19 = arith.constant 0 : index
    %c0_20 = arith.constant 0 : index
    %51 = vector.load %arg5[%c0_19, %c0_20] : memref<1x16xf32, #tpu.memory_space<vmem>>, vector<1x16xf32>
    %c0_21 = arith.constant 0 : index
    %c0_22 = arith.constant 0 : index
    %52 = vector.load %arg6[%c0_21, %c0_22] : memref<1x16xf32, #tpu.memory_space<vmem>>, vector<1x16xf32>
    %cst_23 = arith.constant dense<0.000000e+00> : vector<16xf32>
    %53 = vector.multi_reduction <add>, %50, %cst_23 [0] : vector<512x16xf32> to vector<16xf32>
    %54 = vector.shape_cast %53 : vector<16xf32> to vector<1x16xf32>
    %55 = arith.mulf %50, %50 : vector<512x16xf32>
    %cst_24 = arith.constant dense<0.000000e+00> : vector<16xf32>
    %56 = vector.multi_reduction <add>, %55, %cst_24 [0] : vector<512x16xf32> to vector<16xf32>
    %57 = vector.shape_cast %56 : vector<16xf32> to vector<1x16xf32>
    %cst_25 = arith.constant 0.001953125 : f32
    %58 = vector.broadcast %cst_25 : f32 to vector<1x16xf32>
    %59 = arith.mulf %54, %58 : vector<1x16xf32>
    %cst_26 = arith.constant 0.001953125 : f32
    %60 = vector.broadcast %cst_26 : f32 to vector<1x16xf32>
    %61 = arith.mulf %57, %60 : vector<1x16xf32>
    %62 = arith.mulf %59, %59 : vector<1x16xf32>
    %63 = arith.subf %61, %62 : vector<1x16xf32>
    %cst_27 = arith.constant 0.000000e+00 : f32
    %64 = vector.broadcast %cst_27 : f32 to vector<1x16xf32>
    %65 = arith.maximumf %63, %64 : vector<1x16xf32>
    %66 = vector.broadcast %59 : vector<1x16xf32> to vector<512x16xf32>
    %67 = arith.subf %50, %66 : vector<512x16xf32>
    %cst_28 = arith.constant 9.99999974E-6 : f32
    %68 = vector.broadcast %cst_28 : f32 to vector<1x16xf32>
    %69 = arith.addf %65, %68 : vector<1x16xf32>
    %70 = math.rsqrt %69 : vector<1x16xf32>
    %71 = vector.broadcast %70 : vector<1x16xf32> to vector<512x16xf32>
    %72 = arith.mulf %67, %71 : vector<512x16xf32>
    %73 = vector.broadcast %51 : vector<1x16xf32> to vector<512x16xf32>
    %74 = arith.mulf %72, %73 : vector<512x16xf32>
    %75 = vector.broadcast %52 : vector<1x16xf32> to vector<512x16xf32>
    %76 = arith.addf %74, %75 : vector<512x16xf32>
    %cst_29 = arith.constant 0.000000e+00 : f32
    %77 = vector.broadcast %cst_29 : f32 to vector<512x16xf32>
    %78 = arith.maximumf %76, %77 : vector<512x16xf32>
    %79 = arith.truncf %78 : vector<512x16xf32> to vector<512x16xbf16>
    %c0_30 = arith.constant 0 : index
    %c0_31 = arith.constant 0 : index
    %80 = vector.load %arg7[%c0_30, %c0_31] : memref<16x32xbf16, #tpu.memory_space<vmem>>, vector<16x32xbf16>
    %cst_32 = arith.constant dense<0.000000e+00> : vector<512x32xf32>
    %81 = tpu.matmul %79, %80, %cst_32 {dimension_numbers = #tpu.dot_dimension_numbers<[1], [0], [0], [1], [0, 0, 1, 1], [], []>} : vector<512x16xbf16>, vector<16x32xbf16>, vector<512x32xf32> -> vector<512x32xf32>
    %c0_33 = arith.constant 0 : index
    %c0_34 = arith.constant 0 : index
    %82 = vector.load %arg8[%c0_33, %c0_34] : memref<1x32xf32, #tpu.memory_space<vmem>>, vector<1x32xf32>
    %c0_35 = arith.constant 0 : index
    %c0_36 = arith.constant 0 : index
    %83 = vector.load %arg9[%c0_35, %c0_36] : memref<1x32xf32, #tpu.memory_space<vmem>>, vector<1x32xf32>
    %cst_37 = arith.constant dense<0.000000e+00> : vector<32xf32>
    %84 = vector.multi_reduction <add>, %81, %cst_37 [0] : vector<512x32xf32> to vector<32xf32>
    %85 = vector.shape_cast %84 : vector<32xf32> to vector<1x32xf32>
    %86 = arith.mulf %81, %81 : vector<512x32xf32>
    %cst_38 = arith.constant dense<0.000000e+00> : vector<32xf32>
    %87 = vector.multi_reduction <add>, %86, %cst_38 [0] : vector<512x32xf32> to vector<32xf32>
    %88 = vector.shape_cast %87 : vector<32xf32> to vector<1x32xf32>
    %cst_39 = arith.constant 0.001953125 : f32
    %89 = vector.broadcast %cst_39 : f32 to vector<1x32xf32>
    %90 = arith.mulf %85, %89 : vector<1x32xf32>
    %cst_40 = arith.constant 0.001953125 : f32
    %91 = vector.broadcast %cst_40 : f32 to vector<1x32xf32>
    %92 = arith.mulf %88, %91 : vector<1x32xf32>
    %93 = arith.mulf %90, %90 : vector<1x32xf32>
    %94 = arith.subf %92, %93 : vector<1x32xf32>
    %cst_41 = arith.constant 0.000000e+00 : f32
    %95 = vector.broadcast %cst_41 : f32 to vector<1x32xf32>
    %96 = arith.maximumf %94, %95 : vector<1x32xf32>
    %97 = vector.broadcast %90 : vector<1x32xf32> to vector<512x32xf32>
    %98 = arith.subf %81, %97 : vector<512x32xf32>
    %cst_42 = arith.constant 9.99999974E-6 : f32
    %99 = vector.broadcast %cst_42 : f32 to vector<1x32xf32>
    %100 = arith.addf %96, %99 : vector<1x32xf32>
    %101 = math.rsqrt %100 : vector<1x32xf32>
    %102 = vector.broadcast %101 : vector<1x32xf32> to vector<512x32xf32>
    %103 = arith.mulf %98, %102 : vector<512x32xf32>
    %104 = vector.broadcast %82 : vector<1x32xf32> to vector<512x32xf32>
    %105 = arith.mulf %103, %104 : vector<512x32xf32>
    %106 = vector.broadcast %83 : vector<1x32xf32> to vector<512x32xf32>
    %107 = arith.addf %105, %106 : vector<512x32xf32>
    %108 = arith.addf %107, %0 : vector<512x32xf32>
    %c0_43 = arith.constant 0 : index
    %c0_44 = arith.constant 0 : index
    %109 = vector.load %arg10[%c0_43, %c0_44] : memref<512x32xf32, #tpu.memory_space<vmem>>, vector<512x32xf32>
    tpu.vector_store %arg10[%c0_43, %c0_44], %108 {strides = array<i32>} : memref<512x32xf32, #tpu.memory_space<vmem>>, vector<512x32xf32>,
    return
  }
}

</mosaic_0001>

<llo_original>
// kernel: tpu_custom_call.1
$region0: #{tpu_custom_call.1}
  #allocation0 [shape = 'u32[]', space=smem, size = 0x4, offset = 0x4, fixed_abs, tag = 'smem constant byte address 0x4 - core index']
  #allocation1 [shape = 'u32[144,128]{1,0:T(1,128)}', space=vmem, size = 0x12000, scoped, tag = 'internal scratch']
  %s0 = inlined_call_operand.vmem [shape: f32[512,32], index: 0, kind: input, shape index: {}]
  %s1 = inlined_call_operand.vmem [shape: bf16[32,16], index: 1, kind: input, shape index: {}]
  %s2 = inlined_call_operand.vmem [shape: f32[1,16], index: 2, kind: input, shape index: {}]
  %s3 = inlined_call_operand.vmem [shape: f32[1,16], index: 3, kind: input, shape index: {}]
  %s4 = inlined_call_operand.vmem [shape: bf16[144,16], index: 4, kind: input, shape index: {}]
  %s5 = inlined_call_operand.vmem [shape: f32[1,16], index: 5, kind: input, shape index: {}]
  %s6 = inlined_call_operand.vmem [shape: f32[1,16], index: 6, kind: input, shape index: {}]
  %s7 = inlined_call_operand.vmem [shape: bf16[16,32], index: 7, kind: input, shape index: {}]
  %s8 = inlined_call_operand.vmem [shape: f32[1,32], index: 8, kind: input, shape index: {}]
  %s9 = inlined_call_operand.vmem [shape: f32[1,32], index: 9, kind: input, shape index: {}]
  %s10 = inlined_call_operand.vmem [shape: f32[512,32], index: 10, kind: output, shape index: {}]
  %s11 = sld [smem:[#allocation0]]
  $region50: #{tpu_custom_call.1} parent=0
    _
  %s13 = ssub.s32 1, %s11
  %s14 = scalar_select 0, %s13, %s11
  // Predicated region
  $region2: #{tpu_custom_call.1} parent=0 // pred_check
    _
  $region3: #{tpu_custom_call.1} parent=0 // pred_check_branch
    %16 = sbr.rel (0) target = $region5
  $region4: #{tpu_custom_call.1} parent=0 // pred_region
    _
  $region5: #{tpu_custom_call.1} parent=0 // pred_fallthru
    _
  // Predicated region
  $region6: #{tpu_custom_call.1} parent=0 // pred_check
    _
  $region7: #{tpu_custom_call.1} parent=0 // pred_check_branch
    %18 = sbr.rel (0) target = $region9
  $region8: #{tpu_custom_call.1} parent=0 // pred_region
    _
  $region9: #{tpu_custom_call.1} parent=0 // pred_fallthru
    _
  // Predicated region
  $region10: #{tpu_custom_call.1} parent=0 // pred_check
    _
  $region11: #{tpu_custom_call.1} parent=0 // pred_check_branch
    %20 = sbr.rel (0) target = $region13
  $region12: #{tpu_custom_call.1} parent=0 // pred_region
    _
  $region13: #{tpu_custom_call.1} parent=0 // pred_fallthru
    _
  // Predicated region
  $region14: #{tpu_custom_call.1} parent=0 // pred_check
    _
  $region15: #{tpu_custom_call.1} parent=0 // pred_check_branch
    %22 = sbr.rel (0) target = $region17
  $region16: #{tpu_custom_call.1} parent=0 // pred_region
    _
  $region17: #{tpu_custom_call.1} parent=0 // pred_fallthru
    _
  // Predicated region
  $region18: #{tpu_custom_call.1} parent=0 // pred_check
    _
  $region19: #{tpu_custom_call.1} parent=0 // pred_check_branch
    %24 = sbr.rel (0) target = $region21
  $region20: #{tpu_custom_call.1} parent=0 // pred_region
    _
  $region21: #{tpu_custom_call.1} parent=0 // pred_fallthru
    _
  // Predicated region
  $region22: #{tpu_custom_call.1} parent=0 // pred_check
    _
  $region23: #{tpu_custom_call.1} parent=0 // pred_check_branch
    %26 = sbr.rel (0) target = $region25
  $region24: #{tpu_custom_call.1} parent=0 // pred_region
    _
  $region25: #{tpu_custom_call.1} parent=0 // pred_fallthru
    _
  // Predicated region
  $region26: #{tpu_custom_call.1} parent=0 // pred_check
    _
  $region27: #{tpu_custom_call.1} parent=0 // pred_check_branch
    %28 = sbr.rel (0) target = $region29
  $region28: #{tpu_custom_call.1} parent=0 // pred_region
    _
  $region29: #{tpu_custom_call.1} parent=0 // pred_fallthru
    _
  // Predicated region
  $region30: #{tpu_custom_call.1} parent=0 // pred_check
    _
  $region31: #{tpu_custom_call.1} parent=0 // pred_check_branch
    %30 = sbr.rel (0) target = $region33
  $region32: #{tpu_custom_call.1} parent=0 // pred_region
    _
  $region33: #{tpu_custom_call.1} parent=0 // pred_fallthru
    _
  // Predicated region
  $region34: #{tpu_custom_call.1} parent=0 // pred_check
    _
  $region35: #{tpu_custom_call.1} parent=0 // pred_check_branch
    %32 = sbr.rel (0) target = $region37
  $region36: #{tpu_custom_call.1} parent=0 // pred_region
    _
  $region37: #{tpu_custom_call.1} parent=0 // pred_fallthru
    _
  // Predicated region
  $region38: #{tpu_custom_call.1} parent=0 // pred_check
    _
  $region39: #{tpu_custom_call.1} parent=0 // pred_check_branch
    %34 = sbr.rel (0) target = $region41
  $region40: #{tpu_custom_call.1} parent=0 // pred_region
    _
  $region41: #{tpu_custom_call.1} parent=0 // pred_fallthru
    _
  %v36 = vld [vmem:[%s0] sm:$0xff]
  %v37 = vld [vmem:[%s0 + $0x8] sm:$0xff]
  %v38 = vld [vmem:[%s0 + $0x10] sm:$0xff]
  %v39 = vld [vmem:[%s0 + $0x18] sm:$0xff]
  %v40 = vld [vmem:[%s0 + $0x20] sm:$0xff]
  %v41 = vld [vmem:[%s0 + $0x28] sm:$0xff]
  %v42 = vld [vmem:[%s0 + $0x30] sm:$0xff]
  %v43 = vld [vmem:[%s0 + $0x38] sm:$0xff]
  %v44 = vld [vmem:[%s0 + $0x40] sm:$0xff]
  %v45 = vld [vmem:[%s0 + $0x48] sm:$0xff]
  %v46 = vld [vmem:[%s0 + $0x50] sm:$0xff]
  %v47 = vld [vmem:[%s0 + $0x58] sm:$0xff]
  %v48 = vld [vmem:[%s0 + $0x60] sm:$0xff]
  %v49 = vld [vmem:[%s0 + $0x68] sm:$0xff]
  %v50 = vld [vmem:[%s0 + $0x70] sm:$0xff]
  %v51 = vld [vmem:[%s0 + $0x78] sm:$0xff]
  %v52 = vld [vmem:[%s0 + $0x80] sm:$0xff]
  %v53 = vld [vmem:[%s0 + $0x88] sm:$0xff]
  %v54 = vld [vmem:[%s0 + $0x90] sm:$0xff]
  %v55 = vld [vmem:[%s0 + $0x98] sm:$0xff]
  %v56 = vld [vmem:[%s0 + $0xa0] sm:$0xff]
  %v57 = vld [vmem:[%s0 + $0xa8] sm:$0xff]
  %v58 = vld [vmem:[%s0 + $0xb0] sm:$0xff]
  %v59 = vld [vmem:[%s0 + $0xb8] sm:$0xff]
  %v60 = vld [vmem:[%s0 + $0xc0] sm:$0xff]
  %v61 = vld [vmem:[%s0 + $0xc8] sm:$0xff]
  %v62 = vld [vmem:[%s0 + $0xd0] sm:$0xff]
  %v63 = vld [vmem:[%s0 + $0xd8] sm:$0xff]
  %v64 = vld [vmem:[%s0 + $0xe0] sm:$0xff]
  %v65 = vld [vmem:[%s0 + $0xe8] sm:$0xff]
  %v66 = vld [vmem:[%s0 + $0xf0] sm:$0xff]
  %v67 = vld [vmem:[%s0 + $0xf8] sm:$0xff]
  %v68 = vld [vmem:[%s0 + $0x100] sm:$0xff]
  %v69 = vld [vmem:[%s0 + $0x108] sm:$0xff]
  %v70 = vld [vmem:[%s0 + $0x110] sm:$0xff]
  %v71 = vld [vmem:[%s0 + $0x118] sm:$0xff]
  %v72 = vld [vmem:[%s0 + $0x120] sm:$0xff]
  %v73 = vld [vmem:[%s0 + $0x128] sm:$0xff]
  %v74 = vld [vmem:[%s0 + $0x130] sm:$0xff]
  %v75 = vld [vmem:[%s0 + $0x138] sm:$0xff]
  %v76 = vld [vmem:[%s0 + $0x140] sm:$0xff]
  %v77 = vld [vmem:[%s0 + $0x148] sm:$0xff]
  %v78 = vld [vmem:[%s0 + $0x150] sm:$0xff]
  %v79 = vld [vmem:[%s0 + $0x158] sm:$0xff]
  %v80 = vld [vmem:[%s0 + $0x160] sm:$0xff]
  %v81 = vld [vmem:[%s0 + $0x168] sm:$0xff]
  %v82 = vld [vmem:[%s0 + $0x170] sm:$0xff]
  %v83 = vld [vmem:[%s0 + $0x178] sm:$0xff]
  %v84 = vld [vmem:[%s0 + $0x180] sm:$0xff]
  %v85 = vld [vmem:[%s0 + $0x188] sm:$0xff]
  %v86 = vld [vmem:[%s0 + $0x190] sm:$0xff]
  %v87 = vld [vmem:[%s0 + $0x198] sm:$0xff]
  %v88 = vld [vmem:[%s0 + $0x1a0] sm:$0xff]
  %v89 = vld [vmem:[%s0 + $0x1a8] sm:$0xff]
  %v90 = vld [vmem:[%s0 + $0x1b0] sm:$0xff]
  %v91 = vld [vmem:[%s0 + $0x1b8] sm:$0xff]
  %v92 = vld [vmem:[%s0 + $0x1c0] sm:$0xff]
  %v93 = vld [vmem:[%s0 + $0x1c8] sm:$0xff]
  %v94 = vld [vmem:[%s0 + $0x1d0] sm:$0xff]
  %v95 = vld [vmem:[%s0 + $0x1d8] sm:$0xff]
  %v96 = vld [vmem:[%s0 + $0x1e0] sm:$0xff]
  %v97 = vld [vmem:[%s0 + $0x1e8] sm:$0xff]
  %v98 = vld [vmem:[%s0 + $0x1f0] sm:$0xff]
  %v99 = vld [vmem:[%s0 + $0x1f8] sm:$0xff]
  %v100 = vpack.c.bf16 %v37, %v36
  %v101 = vpack.c.bf16 %v39, %v38
  %v102 = vpack.c.bf16 %v41, %v40
  %v103 = vpack.c.bf16 %v43, %v42
  %v104 = vpack.c.bf16 %v45, %v44
  %v105 = vpack.c.bf16 %v47, %v46
  %v106 = vpack.c.bf16 %v49, %v48
  %v107 = vpack.c.bf16 %v51, %v50
  %v108 = vpack.c.bf16 %v53, %v52
  %v109 = vpack.c.bf16 %v55, %v54
  %v110 = vpack.c.bf16 %v57, %v56
  %v111 = vpack.c.bf16 %v59, %v58
  %v112 = vpack.c.bf16 %v61, %v60
  %v113 = vpack.c.bf16 %v63, %v62
  %v114 = vpack.c.bf16 %v65, %v64
  %v115 = vpack.c.bf16 %v67, %v66
  %v116 = vpack.c.bf16 %v69, %v68
  %v117 = vpack.c.bf16 %v71, %v70
  %v118 = vpack.c.bf16 %v73, %v72
  %v119 = vpack.c.bf16 %v75, %v74
  %v120 = vpack.c.bf16 %v77, %v76
  %v121 = vpack.c.bf16 %v79, %v78
  %v122 = vpack.c.bf16 %v81, %v80
  %v123 = vpack.c.bf16 %v83, %v82
  %v124 = vpack.c.bf16 %v85, %v84
  %v125 = vpack.c.bf16 %v87, %v86
  %v126 = vpack.c.bf16 %v89, %v88
  %v127 = vpack.c.bf16 %v91, %v90
  %v128 = vpack.c.bf16 %v93, %v92
  %v129 = vpack.c.bf16 %v95, %v94
  %v130 = vpack.c.bf16 %v97, %v96
  %v131 = vpack.c.bf16 %v99, %v98
  %v132 = vld [vmem:[%s1] sm:$0xf]
  %v133 = vld [vmem:[%s1 + $0x4] sm:$0xf]
  %v134 = vld [vmem:[%s1 + $0x8] sm:$0xf]
  %v135 = vld [vmem:[%s1 + $0xc] sm:$0xf]
  %v140 = vunpack.c.l.b16 %v132
  %v141 = vunpack.c.l.b16 %v133
  %v142 = vunpack.c.l.b16 %v134
  %v143 = vunpack.c.l.b16 %v135
  %v144 = vpack.c.b16 %v141, %v140
  %v145 = vpack.c.b16 %v143, %v142
  %vm148 = vcmask 261120
  %v150 = vsel %vm148, %v100, 0
  %v153 = vsel %vm148, %v101, 0
  %v156 = vsel %vm148, %v102, 0
  %v159 = vsel %vm148, %v103, 0
  %v162 = vsel %vm148, %v104, 0
  %v165 = vsel %vm148, %v105, 0
  %v168 = vsel %vm148, %v106, 0
  %v171 = vsel %vm148, %v107, 0
  %v174 = vsel %vm148, %v108, 0
  %v177 = vsel %vm148, %v109, 0
  %v180 = vsel %vm148, %v110, 0
  %v183 = vsel %vm148, %v111, 0
  %v186 = vsel %vm148, %v112, 0
  %v189 = vsel %vm148, %v113, 0
  %v192 = vsel %vm148, %v114, 0
  %v195 = vsel %vm148, %v115, 0
  %v198 = vsel %vm148, %v116, 0
  %v201 = vsel %vm148, %v117, 0
  %v204 = vsel %vm148, %v118, 0
  %v207 = vsel %vm148, %v119, 0
  %v210 = vsel %vm148, %v120, 0
  %v213 = vsel %vm148, %v121, 0
  %v216 = vsel %vm148, %v122, 0
  %v219 = vsel %vm148, %v123, 0
  %v222 = vsel %vm148, %v124, 0
  %v225 = vsel %vm148, %v125, 0
  %v228 = vsel %vm148, %v126, 0
  %v231 = vsel %vm148, %v127, 0
  %v234 = vsel %vm148, %v128, 0
  %v237 = vsel %vm148, %v129, 0
  %v240 = vsel %vm148, %v130, 0
  %v243 = vsel %vm148, %v131, 0
  %245 = vmatprep.subr.bf16.mxu0 0
  %246 = vmatpush1.bf16.msra.mxu0 0
  %247 = vmatprep.subr.bf16.mxu0 0
  %248 = vmatpush1.bf16.msra.mxu0 0
  %249 = vmatprep.subr.bf16.mxu0 0
  %250 = vmatpush1.bf16.msra.mxu0 0
  %251 = vmatprep.subr.bf16.mxu0 0
  %252 = vmatpush1.bf16.msra.mxu0 0
  %253 = vmatprep.subr.bf16.mxu0 0
  %254 = vmatpush1.bf16.msra.mxu0 0
  %255 = vmatprep.subr.bf16.mxu0 0
  %256 = vmatpush1.bf16.msra.mxu0 0
  %257 = vmatprep.subr.bf16.mxu0 0
  %258 = vmatpush1.bf16.msra.mxu0 %v145
  %259 = vmatprep.subr.bf16.mxu0 0
  %260 = vmatpush1.bf16.msra.mxu0 %v144
  %261 = vmatprep.subr.bf16.mxu0 0
  %262 = vmatpush2.bf16.msra.mxu0 0
  %263 = vmatprep.subr.bf16.mxu0 0
  %264 = vmatpush2.bf16.msra.mxu0 0
  %265 = vmatprep.subr.bf16.mxu0 0
  %266 = vmatpush2.bf16.msra.mxu0 0
  %267 = vmatprep.subr.bf16.mxu0 0
  %268 = vmatpush2.bf16.msra.mxu0 0
  %269 = vmatprep.subr.bf16.mxu0 0
  %270 = vmatpush2.bf16.msra.mxu0 0
  %271 = vmatprep.subr.bf16.mxu0 0
  %272 = vmatpush2.bf16.msra.mxu0 0
  %273 = vmatprep.subr.bf16.mxu0 0
  %274 = vmatpush2.bf16.msra.mxu0 0
  %275 = vmatprep.subr.bf16.mxu0 0
  %276 = vmatpush2.bf16.msra.mxu0 0
  %277 = vmatprep.mubr.bf16.mxu0 0
  %278 = vmatmul.mubr.bf16.gmra.mxu0 %v150
  %v279 = vpop.f32.mrf.mxu0
  %v280 = vadd.f32 0.0, %v279
  %v281 = vpop.f32.mrf.mxu0
  %v282 = vpop.f32.mrf.mxu0
  %v283 = vadd.f32 0.0, %v282
  %v284 = vpop.f32.mrf.mxu0
  %285 = vmatprep.mubr.bf16.mxu0 0
  %286 = vmatmul.mubr.bf16.gmra.mxu0 %v153
  %v287 = vpop.f32.mrf.mxu0
  %v288 = vadd.f32 0.0, %v287
  %v289 = vpop.f32.mrf.mxu0
  %v290 = vpop.f32.mrf.mxu0
  %v291 = vadd.f32 0.0, %v290
  %v292 = vpop.f32.mrf.mxu0
  %293 = vmatprep.mubr.bf16.mxu0 0
  %294 = vmatmul.mubr.bf16.gmra.mxu0 %v156
  %v295 = vpop.f32.mrf.mxu0
  %v296 = vadd.f32 0.0, %v295
  %v297 = vpop.f32.mrf.mxu0
  %v298 = vpop.f32.mrf.mxu0
  %v299 = vadd.f32 0.0, %v298
  %v300 = vpop.f32.mrf.mxu0
  %301 = vmatprep.mubr.bf16.mxu0 0
  %302 = vmatmul.mubr.bf16.gmra.mxu0 %v159
  %v303 = vpop.f32.mrf.mxu0
  %v304 = vadd.f32 0.0, %v303
  %v305 = vpop.f32.mrf.mxu0
  %v306 = vpop.f32.mrf.mxu0
  %v307 = vadd.f32 0.0, %v306
  %v308 = vpop.f32.mrf.mxu0
  %309 = vmatprep.mubr.bf16.mxu0 0
  %310 = vmatmul.mubr.bf16.gmra.mxu0 %v162
  %v311 = vpop.f32.mrf.mxu0
  %v312 = vadd.f32 0.0, %v311
  %v313 = vpop.f32.mrf.mxu0
  %v314 = vpop.f32.mrf.mxu0
  %v315 = vadd.f32 0.0, %v314
  %v316 = vpop.f32.mrf.mxu0
  %317 = vmatprep.mubr.bf16.mxu0 0
  %318 = vmatmul.mubr.bf16.gmra.mxu0 %v165
  %v319 = vpop.f32.mrf.mxu0
  %v320 = vadd.f32 0.0, %v319
  %v321 = vpop.f32.mrf.mxu0
  %v322 = vpop.f32.mrf.mxu0
  %v323 = vadd.f32 0.0, %v322
  %v324 = vpop.f32.mrf.mxu0
  %325 = vmatprep.mubr.bf16.mxu0 0
  %326 = vmatmul.mubr.bf16.gmra.mxu0 %v168
  %v327 = vpop.f32.mrf.mxu0
  %v328 = vadd.f32 0.0, %v327
  %v329 = vpop.f32.mrf.mxu0
  %v330 = vpop.f32.mrf.mxu0
  %v331 = vadd.f32 0.0, %v330
  %v332 = vpop.f32.mrf.mxu0
  %333 = vmatprep.mubr.bf16.mxu0 0
  %334 = vmatmul.mubr.bf16.gmra.mxu0 %v171
  %v335 = vpop.f32.mrf.mxu0
  %v336 = vadd.f32 0.0, %v335
  %v337 = vpop.f32.mrf.mxu0
  %v338 = vpop.f32.mrf.mxu0
  %v339 = vadd.f32 0.0, %v338
  %v340 = vpop.f32.mrf.mxu0
  %341 = vmatprep.mubr.bf16.mxu0 0
  %342 = vmatmul.mubr.bf16.gmra.mxu0 %v174
  %v343 = vpop.f32.mrf.mxu0
  %v344 = vadd.f32 0.0, %v343
  %v345 = vpop.f32.mrf.mxu0
  %v346 = vpop.f32.mrf.mxu0
  %v347 = vadd.f32 0.0, %v346
  %v348 = vpop.f32.mrf.mxu0
  %349 = vmatprep.mubr.bf16.mxu0 0
  %350 = vmatmul.mubr.bf16.gmra.mxu0 %v177
  %v351 = vpop.f32.mrf.mxu0
  %v352 = vadd.f32 0.0, %v351
  %v353 = vpop.f32.mrf.mxu0
  %v354 = vpop.f32.mrf.mxu0
  %v355 = vadd.f32 0.0, %v354
  %v356 = vpop.f32.mrf.mxu0
  %357 = vmatprep.mubr.bf16.mxu0 0
  %358 = vmatmul.mubr.bf16.gmra.mxu0 %v180
  %v359 = vpop.f32.mrf.mxu0
  %v360 = vadd.f32 0.0, %v359
  %v361 = vpop.f32.mrf.mxu0
  %v362 = vpop.f32.mrf.mxu0
  %v363 = vadd.f32 0.0, %v362
  %v364 = vpop.f32.mrf.mxu0
  %365 = vmatprep.mubr.bf16.mxu0 0
  %366 = vmatmul.mubr.bf16.gmra.mxu0 %v183
  %v367 = vpop.f32.mrf.mxu0
  %v368 = vadd.f32 0.0, %v367
  %v369 = vpop.f32.mrf.mxu0
  %v370 = vpop.f32.mrf.mxu0
  %v371 = vadd.f32 0.0, %v370
  %v372 = vpop.f32.mrf.mxu0
  %373 = vmatprep.mubr.bf16.mxu0 0
  %374 = vmatmul.mubr.bf16.gmra.mxu0 %v186
  %v375 = vpop.f32.mrf.mxu0
  %v376 = vadd.f32 0.0, %v375
  %v377 = vpop.f32.mrf.mxu0
  %v378 = vpop.f32.mrf.mxu0
  %v379 = vadd.f32 0.0, %v378
  %v380 = vpop.f32.mrf.mxu0
  %381 = vmatprep.mubr.bf16.mxu0 0
  %382 = vmatmul.mubr.bf16.gmra.mxu0 %v189
  %v383 = vpop.f32.mrf.mxu0
  %v384 = vadd.f32 0.0, %v383
  %v385 = vpop.f32.mrf.mxu0
  %v386 = vpop.f32.mrf.mxu0
  %v387 = vadd.f32 0.0, %v386
  %v388 = vpop.f32.mrf.mxu0
  %389 = vmatprep.mubr.bf16.mxu0 0
  %390 = vmatmul.mubr.bf16.gmra.mxu0 %v192
  %v391 = vpop.f32.mrf.mxu0
  %v392 = vadd.f32 0.0, %v391
  %v393 = vpop.f32.mrf.mxu0
  %v394 = vpop.f32.mrf.mxu0
  %v395 = vadd.f32 0.0, %v394
  %v396 = vpop.f32.mrf.mxu0
  %397 = vmatprep.mubr.bf16.mxu0 0
  %398 = vmatmul.mubr.bf16.gmra.mxu0 %v195
  %v399 = vpop.f32.mrf.mxu0
  %v400 = vadd.f32 0.0, %v399
  %v401 = vpop.f32.mrf.mxu0
  %v402 = vpop.f32.mrf.mxu0
  %v403 = vadd.f32 0.0, %v402
  %v404 = vpop.f32.mrf.mxu0
  %405 = vmatprep.mubr.bf16.mxu0 0
  %406 = vmatmul.mubr.bf16.gmra.mxu0 %v198
  %v407 = vpop.f32.mrf.mxu0
  %v408 = vadd.f32 0.0, %v407
  %v409 = vpop.f32.mrf.mxu0
  %v410 = vpop.f32.mrf.mxu0
  %v411 = vadd.f32 0.0, %v410
  %v412 = vpop.f32.mrf.mxu0
  %413 = vmatprep.mubr.bf16.mxu0 0
  %414 = vmatmul.mubr.bf16.gmra.mxu0 %v201
  %v415 = vpop.f32.mrf.mxu0
  %v416 = vadd.f32 0.0, %v415
  %v417 = vpop.f32.mrf.mxu0
  %v418 = vpop.f32.mrf.mxu0
  %v419 = vadd.f32 0.0, %v418
  %v420 = vpop.f32.mrf.mxu0
  %421 = vmatprep.mubr.bf16.mxu0 0
  %422 = vmatmul.mubr.bf16.gmra.mxu0 %v204
  %v423 = vpop.f32.mrf.mxu0
  %v424 = vadd.f32 0.0, %v423
  %v425 = vpop.f32.mrf.mxu0
  %v426 = vpop.f32.mrf.mxu0
  %v427 = vadd.f32 0.0, %v426
  %v428 = vpop.f32.mrf.mxu0
  %429 = vmatprep.mubr.bf16.mxu0 0
  %430 = vmatmul.mubr.bf16.gmra.mxu0 %v207
  %v431 = vpop.f32.mrf.mxu0
  %v432 = vadd.f32 0.0, %v431
  %v433 = vpop.f32.mrf.mxu0
  %v434 = vpop.f32.mrf.mxu0
  %v435 = vadd.f32 0.0, %v434
  %v436 = vpop.f32.mrf.mxu0
  %437 = vmatprep.mubr.bf16.mxu0 0
  %438 = vmatmul.mubr.bf16.gmra.mxu0 %v210
  %v439 = vpop.f32.mrf.mxu0
  %v440 = vadd.f32 0.0, %v439
  %v441 = vpop.f32.mrf.mxu0
  %v442 = vpop.f32.mrf.mxu0
  %v443 = vadd.f32 0.0, %v442
  %v444 = vpop.f32.mrf.mxu0
  %445 = vmatprep.mubr.bf16.mxu0 0
  %446 = vmatmul.mubr.bf16.gmra.mxu0 %v213
  %v447 = vpop.f32.mrf.mxu0
  %v448 = vadd.f32 0.0, %v447
  %v449 = vpop.f32.mrf.mxu0
  %v450 = vpop.f32.mrf.mxu0
  %v451 = vadd.f32 0.0, %v450
  %v452 = vpop.f32.mrf.mxu0
  %453 = vmatprep.mubr.bf16.mxu0 0
  %454 = vmatmul.mubr.bf16.gmra.mxu0 %v216
  %v455 = vpop.f32.mrf.mxu0
  %v456 = vadd.f32 0.0, %v455
  %v457 = vpop.f32.mrf.mxu0
  %v458 = vpop.f32.mrf.mxu0
  %v459 = vadd.f32 0.0, %v458
  %v460 = vpop.f32.mrf.mxu0
  %461 = vmatprep.mubr.bf16.mxu0 0
  %462 = vmatmul.mubr.bf16.gmra.mxu0 %v219
  %v463 = vpop.f32.mrf.mxu0
  %v464 = vadd.f32 0.0, %v463
  %v465 = vpop.f32.mrf.mxu0
  %v466 = vpop.f32.mrf.mxu0
  %v467 = vadd.f32 0.0, %v466
  %v468 = vpop.f32.mrf.mxu0
  %469 = vmatprep.mubr.bf16.mxu0 0
  %470 = vmatmul.mubr.bf16.gmra.mxu0 %v222
  %v471 = vpop.f32.mrf.mxu0
  %v472 = vadd.f32 0.0, %v471
  %v473 = vpop.f32.mrf.mxu0
  %v474 = vpop.f32.mrf.mxu0
  %v475 = vadd.f32 0.0, %v474
  %v476 = vpop.f32.mrf.mxu0
  %477 = vmatprep.mubr.bf16.mxu0 0
  %478 = vmatmul.mubr.bf16.gmra.mxu0 %v225
  %v479 = vpop.f32.mrf.mxu0
  %v480 = vadd.f32 0.0, %v479
  %v481 = vpop.f32.mrf.mxu0
  %v482 = vpop.f32.mrf.mxu0
  %v483 = vadd.f32 0.0, %v482
  %v484 = vpop.f32.mrf.mxu0
  %485 = vmatprep.mubr.bf16.mxu0 0
  %486 = vmatmul.mubr.bf16.gmra.mxu0 %v228
  %v487 = vpop.f32.mrf.mxu0
  %v488 = vadd.f32 0.0, %v487
  %v489 = vpop.f32.mrf.mxu0
  %v490 = vpop.f32.mrf.mxu0
  %v491 = vadd.f32 0.0, %v490
  %v492 = vpop.f32.mrf.mxu0
  %493 = vmatprep.mubr.bf16.mxu0 0
  %494 = vmatmul.mubr.bf16.gmra.mxu0 %v231
  %v495 = vpop.f32.mrf.mxu0
  %v496 = vadd.f32 0.0, %v495
  %v497 = vpop.f32.mrf.mxu0
  %v498 = vpop.f32.mrf.mxu0
  %v499 = vadd.f32 0.0, %v498
  %v500 = vpop.f32.mrf.mxu0
  %501 = vmatprep.mubr.bf16.mxu0 0
  %502 = vmatmul.mubr.bf16.gmra.mxu0 %v234
  %v503 = vpop.f32.mrf.mxu0
  %v504 = vadd.f32 0.0, %v503
  %v505 = vpop.f32.mrf.mxu0
  %v506 = vpop.f32.mrf.mxu0
  %v507 = vadd.f32 0.0, %v506
  %v508 = vpop.f32.mrf.mxu0
  %509 = vmatprep.mubr.bf16.mxu0 0
  %510 = vmatmul.mubr.bf16.gmra.mxu0 %v237
  %v511 = vpop.f32.mrf.mxu0
  %v512 = vadd.f32 0.0, %v511
  %v513 = vpop.f32.mrf.mxu0
  %v514 = vpop.f32.mrf.mxu0
  %v515 = vadd.f32 0.0, %v514
  %v516 = vpop.f32.mrf.mxu0
  %517 = vmatprep.mubr.bf16.mxu0 0
  %518 = vmatmul.mubr.bf16.gmra.mxu0 %v240
  %v519 = vpop.f32.mrf.mxu0
  %v520 = vadd.f32 0.0, %v519
  %v521 = vpop.f32.mrf.mxu0
  %v522 = vpop.f32.mrf.mxu0
  %v523 = vadd.f32 0.0, %v522
  %v524 = vpop.f32.mrf.mxu0
  %525 = vmatprep.mubr.bf16.mxu0 0
  %526 = vmatmul.mubr.bf16.gmra.mxu0 %v243
  %v527 = vpop.f32.mrf.mxu0
  %v528 = vadd.f32 0.0, %v527
  %v529 = vpop.f32.mrf.mxu0
  %v530 = vpop.f32.mrf.mxu0
  %v531 = vadd.f32 0.0, %v530
  %v532 = vpop.f32.mrf.mxu0
  %533 = vdwg.mxu0
  %v534 = vld [vmem:[%s2] sm:$0x1]
  %v535 = vld [vmem:[%s3] sm:$0x1]
  %vm536 = vcmask 130048
  %v537 = vsel %vm536, %v280, 0.0
  %v538 = vsel %vm536, %v283, 0.0
  %v539 = vadd.f32 %v537, %v538
  %v540 = vsel %vm536, %v288, 0.0
  %v541 = vadd.f32 %v539, %v540
  %v542 = vsel %vm536, %v291, 0.0
  %v543 = vadd.f32 %v541, %v542
  %v544 = vsel %vm536, %v296, 0.0
  %v545 = vadd.f32 %v543, %v544
  %v546 = vsel %vm536, %v299, 0.0
  %v547 = vadd.f32 %v545, %v546
  %v548 = vsel %vm536, %v304, 0.0
  %v549 = vadd.f32 %v547, %v548
  %v550 = vsel %vm536, %v307, 0.0
  %v551 = vadd.f32 %v549, %v550
  %v552 = vsel %vm536, %v312, 0.0
  %v553 = vadd.f32 %v551, %v552
  %v554 = vsel %vm536, %v315, 0.0
  %v555 = vadd.f32 %v553, %v554
  %v556 = vsel %vm536, %v320, 0.0
  %v557 = vadd.f32 %v555, %v556
  %v558 = vsel %vm536, %v323, 0.0
  %v559 = vadd.f32 %v557, %v558
  %v560 = vsel %vm536, %v328, 0.0
  %v561 = vadd.f32 %v559, %v560
  %v562 = vsel %vm536, %v331, 0.0
  %v563 = vadd.f32 %v561, %v562
  %v564 = vsel %vm536, %v336, 0.0
  %v565 = vadd.f32 %v563, %v564
  %v566 = vsel %vm536, %v339, 0.0
  %v567 = vadd.f32 %v565, %v566
  %v568 = vsel %vm536, %v344, 0.0
  %v569 = vadd.f32 %v567, %v568
  %v570 = vsel %vm536, %v347, 0.0
  %v571 = vadd.f32 %v569, %v570
  %v572 = vsel %vm536, %v352, 0.0
  %v573 = vadd.f32 %v571, %v572
  %v574 = vsel %vm536, %v355, 0.0
  %v575 = vadd.f32 %v573, %v574
  %v576 = vsel %vm536, %v360, 0.0
  %v577 = vadd.f32 %v575, %v576
  %v578 = vsel %vm536, %v363, 0.0
  %v579 = vadd.f32 %v577, %v578
  %v580 = vsel %vm536, %v368, 0.0
  %v581 = vadd.f32 %v579, %v580
  %v582 = vsel %vm536, %v371, 0.0
  %v583 = vadd.f32 %v581, %v582
  %v584 = vsel %vm536, %v376, 0.0
  %v585 = vadd.f32 %v583, %v584
  %v586 = vsel %vm536, %v379, 0.0
  %v587 = vadd.f32 %v585, %v586
  %v588 = vsel %vm536, %v384, 0.0
  %v589 = vadd.f32 %v587, %v588
  %v590 = vsel %vm536, %v387, 0.0
  %v591 = vadd.f32 %v589, %v590
  %v592 = vsel %vm536, %v392, 0.0
  %v593 = vadd.f32 %v591, %v592
  %v594 = vsel %vm536, %v395, 0.0
  %v595 = vadd.f32 %v593, %v594
  %v596 = vsel %vm536, %v400, 0.0
  %v597 = vadd.f32 %v595, %v596
  %v598 = vsel %vm536, %v403, 0.0
  %v599 = vadd.f32 %v597, %v598
  %v600 = vsel %vm536, %v408, 0.0
  %v601 = vadd.f32 %v599, %v600
  %v602 = vsel %vm536, %v411, 0.0
  %v603 = vadd.f32 %v601, %v602
  %v604 = vsel %vm536, %v416, 0.0
  %v605 = vadd.f32 %v603, %v604
  %v606 = vsel %vm536, %v419, 0.0
  %v607 = vadd.f32 %v605, %v606
  %v608 = vsel %vm536, %v424, 0.0
  %v609 = vadd.f32 %v607, %v608
  %v610 = vsel %vm536, %v427, 0.0
  %v611 = vadd.f32 %v609, %v610
  %v612 = vsel %vm536, %v432, 0.0
  %v613 = vadd.f32 %v611, %v612
  %v614 = vsel %vm536, %v435, 0.0
  %v615 = vadd.f32 %v613, %v614
  %v616 = vsel %vm536, %v440, 0.0
  %v617 = vadd.f32 %v615, %v616
  %v618 = vsel %vm536, %v443, 0.0
  %v619 = vadd.f32 %v617, %v618
  %v620 = vsel %vm536, %v448, 0.0
  %v621 = vadd.f32 %v619, %v620
  %v622 = vsel %vm536, %v451, 0.0
  %v623 = vadd.f32 %v621, %v622
  %v624 = vsel %vm536, %v456, 0.0
  %v625 = vadd.f32 %v623, %v624
  %v626 = vsel %vm536, %v459, 0.0
  %v627 = vadd.f32 %v625, %v626
  %v628 = vsel %vm536, %v464, 0.0
  %v629 = vadd.f32 %v627, %v628
  %v630 = vsel %vm536, %v467, 0.0
  %v631 = vadd.f32 %v629, %v630
  %v632 = vsel %vm536, %v472, 0.0
  %v633 = vadd.f32 %v631, %v632
  %v634 = vsel %vm536, %v475, 0.0
  %v635 = vadd.f32 %v633, %v634
  %v636 = vsel %vm536, %v480, 0.0
  %v637 = vadd.f32 %v635, %v636
  %v638 = vsel %vm536, %v483, 0.0
  %v639 = vadd.f32 %v637, %v638
  %v640 = vsel %vm536, %v488, 0.0
  %v641 = vadd.f32 %v639, %v640
  %v642 = vsel %vm536, %v491, 0.0
  %v643 = vadd.f32 %v641, %v642
  %v644 = vsel %vm536, %v496, 0.0
  %v645 = vadd.f32 %v643, %v644
  %v646 = vsel %vm536, %v499, 0.0
  %v647 = vadd.f32 %v645, %v646
  %v648 = vsel %vm536, %v504, 0.0
  %v649 = vadd.f32 %v647, %v648
  %v650 = vsel %vm536, %v507, 0.0
  %v651 = vadd.f32 %v649, %v650
  %v652 = vsel %vm536, %v512, 0.0
  %v653 = vadd.f32 %v651, %v652
  %v654 = vsel %vm536, %v515, 0.0
  %v655 = vadd.f32 %v653, %v654
  %v656 = vsel %vm536, %v520, 0.0
  %v657 = vadd.f32 %v655, %v656
  %v658 = vsel %vm536, %v523, 0.0
  %v659 = vadd.f32 %v657, %v658
  %v660 = vsel %vm536, %v528, 0.0
  %v661 = vadd.f32 %v659, %v660
  %v662 = vsel %vm536, %v531, 0.0
  %v663 = vadd.f32 %v661, %v662
  %v664 = vrot.slane %v663, 4
  %v665 = vadd.f32 %v663, %v664
  %v666 = vrot.slane %v665, 2
  %v667 = vadd.f32 %v665, %v666
  %v668 = vrot.slane %v667, 1
  %v669 = vadd.f32 %v667, %v668
  %v670 = vmul.f32 %v280, %v280
  %v671 = vmul.f32 %v283, %v283
  %v672 = vmul.f32 %v288, %v288
  %v673 = vmul.f32 %v291, %v291
  %v674 = vmul.f32 %v296, %v296
  %v675 = vmul.f32 %v299, %v299
  %v676 = vmul.f32 %v304, %v304
  %v677 = vmul.f32 %v307, %v307
  %v678 = vmul.f32 %v312, %v312
  %v679 = vmul.f32 %v315, %v315
  %v680 = vmul.f32 %v320, %v320
  %v681 = vmul.f32 %v323, %v323
  %v682 = vmul.f32 %v328, %v328
  %v683 = vmul.f32 %v331, %v331
  %v684 = vmul.f32 %v336, %v336
  %v685 = vmul.f32 %v339, %v339
  %v686 = vmul.f32 %v344, %v344
  %v687 = vmul.f32 %v347, %v347
  %v688 = vmul.f32 %v352, %v352
  %v689 = vmul.f32 %v355, %v355
  %v690 = vmul.f32 %v360, %v360
  %v691 = vmul.f32 %v363, %v363
  %v692 = vmul.f32 %v368, %v368
  %v693 = vmul.f32 %v371, %v371
  %v694 = vmul.f32 %v376, %v376
  %v695 = vmul.f32 %v379, %v379
  %v696 = vmul.f32 %v384, %v384
  %v697 = vmul.f32 %v387, %v387
  %v698 = vmul.f32 %v392, %v392
  %v699 = vmul.f32 %v395, %v395
  %v700 = vmul.f32 %v400, %v400
  %v701 = vmul.f32 %v403, %v403
  %v702 = vmul.f32 %v408, %v408
  %v703 = vmul.f32 %v411, %v411
  %v704 = vmul.f32 %v416, %v416
  %v705 = vmul.f32 %v419, %v419
  %v706 = vmul.f32 %v424, %v424
  %v707 = vmul.f32 %v427, %v427
  %v708 = vmul.f32 %v432, %v432
  %v709 = vmul.f32 %v435, %v435
  %v710 = vmul.f32 %v440, %v440
  %v711 = vmul.f32 %v443, %v443
  %v712 = vmul.f32 %v448, %v448
  %v713 = vmul.f32 %v451, %v451
  %v714 = vmul.f32 %v456, %v456
  %v715 = vmul.f32 %v459, %v459
  %v716 = vmul.f32 %v464, %v464
  %v717 = vmul.f32 %v467, %v467
  %v718 = vmul.f32 %v472, %v472
  %v719 = vmul.f32 %v475, %v475
  %v720 = vmul.f32 %v480, %v480
  %v721 = vmul.f32 %v483, %v483
  %v722 = vmul.f32 %v488, %v488
  %v723 = vmul.f32 %v491, %v491
  %v724 = vmul.f32 %v496, %v496
  %v725 = vmul.f32 %v499, %v499
  %v726 = vmul.f32 %v504, %v504
  %v727 = vmul.f32 %v507, %v507
  %v728 = vmul.f32 %v512, %v512
  %v729 = vmul.f32 %v515, %v515
  %v730 = vmul.f32 %v520, %v520
  %v731 = vmul.f32 %v523, %v523
  %v732 = vmul.f32 %v528, %v528
  %v733 = vmul.f32 %v531, %v531
  %v734 = vsel %vm536, %v670, 0.0
  %v735 = vsel %vm536, %v671, 0.0
  %v736 = vadd.f32 %v734, %v735
  %v737 = vsel %vm536, %v672, 0.0
  %v738 = vadd.f32 %v736, %v737
  %v739 = vsel %vm536, %v673, 0.0
  %v740 = vadd.f32 %v738, %v739
  %v741 = vsel %vm536, %v674, 0.0
  %v742 = vadd.f32 %v740, %v741
  %v743 = vsel %vm536, %v675, 0.0
  %v744 = vadd.f32 %v742, %v743
  %v745 = vsel %vm536, %v676, 0.0
  %v746 = vadd.f32 %v744, %v745
  %v747 = vsel %vm536, %v677, 0.0
  %v748 = vadd.f32 %v746, %v747
  %v749 = vsel %vm536, %v678, 0.0
  %v750 = vadd.f32 %v748, %v749
  %v751 = vsel %vm536, %v679, 0.0
  %v752 = vadd.f32 %v750, %v751
  %v753 = vsel %vm536, %v680, 0.0
  %v754 = vadd.f32 %v752, %v753
  %v755 = vsel %vm536, %v681, 0.0
  %v756 = vadd.f32 %v754, %v755
  %v757 = vsel %vm536, %v682, 0.0
  %v758 = vadd.f32 %v756, %v757
  %v759 = vsel %vm536, %v683, 0.0
  %v760 = vadd.f32 %v758, %v759
  %v761 = vsel %vm536, %v684, 0.0
  %v762 = vadd.f32 %v760, %v761
  %v763 = vsel %vm536, %v685, 0.0
  %v764 = vadd.f32 %v762, %v763
  %v765 = vsel %vm536, %v686, 0.0
  %v766 = vadd.f32 %v764, %v765
  %v767 = vsel %vm536, %v687, 0.0
  %v768 = vadd.f32 %v766, %v767
  %v769 = vsel %vm536, %v688, 0.0
  %v770 = vadd.f32 %v768, %v769
  %v771 = vsel %vm536, %v689, 0.0
  %v772 = vadd.f32 %v770, %v771
  %v773 = vsel %vm536, %v690, 0.0
  %v774 = vadd.f32 %v772, %v773
  %v775 = vsel %vm536, %v691, 0.0
  %v776 = vadd.f32 %v774, %v775
  %v777 = vsel %vm536, %v692, 0.0
  %v778 = vadd.f32 %v776, %v777
  %v779 = vsel %vm536, %v693, 0.0
  %v780 = vadd.f32 %v778, %v779
  %v781 = vsel %vm536, %v694, 0.0
  %v782 = vadd.f32 %v780, %v781
  %v783 = vsel %vm536, %v695, 0.0
  %v784 = vadd.f32 %v782, %v783
  %v785 = vsel %vm536, %v696, 0.0
  %v786 = vadd.f32 %v784, %v785
  %v787 = vsel %vm536, %v697, 0.0
  %v788 = vadd.f32 %v786, %v787
  %v789 = vsel %vm536, %v698, 0.0
  %v790 = vadd.f32 %v788, %v789
  %v791 = vsel %vm536, %v699, 0.0
  %v792 = vadd.f32 %v790, %v791
  %v793 = vsel %vm536, %v700, 0.0
  %v794 = vadd.f32 %v792, %v793
  %v795 = vsel %vm536, %v701, 0.0
  %v796 = vadd.f32 %v794, %v795
  %v797 = vsel %vm536, %v702, 0.0
  %v798 = vadd.f32 %v796, %v797
  %v799 = vsel %vm536, %v703, 0.0
  %v800 = vadd.f32 %v798, %v799
  %v801 = vsel %vm536, %v704, 0.0
  %v802 = vadd.f32 %v800, %v801
  %v803 = vsel %vm536, %v705, 0.0
  %v804 = vadd.f32 %v802, %v803
  %v805 = vsel %vm536, %v706, 0.0
  %v806 = vadd.f32 %v804, %v805
  %v807 = vsel %vm536, %v707, 0.0
  %v808 = vadd.f32 %v806, %v807
  %v809 = vsel %vm536, %v708, 0.0
  %v810 = vadd.f32 %v808, %v809
  %v811 = vsel %vm536, %v709, 0.0
  %v812 = vadd.f32 %v810, %v811
  %v813 = vsel %vm536, %v710, 0.0
  %v814 = vadd.f32 %v812, %v813
  %v815 = vsel %vm536, %v711, 0.0
  %v816 = vadd.f32 %v814, %v815
  %v817 = vsel %vm536, %v712, 0.0
  %v818 = vadd.f32 %v816, %v817
  %v819 = vsel %vm536, %v713, 0.0
  %v820 = vadd.f32 %v818, %v819
  %v821 = vsel %vm536, %v714, 0.0
  %v822 = vadd.f32 %v820, %v821
  %v823 = vsel %vm536, %v715, 0.0
  %v824 = vadd.f32 %v822, %v823
  %v825 = vsel %vm536, %v716, 0.0
  %v826 = vadd.f32 %v824, %v825
  %v827 = vsel %vm536, %v717, 0.0
  %v828 = vadd.f32 %v826, %v827
  %v829 = vsel %vm536, %v718, 0.0
  %v830 = vadd.f32 %v828, %v829
  %v831 = vsel %vm536, %v719, 0.0
  %v832 = vadd.f32 %v830, %v831
  %v833 = vsel %vm536, %v720, 0.0
  %v834 = vadd.f32 %v832, %v833
  %v835 = vsel %vm536, %v721, 0.0
  %v836 = vadd.f32 %v834, %v835
  %v837 = vsel %vm536, %v722, 0.0
  %v838 = vadd.f32 %v836, %v837
  %v839 = vsel %vm536, %v723, 0.0
  %v840 = vadd.f32 %v838, %v839
  %v841 = vsel %vm536, %v724, 0.0
  %v842 = vadd.f32 %v840, %v841
  %v843 = vsel %vm536, %v725, 0.0
  %v844 = vadd.f32 %v842, %v843
  %v845 = vsel %vm536, %v726, 0.0
  %v846 = vadd.f32 %v844, %v845
  %v847 = vsel %vm536, %v727, 0.0
  %v848 = vadd.f32 %v846, %v847
  %v849 = vsel %vm536, %v728, 0.0
  %v850 = vadd.f32 %v848, %v849
  %v851 = vsel %vm536, %v729, 0.0
  %v852 = vadd.f32 %v850, %v851
  %v853 = vsel %vm536, %v730, 0.0
  %v854 = vadd.f32 %v852, %v853
  %v855 = vsel %vm536, %v731, 0.0
  %v856 = vadd.f32 %v854, %v855
  %v857 = vsel %vm536, %v732, 0.0
  %v858 = vadd.f32 %v856, %v857
  %v859 = vsel %vm536, %v733, 0.0
  %v860 = vadd.f32 %v858, %v859
  %v861 = vrot.slane %v860, 4
  %v862 = vadd.f32 %v860, %v861
  %v863 = vrot.slane %v862, 2
  %v864 = vadd.f32 %v862, %v863
  %v865 = vrot.slane %v864, 1
  %v866 = vadd.f32 %v864, %v865
  %v867 = vmul.f32 %v669, 0.001953125
  %v868 = vmul.f32 %v866, 0.001953125
  %v869 = vmul.f32 %v867, %v867
  %v870 = vsub.f32 %v868, %v869
  %v871 = vmax.f32 %v870, 0.0
  %v872 = vsub.f32 %v280, %v867
  %v873 = vsub.f32 %v283, %v867
  %v874 = vsub.f32 %v288, %v867
  %v875 = vsub.f32 %v291, %v867
  %v876 = vsub.f32 %v296, %v867
  %v877 = vsub.f32 %v299, %v867
  %v878 = vsub.f32 %v304, %v867
  %v879 = vsub.f32 %v307, %v867
  %v880 = vsub.f32 %v312, %v867
  %v881 = vsub.f32 %v315, %v867
  %v882 = vsub.f32 %v320, %v867
  %v883 = vsub.f32 %v323, %v867
  %v884 = vsub.f32 %v328, %v867
  %v885 = vsub.f32 %v331, %v867
  %v886 = vsub.f32 %v336, %v867
  %v887 = vsub.f32 %v339, %v867
  %v888 = vsub.f32 %v344, %v867
  %v889 = vsub.f32 %v347, %v867
  %v890 = vsub.f32 %v352, %v867
  %v891 = vsub.f32 %v355, %v867
  %v892 = vsub.f32 %v360, %v867
  %v893 = vsub.f32 %v363, %v867
  %v894 = vsub.f32 %v368, %v867
  %v895 = vsub.f32 %v371, %v867
  %v896 = vsub.f32 %v376, %v867
  %v897 = vsub.f32 %v379, %v867
  %v898 = vsub.f32 %v384, %v867
  %v899 = vsub.f32 %v387, %v867
  %v900 = vsub.f32 %v392, %v867
  %v901 = vsub.f32 %v395, %v867
  %v902 = vsub.f32 %v400, %v867
  %v903 = vsub.f32 %v403, %v867
  %v904 = vsub.f32 %v408, %v867
  %v905 = vsub.f32 %v411, %v867
  %v906 = vsub.f32 %v416, %v867
  %v907 = vsub.f32 %v419, %v867
  %v908 = vsub.f32 %v424, %v867
  %v909 = vsub.f32 %v427, %v867
  %v910 = vsub.f32 %v432, %v867
  %v911 = vsub.f32 %v435, %v867
  %v912 = vsub.f32 %v440, %v867
  %v913 = vsub.f32 %v443, %v867
  %v914 = vsub.f32 %v448, %v867
  %v915 = vsub.f32 %v451, %v867
  %v916 = vsub.f32 %v456, %v867
  %v917 = vsub.f32 %v459, %v867
  %v918 = vsub.f32 %v464, %v867
  %v919 = vsub.f32 %v467, %v867
  %v920 = vsub.f32 %v472, %v867
  %v921 = vsub.f32 %v475, %v867
  %v922 = vsub.f32 %v480, %v867
  %v923 = vsub.f32 %v483, %v867
  %v924 = vsub.f32 %v488, %v867
  %v925 = vsub.f32 %v491, %v867
  %v926 = vsub.f32 %v496, %v867
  %v927 = vsub.f32 %v499, %v867
  %v928 = vsub.f32 %v504, %v867
  %v929 = vsub.f32 %v507, %v867
  %v930 = vsub.f32 %v512, %v867
  %v931 = vsub.f32 %v515, %v867
  %v932 = vsub.f32 %v520, %v867
  %v933 = vsub.f32 %v523, %v867
  %v934 = vsub.f32 %v528, %v867
  %v935 = vsub.f32 %v531, %v867
  %v936 = vadd.f32 %v871, 1e-05
  %v937 = vrsqrt.pop %v936
  %v938 = vmul.f32 %v872, %v937
  %v939 = vmul.f32 %v873, %v937
  %v940 = vmul.f32 %v874, %v937
  %v941 = vmul.f32 %v875, %v937
  %v942 = vmul.f32 %v876, %v937
  %v943 = vmul.f32 %v877, %v937
  %v944 = vmul.f32 %v878, %v937
  %v945 = vmul.f32 %v879, %v937
  %v946 = vmul.f32 %v880, %v937
  %v947 = vmul.f32 %v881, %v937
  %v948 = vmul.f32 %v882, %v937
  %v949 = vmul.f32 %v883, %v937
  %v950 = vmul.f32 %v884, %v937
  %v951 = vmul.f32 %v885, %v937
  %v952 = vmul.f32 %v886, %v937
  %v953 = vmul.f32 %v887, %v937
  %v954 = vmul.f32 %v888, %v937
  %v955 = vmul.f32 %v889, %v937
  %v956 = vmul.f32 %v890, %v937
  %v957 = vmul.f32 %v891, %v937
  %v958 = vmul.f32 %v892, %v937
  %v959 = vmul.f32 %v893, %v937
  %v960 = vmul.f32 %v894, %v937
  %v961 = vmul.f32 %v895, %v937
  %v962 = vmul.f32 %v896, %v937
  %v963 = vmul.f32 %v897, %v937
  %v964 = vmul.f32 %v898, %v937
  %v965 = vmul.f32 %v899, %v937
  %v966 = vmul.f32 %v900, %v937
  %v967 = vmul.f32 %v901, %v937
  %v968 = vmul.f32 %v902, %v937
  %v969 = vmul.f32 %v903, %v937
  %v970 = vmul.f32 %v904, %v937
  %v971 = vmul.f32 %v905, %v937
  %v972 = vmul.f32 %v906, %v937
  %v973 = vmul.f32 %v907, %v937
  %v974 = vmul.f32 %v908, %v937
  %v975 = vmul.f32 %v909, %v937
  %v976 = vmul.f32 %v910, %v937
  %v977 = vmul.f32 %v911, %v937
  %v978 = vmul.f32 %v912, %v937
  %v979 = vmul.f32 %v913, %v937
  %v980 = vmul.f32 %v914, %v937
  %v981 = vmul.f32 %v915, %v937
  %v982 = vmul.f32 %v916, %v937
  %v983 = vmul.f32 %v917, %v937
  %v984 = vmul.f32 %v918, %v937
  %v985 = vmul.f32 %v919, %v937
  %v986 = vmul.f32 %v920, %v937
  %v987 = vmul.f32 %v921, %v937
  %v988 = vmul.f32 %v922, %v937
  %v989 = vmul.f32 %v923, %v937
  %v990 = vmul.f32 %v924, %v937
  %v991 = vmul.f32 %v925, %v937
  %v992 = vmul.f32 %v926, %v937
  %v993 = vmul.f32 %v927, %v937
  %v994 = vmul.f32 %v928, %v937
  %v995 = vmul.f32 %v929, %v937
  %v996 = vmul.f32 %v930, %v937
  %v997 = vmul.f32 %v931, %v937
  %v998 = vmul.f32 %v932, %v937
  %v999 = vmul.f32 %v933, %v937
  %v1000 = vmul.f32 %v934, %v937
  %v1001 = vmul.f32 %v935, %v937
  %v1003 = vlaneseq
  %v1004 = vshrl.u32 %v1003, 7
  %v1005 = vsub.s32 0, %v1004
  %v1006 = vrot.slane %v534, %v1005
  %v1008 = vmul.f32 %v938, %v1006
  %v1009 = vmul.f32 %v939, %v1006
  %v1010 = vmul.f32 %v940, %v1006
  %v1011 = vmul.f32 %v941, %v1006
  %v1012 = vmul.f32 %v942, %v1006
  %v1013 = vmul.f32 %v943, %v1006
  %v1014 = vmul.f32 %v944, %v1006
  %v1015 = vmul.f32 %v945, %v1006
  %v1016 = vmul.f32 %v946, %v1006
  %v1017 = vmul.f32 %v947, %v1006
  %v1018 = vmul.f32 %v948, %v1006
  %v1019 = vmul.f32 %v949, %v1006
  %v1020 = vmul.f32 %v950, %v1006
  %v1021 = vmul.f32 %v951, %v1006
  %v1022 = vmul.f32 %v952, %v1006
  %v1023 = vmul.f32 %v953, %v1006
  %v1024 = vmul.f32 %v954, %v1006
  %v1025 = vmul.f32 %v955, %v1006
  %v1026 = vmul.f32 %v956, %v1006
  %v1027 = vmul.f32 %v957, %v1006
  %v1028 = vmul.f32 %v958, %v1006
  %v1029 = vmul.f32 %v959, %v1006
  %v1030 = vmul.f32 %v960, %v1006
  %v1031 = vmul.f32 %v961, %v1006
  %v1032 = vmul.f32 %v962, %v1006
  %v1033 = vmul.f32 %v963, %v1006
  %v1034 = vmul.f32 %v964, %v1006
  %v1035 = vmul.f32 %v965, %v1006
  %v1036 = vmul.f32 %v966, %v1006
  %v1037 = vmul.f32 %v967, %v1006
  %v1038 = vmul.f32 %v968, %v1006
  %v1039 = vmul.f32 %v969, %v1006
  %v1040 = vmul.f32 %v970, %v1006
  %v1041 = vmul.f32 %v971, %v1006
  %v1042 = vmul.f32 %v972, %v1006
  %v1043 = vmul.f32 %v973, %v1006
  %v1044 = vmul.f32 %v974, %v1006
  %v1045 = vmul.f32 %v975, %v1006
  %v1046 = vmul.f32 %v976, %v1006
  %v1047 = vmul.f32 %v977, %v1006
  %v1048 = vmul.f32 %v978, %v1006
  %v1049 = vmul.f32 %v979, %v1006
  %v1050 = vmul.f32 %v980, %v1006
  %v1051 = vmul.f32 %v981, %v1006
  %v1052 = vmul.f32 %v982, %v1006
  %v1053 = vmul.f32 %v983, %v1006
  %v1054 = vmul.f32 %v984, %v1006
  %v1055 = vmul.f32 %v985, %v1006
  %v1056 = vmul.f32 %v986, %v1006
  %v1057 = vmul.f32 %v987, %v1006
  %v1058 = vmul.f32 %v988, %v1006
  %v1059 = vmul.f32 %v989, %v1006
  %v1060 = vmul.f32 %v990, %v1006
  %v1061 = vmul.f32 %v991, %v1006
  %v1062 = vmul.f32 %v992, %v1006
  %v1063 = vmul.f32 %v993, %v1006
  %v1064 = vmul.f32 %v994, %v1006
  %v1065 = vmul.f32 %v995, %v1006
  %v1066 = vmul.f32 %v996, %v1006
  %v1067 = vmul.f32 %v997, %v1006
  %v1068 = vmul.f32 %v998, %v1006
  %v1069 = vmul.f32 %v999, %v1006
  %v1070 = vmul.f32 %v1000, %v1006
  %v1071 = vmul.f32 %v1001, %v1006
  %v1073 = vlaneseq
  %v1074 = vshrl.u32 %v1073, 7
  %v1075 = vsub.s32 0, %v1074
  %v1076 = vrot.slane %v535, %v1075
  %v1078 = vadd.f32 %v1008, %v1076
  %v1079 = vadd.f32 %v1009, %v1076
  %v1080 = vadd.f32 %v1010, %v1076
  %v1081 = vadd.f32 %v1011, %v1076
  %v1082 = vadd.f32 %v1012, %v1076
  %v1083 = vadd.f32 %v1013, %v1076
  %v1084 = vadd.f32 %v1014, %v1076
  %v1085 = vadd.f32 %v1015, %v1076
  %v1086 = vadd.f32 %v1016, %v1076
  %v1087 = vadd.f32 %v1017, %v1076
  %v1088 = vadd.f32 %v1018, %v1076
  %v1089 = vadd.f32 %v1019, %v1076
  %v1090 = vadd.f32 %v1020, %v1076
  %v1091 = vadd.f32 %v1021, %v1076
  %v1092 = vadd.f32 %v1022, %v1076
  %v1093 = vadd.f32 %v1023, %v1076
  %v1094 = vadd.f32 %v1024, %v1076
  %v1095 = vadd.f32 %v1025, %v1076
  %v1096 = vadd.f32 %v1026, %v1076
  %v1097 = vadd.f32 %v1027, %v1076
  %v1098 = vadd.f32 %v1028, %v1076
  %v1099 = vadd.f32 %v1029, %v1076
  %v1100 = vadd.f32 %v1030, %v1076
  %v1101 = vadd.f32 %v1031, %v1076
  %v1102 = vadd.f32 %v1032, %v1076
  %v1103 = vadd.f32 %v1033, %v1076
  %v1104 = vadd.f32 %v1034, %v1076
  %v1105 = vadd.f32 %v1035, %v1076
  %v1106 = vadd.f32 %v1036, %v1076
  %v1107 = vadd.f32 %v1037, %v1076
  %v1108 = vadd.f32 %v1038, %v1076
  %v1109 = vadd.f32 %v1039, %v1076
  %v1110 = vadd.f32 %v1040, %v1076
  %v1111 = vadd.f32 %v1041, %v1076
  %v1112 = vadd.f32 %v1042, %v1076
  %v1113 = vadd.f32 %v1043, %v1076
  %v1114 = vadd.f32 %v1044, %v1076
  %v1115 = vadd.f32 %v1045, %v1076
  %v1116 = vadd.f32 %v1046, %v1076
  %v1117 = vadd.f32 %v1047, %v1076
  %v1118 = vadd.f32 %v1048, %v1076
  %v1119 = vadd.f32 %v1049, %v1076
  %v1120 = vadd.f32 %v1050, %v1076
  %v1121 = vadd.f32 %v1051, %v1076
  %v1122 = vadd.f32 %v1052, %v1076
  %v1123 = vadd.f32 %v1053, %v1076
  %v1124 = vadd.f32 %v1054, %v1076
  %v1125 = vadd.f32 %v1055, %v1076
  %v1126 = vadd.f32 %v1056, %v1076
  %v1127 = vadd.f32 %v1057, %v1076
  %v1128 = vadd.f32 %v1058, %v1076
  %v1129 = vadd.f32 %v1059, %v1076
  %v1130 = vadd.f32 %v1060, %v1076
  %v1131 = vadd.f32 %v1061, %v1076
  %v1132 = vadd.f32 %v1062, %v1076
  %v1133 = vadd.f32 %v1063, %v1076
  %v1134 = vadd.f32 %v1064, %v1076
  %v1135 = vadd.f32 %v1065, %v1076
  %v1136 = vadd.f32 %v1066, %v1076
  %v1137 = vadd.f32 %v1067, %v1076
  %v1138 = vadd.f32 %v1068, %v1076
  %v1139 = vadd.f32 %v1069, %v1076
  %v1140 = vadd.f32 %v1070, %v1076
  %v1141 = vadd.f32 %v1071, %v1076
  %v1142 = vmax.f32 %v1078, 0.0
  %v1143 = vmax.f32 %v1079, 0.0
  %v1144 = vmax.f32 %v1080, 0.0
  %v1145 = vmax.f32 %v1081, 0.0
  %v1146 = vmax.f32 %v1082, 0.0
  %v1147 = vmax.f32 %v1083, 0.0
  %v1148 = vmax.f32 %v1084, 0.0
  %v1149 = vmax.f32 %v1085, 0.0
  %v1150 = vmax.f32 %v1086, 0.0
  %v1151 = vmax.f32 %v1087, 0.0
  %v1152 = vmax.f32 %v1088, 0.0
  %v1153 = vmax.f32 %v1089, 0.0
  %v1154 = vmax.f32 %v1090, 0.0
  %v1155 = vmax.f32 %v1091, 0.0
  %v1156 = vmax.f32 %v1092, 0.0
  %v1157 = vmax.f32 %v1093, 0.0
  %v1158 = vmax.f32 %v1094, 0.0
  %v1159 = vmax.f32 %v1095, 0.0
  %v1160 = vmax.f32 %v1096, 0.0
  %v1161 = vmax.f32 %v1097, 0.0
  %v1162 = vmax.f32 %v1098, 0.0
  %v1163 = vmax.f32 %v1099, 0.0
  %v1164 = vmax.f32 %v1100, 0.0
  %v1165 = vmax.f32 %v1101, 0.0
  %v1166 = vmax.f32 %v1102, 0.0
  %v1167 = vmax.f32 %v1103, 0.0
  %v1168 = vmax.f32 %v1104, 0.0
  %v1169 = vmax.f32 %v1105, 0.0
  %v1170 = vmax.f32 %v1106, 0.0
  %v1171 = vmax.f32 %v1107, 0.0
  %v1172 = vmax.f32 %v1108, 0.0
  %v1173 = vmax.f32 %v1109, 0.0
  %v1174 = vmax.f32 %v1110, 0.0
  %v1175 = vmax.f32 %v1111, 0.0
  %v1176 = vmax.f32 %v1112, 0.0
  %v1177 = vmax.f32 %v1113, 0.0
  %v1178 = vmax.f32 %v1114, 0.0
  %v1179 = vmax.f32 %v1115, 0.0
  %v1180 = vmax.f32 %v1116, 0.0
  %v1181 = vmax.f32 %v1117, 0.0
  %v1182 = vmax.f32 %v1118, 0.0
  %v1183 = vmax.f32 %v1119, 0.0
  %v1184 = vmax.f32 %v1120, 0.0
  %v1185 = vmax.f32 %v1121, 0.0
  %v1186 = vmax.f32 %v1122, 0.0
  %v1187 = vmax.f32 %v1123, 0.0
  %v1188 = vmax.f32 %v1124, 0.0
  %v1189 = vmax.f32 %v1125, 0.0
  %v1190 = vmax.f32 %v1126, 0.0
  %v1191 = vmax.f32 %v1127, 0.0
  %v1192 = vmax.f32 %v1128, 0.0
  %v1193 = vmax.f32 %v1129, 0.0
  %v1194 = vmax.f32 %v1130, 0.0
  %v1195 = vmax.f32 %v1131, 0.0
  %v1196 = vmax.f32 %v1132, 0.0
  %v1197 = vmax.f32 %v1133, 0.0
  %v1198 = vmax.f32 %v1134, 0.0
  %v1199 = vmax.f32 %v1135, 0.0
  %v1200 = vmax.f32 %v1136, 0.0
  %v1201 = vmax.f32 %v1137, 0.0
  %v1202 = vmax.f32 %v1138, 0.0
  %v1203 = vmax.f32 %v1139, 0.0
  %v1204 = vmax.f32 %v1140, 0.0
  %v1205 = vmax.f32 %v1141, 0.0
  %v1206 = vpack.c.bf16 %v1143, %v1142
  %v1207 = vpack.c.bf16 %v1145, %v1144
  %v1208 = vpack.c.bf16 %v1147, %v1146
  %v1209 = vpack.c.bf16 %v1149, %v1148
  %v1210 = vpack.c.bf16 %v1151, %v1150
  %v1211 = vpack.c.bf16 %v1153, %v1152
  %v1212 = vpack.c.bf16 %v1155, %v1154
  %v1213 = vpack.c.bf16 %v1157, %v1156
  %v1214 = vpack.c.bf16 %v1159, %v1158
  %v1215 = vpack.c.bf16 %v1161, %v1160
  %v1216 = vpack.c.bf16 %v1163, %v1162
  %v1217 = vpack.c.bf16 %v1165, %v1164
  %v1218 = vpack.c.bf16 %v1167, %v1166
  %v1219 = vpack.c.bf16 %v1169, %v1168
  %v1220 = vpack.c.bf16 %v1171, %v1170
  %v1221 = vpack.c.bf16 %v1173, %v1172
  %v1222 = vpack.c.bf16 %v1175, %v1174
  %v1223 = vpack.c.bf16 %v1177, %v1176
  %v1224 = vpack.c.bf16 %v1179, %v1178
  %v1225 = vpack.c.bf16 %v1181, %v1180
  %v1226 = vpack.c.bf16 %v1183, %v1182
  %v1227 = vpack.c.bf16 %v1185, %v1184
  %v1228 = vpack.c.bf16 %v1187, %v1186
  %v1229 = vpack.c.bf16 %v1189, %v1188
  %v1230 = vpack.c.bf16 %v1191, %v1190
  %v1231 = vpack.c.bf16 %v1193, %v1192
  %v1232 = vpack.c.bf16 %v1195, %v1194
  %v1233 = vpack.c.bf16 %v1197, %v1196
  %v1234 = vpack.c.bf16 %v1199, %v1198
  %v1235 = vpack.c.bf16 %v1201, %v1200
  %v1236 = vpack.c.bf16 %v1203, %v1202
  %v1237 = vpack.c.bf16 %v1205, %v1204
  %v1239 = vshrl.u32 0, 16
  %v1241 = vrot.slane %v1239, 7
  %v1242 = vshll.u32 0, 16
  %v1244 = vor.u32 %v1241, %v1242
  %v1246 = vshrl.u32 %v1206, 16
  %v1248 = vrot.slane %v1246, 7
  %v1249 = vshll.u32 %v1206, 16
  %v1251 = vor.u32 %v1248, %v1249
  %v1253 = vshrl.u32 %v1207, 16
  %v1255 = vrot.slane %v1253, 7
  %v1256 = vshll.u32 %v1207, 16
  %v1258 = vor.u32 %v1255, %v1256
  %v1260 = vshrl.u32 %v1208, 16
  %v1262 = vrot.slane %v1260, 7
  %v1263 = vshll.u32 %v1208, 16
  %v1265 = vor.u32 %v1262, %v1263
  %v1267 = vshrl.u32 %v1209, 16
  %v1269 = vrot.slane %v1267, 7
  %v1270 = vshll.u32 %v1209, 16
  %v1272 = vor.u32 %v1269, %v1270
  %v1274 = vshrl.u32 %v1210, 16
  %v1276 = vrot.slane %v1274, 7
  %v1277 = vshll.u32 %v1210, 16
  %v1279 = vor.u32 %v1276, %v1277
  %v1281 = vshrl.u32 %v1211, 16
  %v1283 = vrot.slane %v1281, 7
  %v1284 = vshll.u32 %v1211, 16
  %v1286 = vor.u32 %v1283, %v1284
  %v1288 = vshrl.u32 %v1212, 16
  %v1290 = vrot.slane %v1288, 7
  %v1291 = vshll.u32 %v1212, 16
  %v1293 = vor.u32 %v1290, %v1291
  %v1295 = vshrl.u32 %v1213, 16
  %v1297 = vrot.slane %v1295, 7
  %v1298 = vshll.u32 %v1213, 16
  %v1300 = vor.u32 %v1297, %v1298
  %v1302 = vshrl.u32 %v1214, 16
  %v1304 = vrot.slane %v1302, 7
  %v1305 = vshll.u32 %v1214, 16
  %v1307 = vor.u32 %v1304, %v1305
  %v1309 = vshrl.u32 %v1215, 16
  %v1311 = vrot.slane %v1309, 7
  %v1312 = vshll.u32 %v1215, 16
  %v1314 = vor.u32 %v1311, %v1312
  %v1316 = vshrl.u32 %v1216, 16
  %v1318 = vrot.slane %v1316, 7
  %v1319 = vshll.u32 %v1216, 16
  %v1321 = vor.u32 %v1318, %v1319
  %v1323 = vshrl.u32 %v1217, 16
  %v1325 = vrot.slane %v1323, 7
  %v1326 = vshll.u32 %v1217, 16
  %v1328 = vor.u32 %v1325, %v1326
  %v1330 = vshrl.u32 %v1218, 16
  %v1332 = vrot.slane %v1330, 7
  %v1333 = vshll.u32 %v1218, 16
  %v1335 = vor.u32 %v1332, %v1333
  %v1337 = vshrl.u32 %v1219, 16
  %v1339 = vrot.slane %v1337, 7
  %v1340 = vshll.u32 %v1219, 16
  %v1342 = vor.u32 %v1339, %v1340
  %v1344 = vshrl.u32 %v1220, 16
  %v1346 = vrot.slane %v1344, 7
  %v1347 = vshll.u32 %v1220, 16
  %v1349 = vor.u32 %v1346, %v1347
  %v1351 = vshrl.u32 %v1221, 16
  %v1353 = vrot.slane %v1351, 7
  %v1354 = vshll.u32 %v1221, 16
  %v1356 = vor.u32 %v1353, %v1354
  %v1358 = vshrl.u32 %v1222, 16
  %v1360 = vrot.slane %v1358, 7
  %v1361 = vshll.u32 %v1222, 16
  %v1363 = vor.u32 %v1360, %v1361
  %v1365 = vshrl.u32 %v1223, 16
  %v1367 = vrot.slane %v1365, 7
  %v1368 = vshll.u32 %v1223, 16
  %v1370 = vor.u32 %v1367, %v1368
  %v1372 = vshrl.u32 %v1224, 16
  %v1374 = vrot.slane %v1372, 7
  %v1375 = vshll.u32 %v1224, 16
  %v1377 = vor.u32 %v1374, %v1375
  %v1379 = vshrl.u32 %v1225, 16
  %v1381 = vrot.slane %v1379, 7
  %v1382 = vshll.u32 %v1225, 16
  %v1384 = vor.u32 %v1381, %v1382
  %v1386 = vshrl.u32 %v1226, 16
  %v1388 = vrot.slane %v1386, 7
  %v1389 = vshll.u32 %v1226, 16
  %v1391 = vor.u32 %v1388, %v1389
  %v1393 = vshrl.u32 %v1227, 16
  %v1395 = vrot.slane %v1393, 7
  %v1396 = vshll.u32 %v1227, 16
  %v1398 = vor.u32 %v1395, %v1396
  %v1400 = vshrl.u32 %v1228, 16
  %v1402 = vrot.slane %v1400, 7
  %v1403 = vshll.u32 %v1228, 16
  %v1405 = vor.u32 %v1402, %v1403
  %v1407 = vshrl.u32 %v1229, 16
  %v1409 = vrot.slane %v1407, 7
  %v1410 = vshll.u32 %v1229, 16
  %v1412 = vor.u32 %v1409, %v1410
  %v1414 = vshrl.u32 %v1230, 16
  %v1416 = vrot.slane %v1414, 7
  %v1417 = vshll.u32 %v1230, 16
  %v1419 = vor.u32 %v1416, %v1417
  %v1421 = vshrl.u32 %v1231, 16
  %v1423 = vrot.slane %v1421, 7
  %v1424 = vshll.u32 %v1231, 16
  %v1426 = vor.u32 %v1423, %v1424
  %v1428 = vshrl.u32 %v1232, 16
  %v1430 = vrot.slane %v1428, 7
  %v1431 = vshll.u32 %v1232, 16
  %v1433 = vor.u32 %v1430, %v1431
  %v1435 = vshrl.u32 %v1233, 16
  %v1437 = vrot.slane %v1435, 7
  %v1438 = vshll.u32 %v1233, 16
  %v1440 = vor.u32 %v1437, %v1438
  %v1442 = vshrl.u32 %v1234, 16
  %v1444 = vrot.slane %v1442, 7
  %v1445 = vshll.u32 %v1234, 16
  %v1447 = vor.u32 %v1444, %v1445
  %v1449 = vshrl.u32 %v1235, 16
  %v1451 = vrot.slane %v1449, 7
  %v1452 = vshll.u32 %v1235, 16
  %v1454 = vor.u32 %v1451, %v1452
  %v1456 = vshrl.u32 %v1236, 16
  %v1458 = vrot.slane %v1456, 7
  %v1459 = vshll.u32 %v1236, 16
  %v1461 = vor.u32 %v1458, %v1459
  %v1463 = vshrl.u32 %v1237, 16
  %v1465 = vrot.slane %v1463, 7
  %v1466 = vshll.u32 %v1237, 16
  %v1468 = vor.u32 %v1465, %v1466
  %vm1535 = vcmask 1040384
  %vm1536 = vsmask.f32 256
  %vm1537 = vmand %vm1535, %vm1536
  %v1538 = vsel %vm1537, 0, %v1244
  %v1539 = vsel %vm1537, 0, %v1251
  %v1540 = vsel %vm1537, 0, %v1258
  %v1541 = vsel %vm1537, 0, %v1265
  %v1542 = vsel %vm1537, 0, %v1272
  %v1543 = vsel %vm1537, 0, %v1279
  %v1544 = vsel %vm1537, 0, %v1286
  %v1545 = vsel %vm1537, 0, %v1293
  %v1546 = vsel %vm1537, 0, %v1300
  %v1547 = vsel %vm1537, 0, %v1307
  %v1548 = vsel %vm1537, 0, %v1314
  %v1549 = vsel %vm1537, 0, %v1321
  %v1550 = vsel %vm1537, 0, %v1328
  %v1551 = vsel %vm1537, 0, %v1335
  %v1552 = vsel %vm1537, 0, %v1342
  %v1553 = vsel %vm1537, 0, %v1349
  %v1554 = vsel %vm1537, 0, %v1356
  %v1555 = vsel %vm1537, 0, %v1363
  %v1556 = vsel %vm1537, 0, %v1370
  %v1557 = vsel %vm1537, 0, %v1377
  %v1558 = vsel %vm1537, 0, %v1384
  %v1559 = vsel %vm1537, 0, %v1391
  %v1560 = vsel %vm1537, 0, %v1398
  %v1561 = vsel %vm1537, 0, %v1405
  %v1562 = vsel %vm1537, 0, %v1412
  %v1563 = vsel %vm1537, 0, %v1419
  %v1564 = vsel %vm1537, 0, %v1426
  %v1565 = vsel %vm1537, 0, %v1433
  %v1566 = vsel %vm1537, 0, %v1440
  %v1567 = vsel %vm1537, 0, %v1447
  %v1568 = vsel %vm1537, 0, %v1454
  %v1569 = vsel %vm1537, 0, %v1461
  %v1570 = vsel %vm1537, 0, %v1468
  %v1571 = vsel %vm1537, %v1241, 0
  %v1572 = vsel %vm1537, %v1248, 0
  %v1573 = vsel %vm1537, %v1255, 0
  %v1574 = vsel %vm1537, %v1262, 0
  %v1575 = vsel %vm1537, %v1269, 0
  %v1576 = vsel %vm1537, %v1276, 0
  %v1577 = vsel %vm1537, %v1283, 0
  %v1578 = vsel %vm1537, %v1290, 0
  %v1579 = vsel %vm1537, %v1297, 0
  %v1580 = vsel %vm1537, %v1304, 0
  %v1581 = vsel %vm1537, %v1311, 0
  %v1582 = vsel %vm1537, %v1318, 0
  %v1583 = vsel %vm1537, %v1325, 0
  %v1584 = vsel %vm1537, %v1332, 0
  %v1585 = vsel %vm1537, %v1339, 0
  %v1586 = vsel %vm1537, %v1346, 0
  %v1587 = vsel %vm1537, %v1353, 0
  %v1588 = vsel %vm1537, %v1360, 0
  %v1589 = vsel %vm1537, %v1367, 0
  %v1590 = vsel %vm1537, %v1374, 0
  %v1591 = vsel %vm1537, %v1381, 0
  %v1592 = vsel %vm1537, %v1388, 0
  %v1593 = vsel %vm1537, %v1395, 0
  %v1594 = vsel %vm1537, %v1402, 0
  %v1595 = vsel %vm1537, %v1409, 0
  %v1596 = vsel %vm1537, %v1416, 0
  %v1597 = vsel %vm1537, %v1423, 0
  %v1598 = vsel %vm1537, %v1430, 0
  %v1599 = vsel %vm1537, %v1437, 0
  %v1600 = vsel %vm1537, %v1444, 0
  %v1601 = vsel %vm1537, %v1451, 0
  %v1602 = vsel %vm1537, %v1458, 0
  %v1603 = vsel %vm1537, %v1465, 0
  %vm1604 = vsmask.f32 7424
  %v1606 = vshrl.u32 %v1538, 16
  %v1608 = vshll.u32 %v1538, 16
  %v1610 = vrot.slane %v1608, 1
  %v1611 = vor.u32 %v1606, %v1610
  %v1613 = vshll.u32 %v1571, 16
  %v1615 = vrot.slane %v1613, 1
  %v1616 = vsel %vm1604, %v1611, %v1615
  %v1618 = vshrl.u32 %v1539, 16
  %v1620 = vshll.u32 %v1539, 16
  %v1622 = vrot.slane %v1620, 1
  %v1623 = vor.u32 %v1618, %v1622
  %v1625 = vshll.u32 %v1572, 16
  %v1627 = vrot.slane %v1625, 1
  %v1628 = vsel %vm1604, %v1623, %v1627
  %v1630 = vshrl.u32 %v1540, 16
  %v1632 = vshll.u32 %v1540, 16
  %v1634 = vrot.slane %v1632, 1
  %v1635 = vor.u32 %v1630, %v1634
  %v1637 = vshll.u32 %v1573, 16
  %v1639 = vrot.slane %v1637, 1
  %v1640 = vsel %vm1604, %v1635, %v1639
  %v1642 = vshrl.u32 %v1541, 16
  %v1644 = vshll.u32 %v1541, 16
  %v1646 = vrot.slane %v1644, 1
  %v1647 = vor.u32 %v1642, %v1646
  %v1649 = vshll.u32 %v1574, 16
  %v1651 = vrot.slane %v1649, 1
  %v1652 = vsel %vm1604, %v1647, %v1651
  %v1654 = vshrl.u32 %v1542, 16
  %v1656 = vshll.u32 %v1542, 16
  %v1658 = vrot.slane %v1656, 1
  %v1659 = vor.u32 %v1654, %v1658
  %v1661 = vshll.u32 %v1575, 16
  %v1663 = vrot.slane %v1661, 1
  %v1664 = vsel %vm1604, %v1659, %v1663
  %v1666 = vshrl.u32 %v1543, 16
  %v1668 = vshll.u32 %v1543, 16
  %v1670 = vrot.slane %v1668, 1
  %v1671 = vor.u32 %v1666, %v1670
  %v1673 = vshll.u32 %v1576, 16
  %v1675 = vrot.slane %v1673, 1
  %v1676 = vsel %vm1604, %v1671, %v1675
  %v1678 = vshrl.u32 %v1544, 16
  %v1680 = vshll.u32 %v1544, 16
  %v1682 = vrot.slane %v1680, 1
  %v1683 = vor.u32 %v1678, %v1682
  %v1685 = vshll.u32 %v1577, 16
  %v1687 = vrot.slane %v1685, 1
  %v1688 = vsel %vm1604, %v1683, %v1687
  %v1690 = vshrl.u32 %v1545, 16
  %v1692 = vshll.u32 %v1545, 16
  %v1694 = vrot.slane %v1692, 1
  %v1695 = vor.u32 %v1690, %v1694
  %v1697 = vshll.u32 %v1578, 16
  %v1699 = vrot.slane %v1697, 1
  %v1700 = vsel %vm1604, %v1695, %v1699
  %v1702 = vshrl.u32 %v1546, 16
  %v1704 = vshll.u32 %v1546, 16
  %v1706 = vrot.slane %v1704, 1
  %v1707 = vor.u32 %v1702, %v1706
  %v1709 = vshll.u32 %v1579, 16
  %v1711 = vrot.slane %v1709, 1
  %v1712 = vsel %vm1604, %v1707, %v1711
  %v1714 = vshrl.u32 %v1547, 16
  %v1716 = vshll.u32 %v1547, 16
  %v1718 = vrot.slane %v1716, 1
  %v1719 = vor.u32 %v1714, %v1718
  %v1721 = vshll.u32 %v1580, 16
  %v1723 = vrot.slane %v1721, 1
  %v1724 = vsel %vm1604, %v1719, %v1723
  %v1726 = vshrl.u32 %v1548, 16
  %v1728 = vshll.u32 %v1548, 16
  %v1730 = vrot.slane %v1728, 1
  %v1731 = vor.u32 %v1726, %v1730
  %v1733 = vshll.u32 %v1581, 16
  %v1735 = vrot.slane %v1733, 1
  %v1736 = vsel %vm1604, %v1731, %v1735
  %v1738 = vshrl.u32 %v1549, 16
  %v1740 = vshll.u32 %v1549, 16
  %v1742 = vrot.slane %v1740, 1
  %v1743 = vor.u32 %v1738, %v1742
  %v1745 = vshll.u32 %v1582, 16
  %v1747 = vrot.slane %v1745, 1
  %v1748 = vsel %vm1604, %v1743, %v1747
  %v1750 = vshrl.u32 %v1550, 16
  %v1752 = vshll.u32 %v1550, 16
  %v1754 = vrot.slane %v1752, 1
  %v1755 = vor.u32 %v1750, %v1754
  %v1757 = vshll.u32 %v1583, 16
  %v1759 = vrot.slane %v1757, 1
  %v1760 = vsel %vm1604, %v1755, %v1759
  %v1762 = vshrl.u32 %v1551, 16
  %v1764 = vshll.u32 %v1551, 16
  %v1766 = vrot.slane %v1764, 1
  %v1767 = vor.u32 %v1762, %v1766
  %v1769 = vshll.u32 %v1584, 16
  %v1771 = vrot.slane %v1769, 1
  %v1772 = vsel %vm1604, %v1767, %v1771
  %v1774 = vshrl.u32 %v1552, 16
  %v1776 = vshll.u32 %v1552, 16
  %v1778 = vrot.slane %v1776, 1
  %v1779 = vor.u32 %v1774, %v1778
  %v1781 = vshll.u32 %v1585, 16
  %v1783 = vrot.slane %v1781, 1
  %v1784 = vsel %vm1604, %v1779, %v1783
  %v1786 = vshrl.u32 %v1553, 16
  %v1788 = vshll.u32 %v1553, 16
  %v1790 = vrot.slane %v1788, 1
  %v1791 = vor.u32 %v1786, %v1790
  %v1793 = vshll.u32 %v1586, 16
  %v1795 = vrot.slane %v1793, 1
  %v1796 = vsel %vm1604, %v1791, %v1795
  %v1798 = vshrl.u32 %v1555, 16
  %v1800 = vshll.u32 %v1555, 16
  %v1802 = vrot.slane %v1800, 1
  %v1803 = vor.u32 %v1798, %v1802
  %v1805 = vshll.u32 %v1588, 16
  %v1807 = vrot.slane %v1805, 1
  %v1808 = vsel %vm1604, %v1803, %v1807
  %v1810 = vshrl.u32 %v1556, 16
  %v1812 = vshll.u32 %v1556, 16
  %v1814 = vrot.slane %v1812, 1
  %v1815 = vor.u32 %v1810, %v1814
  %v1817 = vshll.u32 %v1589, 16
  %v1819 = vrot.slane %v1817, 1
  %v1820 = vsel %vm1604, %v1815, %v1819
  %v1822 = vshrl.u32 %v1557, 16
  %v1824 = vshll.u32 %v1557, 16
  %v1826 = vrot.slane %v1824, 1
  %v1827 = vor.u32 %v1822, %v1826
  %v1829 = vshll.u32 %v1590, 16
  %v1831 = vrot.slane %v1829, 1
  %v1832 = vsel %vm1604, %v1827, %v1831
  %v1834 = vshrl.u32 %v1558, 16
  %v1836 = vshll.u32 %v1558, 16
  %v1838 = vrot.slane %v1836, 1
  %v1839 = vor.u32 %v1834, %v1838
  %v1841 = vshll.u32 %v1591, 16
  %v1843 = vrot.slane %v1841, 1
  %v1844 = vsel %vm1604, %v1839, %v1843
  %v1846 = vshrl.u32 %v1559, 16
  %v1848 = vshll.u32 %v1559, 16
  %v1850 = vrot.slane %v1848, 1
  %v1851 = vor.u32 %v1846, %v1850
  %v1853 = vshll.u32 %v1592, 16
  %v1855 = vrot.slane %v1853, 1
  %v1856 = vsel %vm1604, %v1851, %v1855
  %v1858 = vshrl.u32 %v1560, 16
  %v1860 = vshll.u32 %v1560, 16
  %v1862 = vrot.slane %v1860, 1
  %v1863 = vor.u32 %v1858, %v1862
  %v1865 = vshll.u32 %v1593, 16
  %v1867 = vrot.slane %v1865, 1
  %v1868 = vsel %vm1604, %v1863, %v1867
  %v1870 = vshrl.u32 %v1561, 16
  %v1872 = vshll.u32 %v1561, 16
  %v1874 = vrot.slane %v1872, 1
  %v1875 = vor.u32 %v1870, %v1874
  %v1877 = vshll.u32 %v1594, 16
  %v1879 = vrot.slane %v1877, 1
  %v1880 = vsel %vm1604, %v1875, %v1879
  %v1882 = vshrl.u32 %v1562, 16
  %v1884 = vshll.u32 %v1562, 16
  %v1886 = vrot.slane %v1884, 1
  %v1887 = vor.u32 %v1882, %v1886
  %v1889 = vshll.u32 %v1595, 16
  %v1891 = vrot.slane %v1889, 1
  %v1892 = vsel %vm1604, %v1887, %v1891
  %v1894 = vshrl.u32 %v1563, 16
  %v1896 = vshll.u32 %v1563, 16
  %v1898 = vrot.slane %v1896, 1
  %v1899 = vor.u32 %v1894, %v1898
  %v1901 = vshll.u32 %v1596, 16
  %v1903 = vrot.slane %v1901, 1
  %v1904 = vsel %vm1604, %v1899, %v1903
  %v1906 = vshrl.u32 %v1564, 16
  %v1908 = vshll.u32 %v1564, 16
  %v1910 = vrot.slane %v1908, 1
  %v1911 = vor.u32 %v1906, %v1910
  %v1913 = vshll.u32 %v1597, 16
  %v1915 = vrot.slane %v1913, 1
  %v1916 = vsel %vm1604, %v1911, %v1915
  %v1918 = vshrl.u32 %v1565, 16
  %v1920 = vshll.u32 %v1565, 16
  %v1922 = vrot.slane %v1920, 1
  %v1923 = vor.u32 %v1918, %v1922
  %v1925 = vshll.u32 %v1598, 16
  %v1927 = vrot.slane %v1925, 1
  %v1928 = vsel %vm1604, %v1923, %v1927
  %v1930 = vshrl.u32 %v1566, 16
  %v1932 = vshll.u32 %v1566, 16
  %v1934 = vrot.slane %v1932, 1
  %v1935 = vor.u32 %v1930, %v1934
  %v1937 = vshll.u32 %v1599, 16
  %v1939 = vrot.slane %v1937, 1
  %v1940 = vsel %vm1604, %v1935, %v1939
  %v1942 = vshrl.u32 %v1567, 16
  %v1944 = vshll.u32 %v1567, 16
  %v1946 = vrot.slane %v1944, 1
  %v1947 = vor.u32 %v1942, %v1946
  %v1949 = vshll.u32 %v1600, 16
  %v1951 = vrot.slane %v1949, 1
  %v1952 = vsel %vm1604, %v1947, %v1951
  %v1954 = vshrl.u32 %v1568, 16
  %v1956 = vshll.u32 %v1568, 16
  %v1958 = vrot.slane %v1956, 1
  %v1959 = vor.u32 %v1954, %v1958
  %v1961 = vshll.u32 %v1601, 16
  %v1963 = vrot.slane %v1961, 1
  %v1964 = vsel %vm1604, %v1959, %v1963
  %v1966 = vshrl.u32 %v1569, 16
  %v1968 = vshll.u32 %v1569, 16
  %v1970 = vrot.slane %v1968, 1
  %v1971 = vor.u32 %v1966, %v1970
  %v1973 = vshll.u32 %v1602, 16
  %v1975 = vrot.slane %v1973, 1
  %v1976 = vsel %vm1604, %v1971, %v1975
  %1977 = vrot.lane.b32.xlu0 %v1616, 16
  %v1978 = vpop.permute.xlu0 %1977
  %1979 = vrot.lane.b32.xlu0 %v1628, 16
  %v1980 = vpop.permute.xlu0 %1979
  %1981 = vrot.lane.b32.xlu0 %v1640, 16
  %v1982 = vpop.permute.xlu0 %1981
  %1983 = vrot.lane.b32.xlu0 %v1652, 16
  %v1984 = vpop.permute.xlu0 %1983
  %1985 = vrot.lane.b32.xlu0 %v1664, 16
  %v1986 = vpop.permute.xlu0 %1985
  %1987 = vrot.lane.b32.xlu0 %v1676, 16
  %v1988 = vpop.permute.xlu0 %1987
  %1989 = vrot.lane.b32.xlu0 %v1688, 16
  %v1990 = vpop.permute.xlu0 %1989
  %1991 = vrot.lane.b32.xlu0 %v1700, 16
  %v1992 = vpop.permute.xlu0 %1991
  %1993 = vrot.lane.b32.xlu0 %v1712, 16
  %v1994 = vpop.permute.xlu0 %1993
  %1995 = vrot.lane.b32.xlu0 %v1724, 16
  %v1996 = vpop.permute.xlu0 %1995
  %1997 = vrot.lane.b32.xlu0 %v1736, 16
  %v1998 = vpop.permute.xlu0 %1997
  %1999 = vrot.lane.b32.xlu0 %v1748, 16
  %v2000 = vpop.permute.xlu0 %1999
  %2001 = vrot.lane.b32.xlu0 %v1760, 16
  %v2002 = vpop.permute.xlu0 %2001
  %2003 = vrot.lane.b32.xlu0 %v1772, 16
  %v2004 = vpop.permute.xlu0 %2003
  %2005 = vrot.lane.b32.xlu0 %v1784, 16
  %v2006 = vpop.permute.xlu0 %2005
  %2007 = vrot.lane.b32.xlu0 %v1796, 16
  %v2008 = vpop.permute.xlu0 %2007
  %2009 = vrot.lane.b32.xlu0 %v1808, 16
  %v2010 = vpop.permute.xlu0 %2009
  %2011 = vrot.lane.b32.xlu0 %v1820, 16
  %v2012 = vpop.permute.xlu0 %2011
  %2013 = vrot.lane.b32.xlu0 %v1832, 16
  %v2014 = vpop.permute.xlu0 %2013
  %2015 = vrot.lane.b32.xlu0 %v1844, 16
  %v2016 = vpop.permute.xlu0 %2015
  %2017 = vrot.lane.b32.xlu0 %v1856, 16
  %v2018 = vpop.permute.xlu0 %2017
  %2019 = vrot.lane.b32.xlu0 %v1868, 16
  %v2020 = vpop.permute.xlu0 %2019
  %2021 = vrot.lane.b32.xlu0 %v1880, 16
  %v2022 = vpop.permute.xlu0 %2021
  %2023 = vrot.lane.b32.xlu0 %v1892, 16
  %v2024 = vpop.permute.xlu0 %2023
  %2025 = vrot.lane.b32.xlu0 %v1904, 16
  %v2026 = vpop.permute.xlu0 %2025
  %2027 = vrot.lane.b32.xlu0 %v1916, 16
  %v2028 = vpop.permute.xlu0 %2027
  %2029 = vrot.lane.b32.xlu0 %v1928, 16
  %v2030 = vpop.permute.xlu0 %2029
  %2031 = vrot.lane.b32.xlu0 %v1940, 16
  %v2032 = vpop.permute.xlu0 %2031
  %2033 = vrot.lane.b32.xlu0 %v1952, 16
  %v2034 = vpop.permute.xlu0 %2033
  %2035 = vrot.lane.b32.xlu0 %v1964, 16
  %v2036 = vpop.permute.xlu0 %2035
  %2037 = vrot.lane.b32.xlu0 %v1976, 16
  %v2038 = vpop.permute.xlu0 %2037
  %vm2101 = vcmask 1046528
  %v2102 = vrot.slane %v1538, 1
  %v2103 = vrot.slane %v1571, 1
  %v2104 = vsel %vm2101, %v2102, %v2103
  %v2105 = vrot.slane %v1539, 1
  %v2106 = vrot.slane %v1572, 1
  %v2107 = vsel %vm2101, %v2105, %v2106
  %v2108 = vrot.slane %v1540, 1
  %v2109 = vrot.slane %v1573, 1
  %v2110 = vsel %vm2101, %v2108, %v2109
  %v2111 = vrot.slane %v1541, 1
  %v2112 = vrot.slane %v1574, 1
  %v2113 = vsel %vm2101, %v2111, %v2112
  %v2114 = vrot.slane %v1542, 1
  %v2115 = vrot.slane %v1575, 1
  %v2116 = vsel %vm2101, %v2114, %v2115
  %v2117 = vrot.slane %v1543, 1
  %v2118 = vrot.slane %v1576, 1
  %v2119 = vsel %vm2101, %v2117, %v2118
  %v2120 = vrot.slane %v1544, 1
  %v2121 = vrot.slane %v1577, 1
  %v2122 = vsel %vm2101, %v2120, %v2121
  %v2123 = vrot.slane %v1545, 1
  %v2124 = vrot.slane %v1578, 1
  %v2125 = vsel %vm2101, %v2123, %v2124
  %v2126 = vrot.slane %v1546, 1
  %v2127 = vrot.slane %v1579, 1
  %v2128 = vsel %vm2101, %v2126, %v2127
  %v2129 = vrot.slane %v1547, 1
  %v2130 = vrot.slane %v1580, 1
  %v2131 = vsel %vm2101, %v2129, %v2130
  %v2132 = vrot.slane %v1548, 1
  %v2133 = vrot.slane %v1581, 1
  %v2134 = vsel %vm2101, %v2132, %v2133
  %v2135 = vrot.slane %v1549, 1
  %v2136 = vrot.slane %v1582, 1
  %v2137 = vsel %vm2101, %v2135, %v2136
  %v2138 = vrot.slane %v1550, 1
  %v2139 = vrot.slane %v1583, 1
  %v2140 = vsel %vm2101, %v2138, %v2139
  %v2141 = vrot.slane %v1551, 1
  %v2142 = vrot.slane %v1584, 1
  %v2143 = vsel %vm2101, %v2141, %v2142
  %v2144 = vrot.slane %v1552, 1
  %v2145 = vrot.slane %v1585, 1
  %v2146 = vsel %vm2101, %v2144, %v2145
  %v2147 = vrot.slane %v1553, 1
  %v2148 = vrot.slane %v1586, 1
  %v2149 = vsel %vm2101, %v2147, %v2148
  %v2150 = vrot.slane %v1555, 1
  %v2151 = vrot.slane %v1588, 1
  %v2152 = vsel %vm2101, %v2150, %v2151
  %v2153 = vrot.slane %v1556, 1
  %v2154 = vrot.slane %v1589, 1
  %v2155 = vsel %vm2101, %v2153, %v2154
  %v2156 = vrot.slane %v1557, 1
  %v2157 = vrot.slane %v1590, 1
  %v2158 = vsel %vm2101, %v2156, %v2157
  %v2159 = vrot.slane %v1558, 1
  %v2160 = vrot.slane %v1591, 1
  %v2161 = vsel %vm2101, %v2159, %v2160
  %v2162 = vrot.slane %v1559, 1
  %v2163 = vrot.slane %v1592, 1
  %v2164 = vsel %vm2101, %v2162, %v2163
  %v2165 = vrot.slane %v1560, 1
  %v2166 = vrot.slane %v1593, 1
  %v2167 = vsel %vm2101, %v2165, %v2166
  %v2168 = vrot.slane %v1561, 1
  %v2169 = vrot.slane %v1594, 1
  %v2170 = vsel %vm2101, %v2168, %v2169
  %v2171 = vrot.slane %v1562, 1
  %v2172 = vrot.slane %v1595, 1
  %v2173 = vsel %vm2101, %v2171, %v2172
  %v2174 = vrot.slane %v1563, 1
  %v2175 = vrot.slane %v1596, 1
  %v2176 = vsel %vm2101, %v2174, %v2175
  %v2177 = vrot.slane %v1564, 1
  %v2178 = vrot.slane %v1597, 1
  %v2179 = vsel %vm2101, %v2177, %v2178
  %v2180 = vrot.slane %v1565, 1
  %v2181 = vrot.slane %v1598, 1
  %v2182 = vsel %vm2101, %v2180, %v2181
  %v2183 = vrot.slane %v1566, 1
  %v2184 = vrot.slane %v1599, 1
  %v2185 = vsel %vm2101, %v2183, %v2184
  %v2186 = vrot.slane %v1567, 1
  %v2187 = vrot.slane %v1600, 1
  %v2188 = vsel %vm2101, %v2186, %v2187
  %v2189 = vrot.slane %v1568, 1
  %v2190 = vrot.slane %v1601, 1
  %v2191 = vsel %vm2101, %v2189, %v2190
  %v2192 = vrot.slane %v1569, 1
  %v2193 = vrot.slane %v1602, 1
  %v2194 = vsel %vm2101, %v2192, %v2193
  %2195 = vrot.lane.b32.xlu0 %v2104, 32
  %v2196 = vpop.permute.xlu0 %2195
  %2197 = vrot.lane.b32.xlu0 %v2107, 32
  %v2198 = vpop.permute.xlu0 %2197
  %2199 = vrot.lane.b32.xlu0 %v2110, 32
  %v2200 = vpop.permute.xlu0 %2199
  %2201 = vrot.lane.b32.xlu0 %v2113, 32
  %v2202 = vpop.permute.xlu0 %2201
  %2203 = vrot.lane.b32.xlu0 %v2116, 32
  %v2204 = vpop.permute.xlu0 %2203
  %2205 = vrot.lane.b32.xlu0 %v2119, 32
  %v2206 = vpop.permute.xlu0 %2205
  %2207 = vrot.lane.b32.xlu0 %v2122, 32
  %v2208 = vpop.permute.xlu0 %2207
  %2209 = vrot.lane.b32.xlu0 %v2125, 32
  %v2210 = vpop.permute.xlu0 %2209
  %2211 = vrot.lane.b32.xlu0 %v2128, 32
  %v2212 = vpop.permute.xlu0 %2211
  %2213 = vrot.lane.b32.xlu0 %v2131, 32
  %v2214 = vpop.permute.xlu0 %2213
  %2215 = vrot.lane.b32.xlu0 %v2134, 32
  %v2216 = vpop.permute.xlu0 %2215
  %2217 = vrot.lane.b32.xlu0 %v2137, 32
  %v2218 = vpop.permute.xlu0 %2217
  %2219 = vrot.lane.b32.xlu0 %v2140, 32
  %v2220 = vpop.permute.xlu0 %2219
  %2221 = vrot.lane.b32.xlu0 %v2143, 32
  %v2222 = vpop.permute.xlu0 %2221
  %2223 = vrot.lane.b32.xlu0 %v2146, 32
  %v2224 = vpop.permute.xlu0 %2223
  %2225 = vrot.lane.b32.xlu0 %v2149, 32
  %v2226 = vpop.permute.xlu0 %2225
  %2227 = vrot.lane.b32.xlu0 %v2152, 32
  %v2228 = vpop.permute.xlu0 %2227
  %2229 = vrot.lane.b32.xlu0 %v2155, 32
  %v2230 = vpop.permute.xlu0 %2229
  %2231 = vrot.lane.b32.xlu0 %v2158, 32
  %v2232 = vpop.permute.xlu0 %2231
  %2233 = vrot.lane.b32.xlu0 %v2161, 32
  %v2234 = vpop.permute.xlu0 %2233
  %2235 = vrot.lane.b32.xlu0 %v2164, 32
  %v2236 = vpop.permute.xlu0 %2235
  %2237 = vrot.lane.b32.xlu0 %v2167, 32
  %v2238 = vpop.permute.xlu0 %2237
  %2239 = vrot.lane.b32.xlu0 %v2170, 32
  %v2240 = vpop.permute.xlu0 %2239
  %2241 = vrot.lane.b32.xlu0 %v2173, 32
  %v2242 = vpop.permute.xlu0 %2241
  %2243 = vrot.lane.b32.xlu0 %v2176, 32
  %v2244 = vpop.permute.xlu0 %2243
  %2245 = vrot.lane.b32.xlu0 %v2179, 32
  %v2246 = vpop.permute.xlu0 %2245
  %2247 = vrot.lane.b32.xlu0 %v2182, 32
  %v2248 = vpop.permute.xlu0 %2247
  %2249 = vrot.lane.b32.xlu0 %v2185, 32
  %v2250 = vpop.permute.xlu0 %2249
  %2251 = vrot.lane.b32.xlu0 %v2188, 32
  %v2252 = vpop.permute.xlu0 %2251
  %2253 = vrot.lane.b32.xlu0 %v2191, 32
  %v2254 = vpop.permute.xlu0 %2253
  %2255 = vrot.lane.b32.xlu0 %v2194, 32
  %v2256 = vpop.permute.xlu0 %2255
  %2259 = vrot.lane.b32.xlu0 %v1539, 48
  %v2260 = vpop.permute.xlu0 %2259
  %2261 = vrot.lane.b32.xlu0 %v1540, 48
  %v2262 = vpop.permute.xlu0 %2261
  %2263 = vrot.lane.b32.xlu0 %v1541, 48
  %v2264 = vpop.permute.xlu0 %2263
  %2265 = vrot.lane.b32.xlu0 %v1542, 48
  %v2266 = vpop.permute.xlu0 %2265
  %2267 = vrot.lane.b32.xlu0 %v1543, 48
  %v2268 = vpop.permute.xlu0 %2267
  %2269 = vrot.lane.b32.xlu0 %v1544, 48
  %v2270 = vpop.permute.xlu0 %2269
  %2271 = vrot.lane.b32.xlu0 %v1545, 48
  %v2272 = vpop.permute.xlu0 %2271
  %2273 = vrot.lane.b32.xlu0 %v1546, 48
  %v2274 = vpop.permute.xlu0 %2273
  %2275 = vrot.lane.b32.xlu0 %v1547, 48
  %v2276 = vpop.permute.xlu0 %2275
  %2277 = vrot.lane.b32.xlu0 %v1548, 48
  %v2278 = vpop.permute.xlu0 %2277
  %2279 = vrot.lane.b32.xlu0 %v1549, 48
  %v2280 = vpop.permute.xlu0 %2279
  %2281 = vrot.lane.b32.xlu0 %v1550, 48
  %v2282 = vpop.permute.xlu0 %2281
  %2283 = vrot.lane.b32.xlu0 %v1551, 48
  %v2284 = vpop.permute.xlu0 %2283
  %2285 = vrot.lane.b32.xlu0 %v1552, 48
  %v2286 = vpop.permute.xlu0 %2285
  %2287 = vrot.lane.b32.xlu0 %v1553, 48
  %v2288 = vpop.permute.xlu0 %2287
  %2289 = vrot.lane.b32.xlu0 %v1554, 48
  %v2290 = vpop.permute.xlu0 %2289
  %2291 = vrot.lane.b32.xlu0 %v1555, 48
  %v2292 = vpop.permute.xlu0 %2291
  %2293 = vrot.lane.b32.xlu0 %v1556, 48
  %v2294 = vpop.permute.xlu0 %2293
  %2295 = vrot.lane.b32.xlu0 %v1557, 48
  %v2296 = vpop.permute.xlu0 %2295
  %2297 = vrot.lane.b32.xlu0 %v1558, 48
  %v2298 = vpop.permute.xlu0 %2297
  %2299 = vrot.lane.b32.xlu0 %v1559, 48
  %v2300 = vpop.permute.xlu0 %2299
  %2301 = vrot.lane.b32.xlu0 %v1560, 48
  %v2302 = vpop.permute.xlu0 %2301
  %2303 = vrot.lane.b32.xlu0 %v1561, 48
  %v2304 = vpop.permute.xlu0 %2303
  %2305 = vrot.lane.b32.xlu0 %v1562, 48
  %v2306 = vpop.permute.xlu0 %2305
  %2307 = vrot.lane.b32.xlu0 %v1563, 48
  %v2308 = vpop.permute.xlu0 %2307
  %2309 = vrot.lane.b32.xlu0 %v1564, 48
  %v2310 = vpop.permute.xlu0 %2309
  %2311 = vrot.lane.b32.xlu0 %v1565, 48
  %v2312 = vpop.permute.xlu0 %2311
  %2313 = vrot.lane.b32.xlu0 %v1566, 48
  %v2314 = vpop.permute.xlu0 %2313
  %2315 = vrot.lane.b32.xlu0 %v1567, 48
  %v2316 = vpop.permute.xlu0 %2315
  %2317 = vrot.lane.b32.xlu0 %v1568, 48
  %v2318 = vpop.permute.xlu0 %2317
  %2319 = vrot.lane.b32.xlu0 %v1569, 48
  %v2320 = vpop.permute.xlu0 %2319
  %2321 = vrot.lane.b32.xlu0 %v1570, 48
  %v2322 = vpop.permute.xlu0 %2321
  %v2324 = vshrl.u32 %v1554, 16
  %v2326 = vshll.u32 %v1554, 16
  %v2328 = vrot.slane %v2326, 1
  %v2329 = vor.u32 %v2324, %v2328
  %v2331 = vshll.u32 %v1587, 16
  %v2333 = vrot.slane %v2331, 1
  %v2334 = vsel %vm1604, %v2329, %v2333
  %v2336 = vshrl.u32 %v1570, 16
  %v2338 = vshll.u32 %v1570, 16
  %v2340 = vrot.slane %v2338, 1
  %v2341 = vor.u32 %v2336, %v2340
  %v2343 = vshll.u32 %v1603, 16
  %v2345 = vrot.slane %v2343, 1
  %v2346 = vsel %vm1604, %v2341, %v2345
  %2347 = vrot.lane.b32.xlu0 %v1628, 64
  %v2348 = vpop.permute.xlu0 %2347
  %2349 = vrot.lane.b32.xlu0 %v1640, 64
  %v2350 = vpop.permute.xlu0 %2349
  %2351 = vrot.lane.b32.xlu0 %v1652, 64
  %v2352 = vpop.permute.xlu0 %2351
  %2353 = vrot.lane.b32.xlu0 %v1664, 64
  %v2354 = vpop.permute.xlu0 %2353
  %2355 = vrot.lane.b32.xlu0 %v1676, 64
  %v2356 = vpop.permute.xlu0 %2355
  %2357 = vrot.lane.b32.xlu0 %v1688, 64
  %v2358 = vpop.permute.xlu0 %2357
  %2359 = vrot.lane.b32.xlu0 %v1700, 64
  %v2360 = vpop.permute.xlu0 %2359
  %2361 = vrot.lane.b32.xlu0 %v1712, 64
  %v2362 = vpop.permute.xlu0 %2361
  %2363 = vrot.lane.b32.xlu0 %v1724, 64
  %v2364 = vpop.permute.xlu0 %2363
  %2365 = vrot.lane.b32.xlu0 %v1736, 64
  %v2366 = vpop.permute.xlu0 %2365
  %2367 = vrot.lane.b32.xlu0 %v1748, 64
  %v2368 = vpop.permute.xlu0 %2367
  %2369 = vrot.lane.b32.xlu0 %v1760, 64
  %v2370 = vpop.permute.xlu0 %2369
  %2371 = vrot.lane.b32.xlu0 %v1772, 64
  %v2372 = vpop.permute.xlu0 %2371
  %2373 = vrot.lane.b32.xlu0 %v1784, 64
  %v2374 = vpop.permute.xlu0 %2373
  %2375 = vrot.lane.b32.xlu0 %v1796, 64
  %v2376 = vpop.permute.xlu0 %2375
  %2377 = vrot.lane.b32.xlu0 %v2334, 64
  %v2378 = vpop.permute.xlu0 %2377
  %2379 = vrot.lane.b32.xlu0 %v1808, 64
  %v2380 = vpop.permute.xlu0 %2379
  %2381 = vrot.lane.b32.xlu0 %v1820, 64
  %v2382 = vpop.permute.xlu0 %2381
  %2383 = vrot.lane.b32.xlu0 %v1832, 64
  %v2384 = vpop.permute.xlu0 %2383
  %2385 = vrot.lane.b32.xlu0 %v1844, 64
  %v2386 = vpop.permute.xlu0 %2385
  %2387 = vrot.lane.b32.xlu0 %v1856, 64
  %v2388 = vpop.permute.xlu0 %2387
  %2389 = vrot.lane.b32.xlu0 %v1868, 64
  %v2390 = vpop.permute.xlu0 %2389
  %2391 = vrot.lane.b32.xlu0 %v1880, 64
  %v2392 = vpop.permute.xlu0 %2391
  %2393 = vrot.lane.b32.xlu0 %v1892, 64
  %v2394 = vpop.permute.xlu0 %2393
  %2395 = vrot.lane.b32.xlu0 %v1904, 64
  %v2396 = vpop.permute.xlu0 %2395
  %2397 = vrot.lane.b32.xlu0 %v1916, 64
  %v2398 = vpop.permute.xlu0 %2397
  %2399 = vrot.lane.b32.xlu0 %v1928, 64
  %v2400 = vpop.permute.xlu0 %2399
  %2401 = vrot.lane.b32.xlu0 %v1940, 64
  %v2402 = vpop.permute.xlu0 %2401
  %2403 = vrot.lane.b32.xlu0 %v1952, 64
  %v2404 = vpop.permute.xlu0 %2403
  %2405 = vrot.lane.b32.xlu0 %v1964, 64
  %v2406 = vpop.permute.xlu0 %2405
  %2407 = vrot.lane.b32.xlu0 %v1976, 64
  %v2408 = vpop.permute.xlu0 %2407
  %2409 = vrot.lane.b32.xlu0 %v2346, 64
  %v2410 = vpop.permute.xlu0 %2409
  %v2413 = vrot.slane %v1554, 1
  %v2414 = vrot.slane %v1587, 1
  %v2415 = vsel %vm2101, %v2413, %v2414
  %v2416 = vrot.slane %v1570, 1
  %v2417 = vrot.slane %v1603, 1
  %v2418 = vsel %vm2101, %v2416, %v2417
  %2419 = vrot.lane.b32.xlu0 %v2107, 80
  %v2420 = vpop.permute.xlu0 %2419
  %2421 = vrot.lane.b32.xlu0 %v2110, 80
  %v2422 = vpop.permute.xlu0 %2421
  %2423 = vrot.lane.b32.xlu0 %v2113, 80
  %v2424 = vpop.permute.xlu0 %2423
  %2425 = vrot.lane.b32.xlu0 %v2116, 80
  %v2426 = vpop.permute.xlu0 %2425
  %2427 = vrot.lane.b32.xlu0 %v2119, 80
  %v2428 = vpop.permute.xlu0 %2427
  %2429 = vrot.lane.b32.xlu0 %v2122, 80
  %v2430 = vpop.permute.xlu0 %2429
  %2431 = vrot.lane.b32.xlu0 %v2125, 80
  %v2432 = vpop.permute.xlu0 %2431
  %2433 = vrot.lane.b32.xlu0 %v2128, 80
  %v2434 = vpop.permute.xlu0 %2433
  %2435 = vrot.lane.b32.xlu0 %v2131, 80
  %v2436 = vpop.permute.xlu0 %2435
  %2437 = vrot.lane.b32.xlu0 %v2134, 80
  %v2438 = vpop.permute.xlu0 %2437
  %2439 = vrot.lane.b32.xlu0 %v2137, 80
  %v2440 = vpop.permute.xlu0 %2439
  %2441 = vrot.lane.b32.xlu0 %v2140, 80
  %v2442 = vpop.permute.xlu0 %2441
  %2443 = vrot.lane.b32.xlu0 %v2143, 80
  %v2444 = vpop.permute.xlu0 %2443
  %2445 = vrot.lane.b32.xlu0 %v2146, 80
  %v2446 = vpop.permute.xlu0 %2445
  %2447 = vrot.lane.b32.xlu0 %v2149, 80
  %v2448 = vpop.permute.xlu0 %2447
  %2449 = vrot.lane.b32.xlu0 %v2415, 80
  %v2450 = vpop.permute.xlu0 %2449
  %2451 = vrot.lane.b32.xlu0 %v2152, 80
  %v2452 = vpop.permute.xlu0 %2451
  %2453 = vrot.lane.b32.xlu0 %v2155, 80
  %v2454 = vpop.permute.xlu0 %2453
  %2455 = vrot.lane.b32.xlu0 %v2158, 80
  %v2456 = vpop.permute.xlu0 %2455
  %2457 = vrot.lane.b32.xlu0 %v2161, 80
  %v2458 = vpop.permute.xlu0 %2457
  %2459 = vrot.lane.b32.xlu0 %v2164, 80
  %v2460 = vpop.permute.xlu0 %2459
  %2461 = vrot.lane.b32.xlu0 %v2167, 80
  %v2462 = vpop.permute.xlu0 %2461
  %2463 = vrot.lane.b32.xlu0 %v2170, 80
  %v2464 = vpop.permute.xlu0 %2463
  %2465 = vrot.lane.b32.xlu0 %v2173, 80
  %v2466 = vpop.permute.xlu0 %2465
  %2467 = vrot.lane.b32.xlu0 %v2176, 80
  %v2468 = vpop.permute.xlu0 %2467
  %2469 = vrot.lane.b32.xlu0 %v2179, 80
  %v2470 = vpop.permute.xlu0 %2469
  %2471 = vrot.lane.b32.xlu0 %v2182, 80
  %v2472 = vpop.permute.xlu0 %2471
  %2473 = vrot.lane.b32.xlu0 %v2185, 80
  %v2474 = vpop.permute.xlu0 %2473
  %2475 = vrot.lane.b32.xlu0 %v2188, 80
  %v2476 = vpop.permute.xlu0 %2475
  %2477 = vrot.lane.b32.xlu0 %v2191, 80
  %v2478 = vpop.permute.xlu0 %2477
  %2479 = vrot.lane.b32.xlu0 %v2194, 80
  %v2480 = vpop.permute.xlu0 %2479
  %2481 = vrot.lane.b32.xlu0 %v2418, 80
  %v2482 = vpop.permute.xlu0 %2481
  %2483 = vrot.lane.b32.xlu0 %v1540, 96
  %v2484 = vpop.permute.xlu0 %2483
  %2485 = vrot.lane.b32.xlu0 %v1541, 96
  %v2486 = vpop.permute.xlu0 %2485
  %2487 = vrot.lane.b32.xlu0 %v1542, 96
  %v2488 = vpop.permute.xlu0 %2487
  %2489 = vrot.lane.b32.xlu0 %v1543, 96
  %v2490 = vpop.permute.xlu0 %2489
  %2491 = vrot.lane.b32.xlu0 %v1544, 96
  %v2492 = vpop.permute.xlu0 %2491
  %2493 = vrot.lane.b32.xlu0 %v1545, 96
  %v2494 = vpop.permute.xlu0 %2493
  %2495 = vrot.lane.b32.xlu0 %v1546, 96
  %v2496 = vpop.permute.xlu0 %2495
  %2497 = vrot.lane.b32.xlu0 %v1547, 96
  %v2498 = vpop.permute.xlu0 %2497
  %2499 = vrot.lane.b32.xlu0 %v1548, 96
  %v2500 = vpop.permute.xlu0 %2499
  %2501 = vrot.lane.b32.xlu0 %v1549, 96
  %v2502 = vpop.permute.xlu0 %2501
  %2503 = vrot.lane.b32.xlu0 %v1550, 96
  %v2504 = vpop.permute.xlu0 %2503
  %2505 = vrot.lane.b32.xlu0 %v1551, 96
  %v2506 = vpop.permute.xlu0 %2505
  %2507 = vrot.lane.b32.xlu0 %v1552, 96
  %v2508 = vpop.permute.xlu0 %2507
  %2509 = vrot.lane.b32.xlu0 %v1553, 96
  %v2510 = vpop.permute.xlu0 %2509
  %2511 = vrot.lane.b32.xlu0 %v1554, 96
  %v2512 = vpop.permute.xlu0 %2511
  %2513 = vrot.lane.b32.xlu0 %v1538, 96
  %v2514 = vpop.permute.xlu0 %2513
  %2515 = vrot.lane.b32.xlu0 %v1556, 96
  %v2516 = vpop.permute.xlu0 %2515
  %2517 = vrot.lane.b32.xlu0 %v1557, 96
  %v2518 = vpop.permute.xlu0 %2517
  %2519 = vrot.lane.b32.xlu0 %v1558, 96
  %v2520 = vpop.permute.xlu0 %2519
  %2521 = vrot.lane.b32.xlu0 %v1559, 96
  %v2522 = vpop.permute.xlu0 %2521
  %2523 = vrot.lane.b32.xlu0 %v1560, 96
  %v2524 = vpop.permute.xlu0 %2523
  %2525 = vrot.lane.b32.xlu0 %v1561, 96
  %v2526 = vpop.permute.xlu0 %2525
  %2527 = vrot.lane.b32.xlu0 %v1562, 96
  %v2528 = vpop.permute.xlu0 %2527
  %2529 = vrot.lane.b32.xlu0 %v1563, 96
  %v2530 = vpop.permute.xlu0 %2529
  %2531 = vrot.lane.b32.xlu0 %v1564, 96
  %v2532 = vpop.permute.xlu0 %2531
  %2533 = vrot.lane.b32.xlu0 %v1565, 96
  %v2534 = vpop.permute.xlu0 %2533
  %2535 = vrot.lane.b32.xlu0 %v1566, 96
  %v2536 = vpop.permute.xlu0 %2535
  %2537 = vrot.lane.b32.xlu0 %v1567, 96
  %v2538 = vpop.permute.xlu0 %2537
  %2539 = vrot.lane.b32.xlu0 %v1568, 96
  %v2540 = vpop.permute.xlu0 %2539
  %2541 = vrot.lane.b32.xlu0 %v1569, 96
  %v2542 = vpop.permute.xlu0 %2541
  %2543 = vrot.lane.b32.xlu0 %v1570, 96
  %v2544 = vpop.permute.xlu0 %2543
  %2545 = vrot.lane.b32.xlu0 %v1640, 112
  %v2546 = vpop.permute.xlu0 %2545
  %2547 = vrot.lane.b32.xlu0 %v1652, 112
  %v2548 = vpop.permute.xlu0 %2547
  %2549 = vrot.lane.b32.xlu0 %v1664, 112
  %v2550 = vpop.permute.xlu0 %2549
  %2551 = vrot.lane.b32.xlu0 %v1676, 112
  %v2552 = vpop.permute.xlu0 %2551
  %2553 = vrot.lane.b32.xlu0 %v1688, 112
  %v2554 = vpop.permute.xlu0 %2553
  %2555 = vrot.lane.b32.xlu0 %v1700, 112
  %v2556 = vpop.permute.xlu0 %2555
  %2557 = vrot.lane.b32.xlu0 %v1712, 112
  %v2558 = vpop.permute.xlu0 %2557
  %2559 = vrot.lane.b32.xlu0 %v1724, 112
  %v2560 = vpop.permute.xlu0 %2559
  %2561 = vrot.lane.b32.xlu0 %v1736, 112
  %v2562 = vpop.permute.xlu0 %2561
  %2563 = vrot.lane.b32.xlu0 %v1748, 112
  %v2564 = vpop.permute.xlu0 %2563
  %2565 = vrot.lane.b32.xlu0 %v1760, 112
  %v2566 = vpop.permute.xlu0 %2565
  %2567 = vrot.lane.b32.xlu0 %v1772, 112
  %v2568 = vpop.permute.xlu0 %2567
  %2569 = vrot.lane.b32.xlu0 %v1784, 112
  %v2570 = vpop.permute.xlu0 %2569
  %2571 = vrot.lane.b32.xlu0 %v1796, 112
  %v2572 = vpop.permute.xlu0 %2571
  %2573 = vrot.lane.b32.xlu0 %v2334, 112
  %v2574 = vpop.permute.xlu0 %2573
  %2575 = vrot.lane.b32.xlu0 %v1616, 112
  %v2576 = vpop.permute.xlu0 %2575
  %2577 = vrot.lane.b32.xlu0 %v1820, 112
  %v2578 = vpop.permute.xlu0 %2577
  %2579 = vrot.lane.b32.xlu0 %v1832, 112
  %v2580 = vpop.permute.xlu0 %2579
  %2581 = vrot.lane.b32.xlu0 %v1844, 112
  %v2582 = vpop.permute.xlu0 %2581
  %2583 = vrot.lane.b32.xlu0 %v1856, 112
  %v2584 = vpop.permute.xlu0 %2583
  %2585 = vrot.lane.b32.xlu0 %v1868, 112
  %v2586 = vpop.permute.xlu0 %2585
  %2587 = vrot.lane.b32.xlu0 %v1880, 112
  %v2588 = vpop.permute.xlu0 %2587
  %2589 = vrot.lane.b32.xlu0 %v1892, 112
  %v2590 = vpop.permute.xlu0 %2589
  %2591 = vrot.lane.b32.xlu0 %v1904, 112
  %v2592 = vpop.permute.xlu0 %2591
  %2593 = vrot.lane.b32.xlu0 %v1916, 112
  %v2594 = vpop.permute.xlu0 %2593
  %2595 = vrot.lane.b32.xlu0 %v1928, 112
  %v2596 = vpop.permute.xlu0 %2595
  %2597 = vrot.lane.b32.xlu0 %v1940, 112
  %v2598 = vpop.permute.xlu0 %2597
  %2599 = vrot.lane.b32.xlu0 %v1952, 112
  %v2600 = vpop.permute.xlu0 %2599
  %2601 = vrot.lane.b32.xlu0 %v1964, 112
  %v2602 = vpop.permute.xlu0 %2601
  %2603 = vrot.lane.b32.xlu0 %v1976, 112
  %v2604 = vpop.permute.xlu0 %2603
  %2605 = vrot.lane.b32.xlu0 %v2346, 112
  %v2606 = vpop.permute.xlu0 %2605
  %v2608 = vsel %vm536, %v1538, %v1978
  %v2610 = vsel %vm536, %v1539, %v1980
  %v2612 = vsel %vm536, %v1540, %v1982
  %v2614 = vsel %vm536, %v1541, %v1984
  %v2616 = vsel %vm536, %v1542, %v1986
  %v2618 = vsel %vm536, %v1543, %v1988
  %v2620 = vsel %vm536, %v1544, %v1990
  %v2622 = vsel %vm536, %v1545, %v1992
  %v2624 = vsel %vm536, %v1546, %v1994
  %v2626 = vsel %vm536, %v1547, %v1996
  %v2628 = vsel %vm536, %v1548, %v1998
  %v2630 = vsel %vm536, %v1549, %v2000
  %v2632 = vsel %vm536, %v1550, %v2002
  %v2634 = vsel %vm536, %v1551, %v2004
  %v2636 = vsel %vm536, %v1552, %v2006
  %v2638 = vsel %vm536, %v1553, %v2008
  %v2640 = vsel %vm536, %v1555, %v2010
  %v2642 = vsel %vm536, %v1556, %v2012
  %v2644 = vsel %vm536, %v1557, %v2014
  %v2646 = vsel %vm536, %v1558, %v2016
  %v2648 = vsel %vm536, %v1559, %v2018
  %v2650 = vsel %vm536, %v1560, %v2020
  %v2652 = vsel %vm536, %v1561, %v2022
  %v2654 = vsel %vm536, %v1562, %v2024
  %v2656 = vsel %vm536, %v1563, %v2026
  %v2658 = vsel %vm536, %v1564, %v2028
  %v2660 = vsel %vm536, %v1565, %v2030
  %v2662 = vsel %vm536, %v1566, %v2032
  %v2664 = vsel %vm536, %v1567, %v2034
  %v2666 = vsel %vm536, %v1568, %v2036
  %v2668 = vsel %vm536, %v1569, %v2038
  %v2670 = vsel %vm148, %v2608, %v2196
  %v2672 = vsel %vm148, %v2610, %v2198
  %v2674 = vsel %vm148, %v2612, %v2200
  %v2676 = vsel %vm148, %v2614, %v2202
  %v2678 = vsel %vm148, %v2616, %v2204
  %v2680 = vsel %vm148, %v2618, %v2206
  %v2682 = vsel %vm148, %v2620, %v2208
  %v2684 = vsel %vm148, %v2622, %v2210
  %v2686 = vsel %vm148, %v2624, %v2212
  %v2688 = vsel %vm148, %v2626, %v2214
  %v2690 = vsel %vm148, %v2628, %v2216
  %v2692 = vsel %vm148, %v2630, %v2218
  %v2694 = vsel %vm148, %v2632, %v2220
  %v2696 = vsel %vm148, %v2634, %v2222
  %v2698 = vsel %vm148, %v2636, %v2224
  %v2700 = vsel %vm148, %v2638, %v2226
  %v2702 = vsel %vm148, %v2640, %v2228
  %v2704 = vsel %vm148, %v2642, %v2230
  %v2706 = vsel %vm148, %v2644, %v2232
  %v2708 = vsel %vm148, %v2646, %v2234
  %v2710 = vsel %vm148, %v2648, %v2236
  %v2712 = vsel %vm148, %v2650, %v2238
  %v2714 = vsel %vm148, %v2652, %v2240
  %v2716 = vsel %vm148, %v2654, %v2242
  %v2718 = vsel %vm148, %v2656, %v2244
  %v2720 = vsel %vm148, %v2658, %v2246
  %v2722 = vsel %vm148, %v2660, %v2248
  %v2724 = vsel %vm148, %v2662, %v2250
  %v2726 = vsel %vm148, %v2664, %v2252
  %v2728 = vsel %vm148, %v2666, %v2254
  %v2730 = vsel %vm148, %v2668, %v2256
  %vm2731 = vcmask 392192
  %v2733 = vsel %vm2731, %v2670, %v2260
  %v2735 = vsel %vm2731, %v2672, %v2262
  %v2737 = vsel %vm2731, %v2674, %v2264
  %v2739 = vsel %vm2731, %v2676, %v2266
  %v2741 = vsel %vm2731, %v2678, %v2268
  %v2743 = vsel %vm2731, %v2680, %v2270
  %v2745 = vsel %vm2731, %v2682, %v2272
  %v2747 = vsel %vm2731, %v2684, %v2274
  %v2749 = vsel %vm2731, %v2686, %v2276
  %v2751 = vsel %vm2731, %v2688, %v2278
  %v2753 = vsel %vm2731, %v2690, %v2280
  %v2755 = vsel %vm2731, %v2692, %v2282
  %v2757 = vsel %vm2731, %v2694, %v2284
  %v2759 = vsel %vm2731, %v2696, %v2286
  %v2761 = vsel %vm2731, %v2698, %v2288
  %v2763 = vsel %vm2731, %v2700, %v2290
  %v2765 = vsel %vm2731, %v2670, %v2292
  %v2767 = vsel %vm2731, %v2702, %v2294
  %v2769 = vsel %vm2731, %v2704, %v2296
  %v2771 = vsel %vm2731, %v2706, %v2298
  %v2773 = vsel %vm2731, %v2708, %v2300
  %v2775 = vsel %vm2731, %v2710, %v2302
  %v2777 = vsel %vm2731, %v2712, %v2304
  %v2779 = vsel %vm2731, %v2714, %v2306
  %v2781 = vsel %vm2731, %v2716, %v2308
  %v2783 = vsel %vm2731, %v2718, %v2310
  %v2785 = vsel %vm2731, %v2720, %v2312
  %v2787 = vsel %vm2731, %v2722, %v2314
  %v2789 = vsel %vm2731, %v2724, %v2316
  %v2791 = vsel %vm2731, %v2726, %v2318
  %v2793 = vsel %vm2731, %v2728, %v2320
  %v2795 = vsel %vm2731, %v2730, %v2322
  %vm2796 = vcmask 523264
  %v2798 = vsel %vm2796, %v2733, %v2348
  %v2800 = vsel %vm2796, %v2735, %v2350
  %v2802 = vsel %vm2796, %v2737, %v2352
  %v2804 = vsel %vm2796, %v2739, %v2354
  %v2806 = vsel %vm2796, %v2741, %v2356
  %v2808 = vsel %vm2796, %v2743, %v2358
  %v2810 = vsel %vm2796, %v2745, %v2360
  %v2812 = vsel %vm2796, %v2747, %v2362
  %v2814 = vsel %vm2796, %v2749, %v2364
  %v2816 = vsel %vm2796, %v2751, %v2366
  %v2818 = vsel %vm2796, %v2753, %v2368
  %v2820 = vsel %vm2796, %v2755, %v2370
  %v2822 = vsel %vm2796, %v2757, %v2372
  %v2824 = vsel %vm2796, %v2759, %v2374
  %v2826 = vsel %vm2796, %v2761, %v2376
  %v2828 = vsel %vm2796, %v2763, %v2378
  %v2830 = vsel %vm2796, %v2765, %v2380
  %v2832 = vsel %vm2796, %v2767, %v2382
  %v2834 = vsel %vm2796, %v2769, %v2384
  %v2836 = vsel %vm2796, %v2771, %v2386
  %v2838 = vsel %vm2796, %v2773, %v2388
  %v2840 = vsel %vm2796, %v2775, %v2390
  %v2842 = vsel %vm2796, %v2777, %v2392
  %v2844 = vsel %vm2796, %v2779, %v2394
  %v2846 = vsel %vm2796, %v2781, %v2396
  %v2848 = vsel %vm2796, %v2783, %v2398
  %v2850 = vsel %vm2796, %v2785, %v2400
  %v2852 = vsel %vm2796, %v2787, %v2402
  %v2854 = vsel %vm2796, %v2789, %v2404
  %v2856 = vsel %vm2796, %v2791, %v2406
  %v2858 = vsel %vm2796, %v2793, %v2408
  %v2860 = vsel %vm2796, %v2795, %v2410
  %vm2861 = vcmask 654336
  %v2863 = vsel %vm2861, %v2798, %v2420
  %v2865 = vsel %vm2861, %v2800, %v2422
  %v2867 = vsel %vm2861, %v2802, %v2424
  %v2869 = vsel %vm2861, %v2804, %v2426
  %v2871 = vsel %vm2861, %v2806, %v2428
  %v2873 = vsel %vm2861, %v2808, %v2430
  %v2875 = vsel %vm2861, %v2810, %v2432
  %v2877 = vsel %vm2861, %v2812, %v2434
  %v2879 = vsel %vm2861, %v2814, %v2436
  %v2881 = vsel %vm2861, %v2816, %v2438
  %v2883 = vsel %vm2861, %v2818, %v2440
  %v2885 = vsel %vm2861, %v2820, %v2442
  %v2887 = vsel %vm2861, %v2822, %v2444
  %v2889 = vsel %vm2861, %v2824, %v2446
  %v2891 = vsel %vm2861, %v2826, %v2448
  %v2893 = vsel %vm2861, %v2828, %v2450
  %v2895 = vsel %vm2861, %v2830, %v2452
  %v2897 = vsel %vm2861, %v2832, %v2454
  %v2899 = vsel %vm2861, %v2834, %v2456
  %v2901 = vsel %vm2861, %v2836, %v2458
  %v2903 = vsel %vm2861, %v2838, %v2460
  %v2905 = vsel %vm2861, %v2840, %v2462
  %v2907 = vsel %vm2861, %v2842, %v2464
  %v2909 = vsel %vm2861, %v2844, %v2466
  %v2911 = vsel %vm2861, %v2846, %v2468
  %v2913 = vsel %vm2861, %v2848, %v2470
  %v2915 = vsel %vm2861, %v2850, %v2472
  %v2917 = vsel %vm2861, %v2852, %v2474
  %v2919 = vsel %vm2861, %v2854, %v2476
  %v2921 = vsel %vm2861, %v2856, %v2478
  %v2923 = vsel %vm2861, %v2858, %v2480
  %v2925 = vsel %vm2861, %v2860, %v2482
  %vm2926 = vcmask 785408
  %v2928 = vsel %vm2926, %v2863, %v2484
  %v2930 = vsel %vm2926, %v2865, %v2486
  %v2932 = vsel %vm2926, %v2867, %v2488
  %v2934 = vsel %vm2926, %v2869, %v2490
  %v2936 = vsel %vm2926, %v2871, %v2492
  %v2938 = vsel %vm2926, %v2873, %v2494
  %v2940 = vsel %vm2926, %v2875, %v2496
  %v2942 = vsel %vm2926, %v2877, %v2498
  %v2944 = vsel %vm2926, %v2879, %v2500
  %v2946 = vsel %vm2926, %v2881, %v2502
  %v2948 = vsel %vm2926, %v2883, %v2504
  %v2950 = vsel %vm2926, %v2885, %v2506
  %v2952 = vsel %vm2926, %v2887, %v2508
  %v2954 = vsel %vm2926, %v2889, %v2510
  %v2956 = vsel %vm2926, %v2891, %v2512
  %v2958 = vsel %vm2926, %v2893, %v2514
  %v2960 = vsel %vm2926, %v2895, %v2516
  %v2962 = vsel %vm2926, %v2897, %v2518
  %v2964 = vsel %vm2926, %v2899, %v2520
  %v2966 = vsel %vm2926, %v2901, %v2522
  %v2968 = vsel %vm2926, %v2903, %v2524
  %v2970 = vsel %vm2926, %v2905, %v2526
  %v2972 = vsel %vm2926, %v2907, %v2528
  %v2974 = vsel %vm2926, %v2909, %v2530
  %v2976 = vsel %vm2926, %v2911, %v2532
  %v2978 = vsel %vm2926, %v2913, %v2534
  %v2980 = vsel %vm2926, %v2915, %v2536
  %v2982 = vsel %vm2926, %v2917, %v2538
  %v2984 = vsel %vm2926, %v2919, %v2540
  %v2986 = vsel %vm2926, %v2921, %v2542
  %v2988 = vsel %vm2926, %v2923, %v2544
  %v2989 = vsel %vm2926, %v2925, %v2514
  %vm2990 = vcmask 916480
  %v2992 = vsel %vm2990, %v2928, %v2546
  %v2995 = vsel %vm2990, %v2930, %v2548
  %v2998 = vsel %vm2990, %v2932, %v2550
  %v3001 = vsel %vm2990, %v2934, %v2552
  %v3004 = vsel %vm2990, %v2936, %v2554
  %v3007 = vsel %vm2990, %v2938, %v2556
  %v3010 = vsel %vm2990, %v2940, %v2558
  %v3013 = vsel %vm2990, %v2942, %v2560
  %v3016 = vsel %vm2990, %v2944, %v2562
  %v3019 = vsel %vm2990, %v2946, %v2564
  %v3022 = vsel %vm2990, %v2948, %v2566
  %v3025 = vsel %vm2990, %v2950, %v2568
  %v3028 = vsel %vm2990, %v2952, %v2570
  %v3031 = vsel %vm2990, %v2954, %v2572
  %v3034 = vsel %vm2990, %v2956, %v2574
  %v3037 = vsel %vm2990, %v2958, %v2576
  %v3040 = vsel %vm2990, %v2960, %v2578
  %v3043 = vsel %vm2990, %v2962, %v2580
  %v3046 = vsel %vm2990, %v2964, %v2582
  %v3049 = vsel %vm2990, %v2966, %v2584
  %v3052 = vsel %vm2990, %v2968, %v2586
  %v3055 = vsel %vm2990, %v2970, %v2588
  %v3058 = vsel %vm2990, %v2972, %v2590
  %v3061 = vsel %vm2990, %v2974, %v2592
  %v3064 = vsel %vm2990, %v2976, %v2594
  %v3067 = vsel %vm2990, %v2978, %v2596
  %v3070 = vsel %vm2990, %v2980, %v2598
  %v3073 = vsel %vm2990, %v2982, %v2600
  %v3076 = vsel %vm2990, %v2984, %v2602
  %v3079 = vsel %vm2990, %v2986, %v2604
  %v3082 = vsel %vm2990, %v2988, %v2606
  %v3084 = vsel %vm2990, %v2989, %v2576
  %v3086 = vld [vmem:[%s4] sm:$0xf]
  %v3087 = vld [vmem:[%s4 + $0x4] sm:$0xf]
  %v3088 = vld [vmem:[%s4 + $0x8] sm:$0xf]
  %v3089 = vld [vmem:[%s4 + $0xc] sm:$0xf]
  %v3090 = vld [vmem:[%s4 + $0x10] sm:$0xf]
  %v3091 = vld [vmem:[%s4 + $0x14] sm:$0xf]
  %v3092 = vld [vmem:[%s4 + $0x18] sm:$0xf]
  %v3093 = vld [vmem:[%s4 + $0x1c] sm:$0xf]
  %v3094 = vld [vmem:[%s4 + $0x20] sm:$0xf]
  %v3095 = vld [vmem:[%s4 + $0x24] sm:$0xf]
  %v3096 = vld [vmem:[%s4 + $0x28] sm:$0xf]
  %v3097 = vld [vmem:[%s4 + $0x2c] sm:$0xf]
  %v3098 = vld [vmem:[%s4 + $0x30] sm:$0xf]
  %v3099 = vld [vmem:[%s4 + $0x34] sm:$0xf]
  %v3100 = vld [vmem:[%s4 + $0x38] sm:$0xf]
  %v3101 = vld [vmem:[%s4 + $0x3c] sm:$0xf]
  %v3102 = vld [vmem:[%s4 + $0x40] sm:$0xf]
  %v3103 = vld [vmem:[%s4 + $0x44] sm:$0xf]
  %v3122 = vunpack.c.l.b16 %v3086
  %v3123 = vunpack.c.l.b16 %v3087
  %v3124 = vunpack.c.l.b16 %v3088
  %v3125 = vunpack.c.l.b16 %v3089
  %v3126 = vunpack.c.l.b16 %v3090
  %v3127 = vunpack.c.l.b16 %v3091
  %v3128 = vunpack.c.l.b16 %v3092
  %v3129 = vunpack.c.l.b16 %v3093
  %v3130 = vunpack.c.l.b16 %v3094
  %v3131 = vunpack.c.l.b16 %v3095
  %v3132 = vunpack.c.l.b16 %v3096
  %v3133 = vunpack.c.l.b16 %v3097
  %v3134 = vunpack.c.l.b16 %v3098
  %v3135 = vunpack.c.l.b16 %v3099
  %v3136 = vunpack.c.l.b16 %v3100
  %v3137 = vunpack.c.l.b16 %v3101
  %v3138 = vunpack.c.l.b16 %v3102
  %v3139 = vunpack.c.l.b16 %v3103
  %v3140 = vpack.c.b16 %v3123, %v3122
  %v3141 = vpack.c.b16 %v3125, %v3124
  %v3142 = vpack.c.b16 %v3127, %v3126
  %v3143 = vpack.c.b16 %v3129, %v3128
  %v3144 = vpack.c.b16 %v3131, %v3130
  %v3145 = vpack.c.b16 %v3133, %v3132
  %v3146 = vpack.c.b16 %v3135, %v3134
  %v3147 = vpack.c.b16 %v3137, %v3136
  %v3148 = vpack.c.b16 %v3139, %v3138
  %v3159 = vsel %vm536, %v2110, 0
  %v3162 = vsel %vm536, %v2113, 0
  %v3165 = vsel %vm536, %v2116, 0
  %v3168 = vsel %vm536, %v2119, 0
  %v3171 = vsel %vm536, %v2122, 0
  %v3174 = vsel %vm536, %v2125, 0
  %v3177 = vsel %vm536, %v2128, 0
  %v3180 = vsel %vm536, %v2131, 0
  %v3183 = vsel %vm536, %v2134, 0
  %v3186 = vsel %vm536, %v2137, 0
  %v3189 = vsel %vm536, %v2140, 0
  %v3192 = vsel %vm536, %v2143, 0
  %v3195 = vsel %vm536, %v2146, 0
  %v3198 = vsel %vm536, %v2149, 0
  %v3201 = vsel %vm536, %v2415, 0
  %v3204 = vsel %vm536, %v2104, 0
  %v3207 = vsel %vm536, %v2155, 0
  %v3210 = vsel %vm536, %v2158, 0
  %v3213 = vsel %vm536, %v2161, 0
  %v3216 = vsel %vm536, %v2164, 0
  %v3219 = vsel %vm536, %v2167, 0
  %v3222 = vsel %vm536, %v2170, 0
  %v3225 = vsel %vm536, %v2173, 0
  %v3228 = vsel %vm536, %v2176, 0
  %v3231 = vsel %vm536, %v2179, 0
  %v3234 = vsel %vm536, %v2182, 0
  %v3237 = vsel %vm536, %v2185, 0
  %v3240 = vsel %vm536, %v2188, 0
  %v3243 = vsel %vm536, %v2191, 0
  %v3246 = vsel %vm536, %v2194, 0
  %v3249 = vsel %vm536, %v2418, 0
  %3251 = vmatprep.subr.bf16.mxu0 0
  %3252 = vmatpush1.bf16.msra.mxu0 %v3147
  %3253 = vmatprep.subr.bf16.mxu0 0
  %3254 = vmatpush1.bf16.msra.mxu0 %v3146
  %3255 = vmatprep.subr.bf16.mxu0 0
  %3256 = vmatpush1.bf16.msra.mxu0 %v3145
  %3257 = vmatprep.subr.bf16.mxu0 0
  %3258 = vmatpush1.bf16.msra.mxu0 %v3144
  %3259 = vmatprep.subr.bf16.mxu0 0
  %3260 = vmatpush1.bf16.msra.mxu0 %v3143
  %3261 = vmatprep.subr.bf16.mxu0 0
  %3262 = vmatpush1.bf16.msra.mxu0 %v3142
  %3263 = vmatprep.subr.bf16.mxu0 0
  %3264 = vmatpush1.bf16.msra.mxu0 %v3141
  %3265 = vmatprep.subr.bf16.mxu0 0
  %3266 = vmatpush1.bf16.msra.mxu0 %v3140
  %3267 = vmatprep.subr.bf16.mxu0 0
  %3268 = vmatpush2.bf16.msra.mxu0 0
  %3269 = vmatprep.subr.bf16.mxu0 0
  %3270 = vmatpush2.bf16.msra.mxu0 0
  %3271 = vmatprep.subr.bf16.mxu0 0
  %3272 = vmatpush2.bf16.msra.mxu0 0
  %3273 = vmatprep.subr.bf16.mxu0 0
  %3274 = vmatpush2.bf16.msra.mxu0 0
  %3275 = vmatprep.subr.bf16.mxu0 0
  %3276 = vmatpush2.bf16.msra.mxu0 0
  %3277 = vmatprep.subr.bf16.mxu0 0
  %3278 = vmatpush2.bf16.msra.mxu0 0
  %3279 = vmatprep.subr.bf16.mxu0 0
  %3280 = vmatpush2.bf16.msra.mxu0 0
  %3281 = vmatprep.subr.bf16.mxu0 0
  %3282 = vmatpush2.bf16.msra.mxu0 %v3148
  %3283 = vmatprep.mubr.bf16.mxu0 %v3159
  %3284 = vmatmul.mubr.bf16.gmra.mxu0 %v2992
  %v3285 = vpop.f32.mrf.mxu0
  %v3286 = vadd.f32 0.0, %v3285
  %v3287 = vpop.f32.mrf.mxu0
  %v3288 = vpop.f32.mrf.mxu0
  %v3289 = vadd.f32 0.0, %v3288
  %v3290 = vpop.f32.mrf.mxu0
  %3291 = vmatprep.mubr.bf16.mxu0 %v3162
  %3292 = vmatmul.mubr.bf16.gmra.mxu0 %v2995
  %v3293 = vpop.f32.mrf.mxu0
  %v3294 = vadd.f32 0.0, %v3293
  %v3295 = vpop.f32.mrf.mxu0
  %v3296 = vpop.f32.mrf.mxu0
  %v3297 = vadd.f32 0.0, %v3296
  %v3298 = vpop.f32.mrf.mxu0
  %3299 = vmatprep.mubr.bf16.mxu0 %v3165
  %3300 = vmatmul.mubr.bf16.gmra.mxu0 %v2998
  %v3301 = vpop.f32.mrf.mxu0
  %v3302 = vadd.f32 0.0, %v3301
  %v3303 = vpop.f32.mrf.mxu0
  %v3304 = vpop.f32.mrf.mxu0
  %v3305 = vadd.f32 0.0, %v3304
  %v3306 = vpop.f32.mrf.mxu0
  %3307 = vmatprep.mubr.bf16.mxu0 %v3168
  %3308 = vmatmul.mubr.bf16.gmra.mxu0 %v3001
  %v3309 = vpop.f32.mrf.mxu0
  %v3310 = vadd.f32 0.0, %v3309
  %v3311 = vpop.f32.mrf.mxu0
  %v3312 = vpop.f32.mrf.mxu0
  %v3313 = vadd.f32 0.0, %v3312
  %v3314 = vpop.f32.mrf.mxu0
  %3315 = vmatprep.mubr.bf16.mxu0 %v3171
  %3316 = vmatmul.mubr.bf16.gmra.mxu0 %v3004
  %v3317 = vpop.f32.mrf.mxu0
  %v3318 = vadd.f32 0.0, %v3317
  %v3319 = vpop.f32.mrf.mxu0
  %v3320 = vpop.f32.mrf.mxu0
  %v3321 = vadd.f32 0.0, %v3320
  %v3322 = vpop.f32.mrf.mxu0
  %3323 = vmatprep.mubr.bf16.mxu0 %v3174
  %3324 = vmatmul.mubr.bf16.gmra.mxu0 %v3007
  %v3325 = vpop.f32.mrf.mxu0
  %v3326 = vadd.f32 0.0, %v3325
  %v3327 = vpop.f32.mrf.mxu0
  %v3328 = vpop.f32.mrf.mxu0
  %v3329 = vadd.f32 0.0, %v3328
  %v3330 = vpop.f32.mrf.mxu0
  %3331 = vmatprep.mubr.bf16.mxu0 %v3177
  %3332 = vmatmul.mubr.bf16.gmra.mxu0 %v3010
  %v3333 = vpop.f32.mrf.mxu0
  %v3334 = vadd.f32 0.0, %v3333
  %v3335 = vpop.f32.mrf.mxu0
  %v3336 = vpop.f32.mrf.mxu0
  %v3337 = vadd.f32 0.0, %v3336
  %v3338 = vpop.f32.mrf.mxu0
  %3339 = vmatprep.mubr.bf16.mxu0 %v3180
  %3340 = vmatmul.mubr.bf16.gmra.mxu0 %v3013
  %v3341 = vpop.f32.mrf.mxu0
  %v3342 = vadd.f32 0.0, %v3341
  %v3343 = vpop.f32.mrf.mxu0
  %v3344 = vpop.f32.mrf.mxu0
  %v3345 = vadd.f32 0.0, %v3344
  %v3346 = vpop.f32.mrf.mxu0
  %3347 = vmatprep.mubr.bf16.mxu0 %v3183
  %3348 = vmatmul.mubr.bf16.gmra.mxu0 %v3016
  %v3349 = vpop.f32.mrf.mxu0
  %v3350 = vadd.f32 0.0, %v3349
  %v3351 = vpop.f32.mrf.mxu0
  %v3352 = vpop.f32.mrf.mxu0
  %v3353 = vadd.f32 0.0, %v3352
  %v3354 = vpop.f32.mrf.mxu0
  %3355 = vmatprep.mubr.bf16.mxu0 %v3186
  %3356 = vmatmul.mubr.bf16.gmra.mxu0 %v3019
  %v3357 = vpop.f32.mrf.mxu0
  %v3358 = vadd.f32 0.0, %v3357
  %v3359 = vpop.f32.mrf.mxu0
  %v3360 = vpop.f32.mrf.mxu0
  %v3361 = vadd.f32 0.0, %v3360
  %v3362 = vpop.f32.mrf.mxu0
  %3363 = vmatprep.mubr.bf16.mxu0 %v3189
  %3364 = vmatmul.mubr.bf16.gmra.mxu0 %v3022
  %v3365 = vpop.f32.mrf.mxu0
  %v3366 = vadd.f32 0.0, %v3365
  %v3367 = vpop.f32.mrf.mxu0
  %v3368 = vpop.f32.mrf.mxu0
  %v3369 = vadd.f32 0.0, %v3368
  %v3370 = vpop.f32.mrf.mxu0
  %3371 = vmatprep.mubr.bf16.mxu0 %v3192
  %3372 = vmatmul.mubr.bf16.gmra.mxu0 %v3025
  %v3373 = vpop.f32.mrf.mxu0
  %v3374 = vadd.f32 0.0, %v3373
  %v3375 = vpop.f32.mrf.mxu0
  %v3376 = vpop.f32.mrf.mxu0
  %v3377 = vadd.f32 0.0, %v3376
  %v3378 = vpop.f32.mrf.mxu0
  %3379 = vmatprep.mubr.bf16.mxu0 %v3195
  %3380 = vmatmul.mubr.bf16.gmra.mxu0 %v3028
  %v3381 = vpop.f32.mrf.mxu0
  %v3382 = vadd.f32 0.0, %v3381
  %v3383 = vpop.f32.mrf.mxu0
  %v3384 = vpop.f32.mrf.mxu0
  %v3385 = vadd.f32 0.0, %v3384
  %v3386 = vpop.f32.mrf.mxu0
  %3387 = vmatprep.mubr.bf16.mxu0 %v3198
  %3388 = vmatmul.mubr.bf16.gmra.mxu0 %v3031
  %v3389 = vpop.f32.mrf.mxu0
  %v3390 = vadd.f32 0.0, %v3389
  %v3391 = vpop.f32.mrf.mxu0
  %v3392 = vpop.f32.mrf.mxu0
  %v3393 = vadd.f32 0.0, %v3392
  %v3394 = vpop.f32.mrf.mxu0
  %3395 = vmatprep.mubr.bf16.mxu0 %v3201
  %3396 = vmatmul.mubr.bf16.gmra.mxu0 %v3034
  %v3397 = vpop.f32.mrf.mxu0
  %v3398 = vadd.f32 0.0, %v3397
  %v3399 = vpop.f32.mrf.mxu0
  %v3400 = vpop.f32.mrf.mxu0
  %v3401 = vadd.f32 0.0, %v3400
  %v3402 = vpop.f32.mrf.mxu0
  %3403 = vmatprep.mubr.bf16.mxu0 %v3204
  %3404 = vmatmul.mubr.bf16.gmra.mxu0 %v3037
  %v3405 = vpop.f32.mrf.mxu0
  %v3406 = vadd.f32 0.0, %v3405
  %v3407 = vpop.f32.mrf.mxu0
  %v3408 = vpop.f32.mrf.mxu0
  %v3409 = vadd.f32 0.0, %v3408
  %v3410 = vpop.f32.mrf.mxu0
  %3411 = vmatprep.mubr.bf16.mxu0 %v3207
  %3412 = vmatmul.mubr.bf16.gmra.mxu0 %v3040
  %v3413 = vpop.f32.mrf.mxu0
  %v3414 = vadd.f32 0.0, %v3413
  %v3415 = vpop.f32.mrf.mxu0
  %v3416 = vpop.f32.mrf.mxu0
  %v3417 = vadd.f32 0.0, %v3416
  %v3418 = vpop.f32.mrf.mxu0
  %3419 = vmatprep.mubr.bf16.mxu0 %v3210
  %3420 = vmatmul.mubr.bf16.gmra.mxu0 %v3043
  %v3421 = vpop.f32.mrf.mxu0
  %v3422 = vadd.f32 0.0, %v3421
  %v3423 = vpop.f32.mrf.mxu0
  %v3424 = vpop.f32.mrf.mxu0
  %v3425 = vadd.f32 0.0, %v3424
  %v3426 = vpop.f32.mrf.mxu0
  %3427 = vmatprep.mubr.bf16.mxu0 %v3213
  %3428 = vmatmul.mubr.bf16.gmra.mxu0 %v3046
  %v3429 = vpop.f32.mrf.mxu0
  %v3430 = vadd.f32 0.0, %v3429
  %v3431 = vpop.f32.mrf.mxu0
  %v3432 = vpop.f32.mrf.mxu0
  %v3433 = vadd.f32 0.0, %v3432
  %v3434 = vpop.f32.mrf.mxu0
  %3435 = vmatprep.mubr.bf16.mxu0 %v3216
  %3436 = vmatmul.mubr.bf16.gmra.mxu0 %v3049
  %v3437 = vpop.f32.mrf.mxu0
  %v3438 = vadd.f32 0.0, %v3437
  %v3439 = vpop.f32.mrf.mxu0
  %v3440 = vpop.f32.mrf.mxu0
  %v3441 = vadd.f32 0.0, %v3440
  %v3442 = vpop.f32.mrf.mxu0
  %3443 = vmatprep.mubr.bf16.mxu0 %v3219
  %3444 = vmatmul.mubr.bf16.gmra.mxu0 %v3052
  %v3445 = vpop.f32.mrf.mxu0
  %v3446 = vadd.f32 0.0, %v3445
  %v3447 = vpop.f32.mrf.mxu0
  %v3448 = vpop.f32.mrf.mxu0
  %v3449 = vadd.f32 0.0, %v3448
  %v3450 = vpop.f32.mrf.mxu0
  %3451 = vmatprep.mubr.bf16.mxu0 %v3222
  %3452 = vmatmul.mubr.bf16.gmra.mxu0 %v3055
  %v3453 = vpop.f32.mrf.mxu0
  %v3454 = vadd.f32 0.0, %v3453
  %v3455 = vpop.f32.mrf.mxu0
  %v3456 = vpop.f32.mrf.mxu0
  %v3457 = vadd.f32 0.0, %v3456
  %v3458 = vpop.f32.mrf.mxu0
  %3459 = vmatprep.mubr.bf16.mxu0 %v3225
  %3460 = vmatmul.mubr.bf16.gmra.mxu0 %v3058
  %v3461 = vpop.f32.mrf.mxu0
  %v3462 = vadd.f32 0.0, %v3461
  %v3463 = vpop.f32.mrf.mxu0
  %v3464 = vpop.f32.mrf.mxu0
  %v3465 = vadd.f32 0.0, %v3464
  %v3466 = vpop.f32.mrf.mxu0
  %3467 = vmatprep.mubr.bf16.mxu0 %v3228
  %3468 = vmatmul.mubr.bf16.gmra.mxu0 %v3061
  %v3469 = vpop.f32.mrf.mxu0
  %v3470 = vadd.f32 0.0, %v3469
  %v3471 = vpop.f32.mrf.mxu0
  %v3472 = vpop.f32.mrf.mxu0
  %v3473 = vadd.f32 0.0, %v3472
  %v3474 = vpop.f32.mrf.mxu0
  %3475 = vmatprep.mubr.bf16.mxu0 %v3231
  %3476 = vmatmul.mubr.bf16.gmra.mxu0 %v3064
  %v3477 = vpop.f32.mrf.mxu0
  %v3478 = vadd.f32 0.0, %v3477
  %v3479 = vpop.f32.mrf.mxu0
  %v3480 = vpop.f32.mrf.mxu0
  %v3481 = vadd.f32 0.0, %v3480
  %v3482 = vpop.f32.mrf.mxu0
  %3483 = vmatprep.mubr.bf16.mxu0 %v3234
  %3484 = vmatmul.mubr.bf16.gmra.mxu0 %v3067
  %v3485 = vpop.f32.mrf.mxu0
  %v3486 = vadd.f32 0.0, %v3485
  %v3487 = vpop.f32.mrf.mxu0
  %v3488 = vpop.f32.mrf.mxu0
  %v3489 = vadd.f32 0.0, %v3488
  %v3490 = vpop.f32.mrf.mxu0
  %3491 = vmatprep.mubr.bf16.mxu0 %v3237
  %3492 = vmatmul.mubr.bf16.gmra.mxu0 %v3070
  %v3493 = vpop.f32.mrf.mxu0
  %v3494 = vadd.f32 0.0, %v3493
  %v3495 = vpop.f32.mrf.mxu0
  %v3496 = vpop.f32.mrf.mxu0
  %v3497 = vadd.f32 0.0, %v3496
  %v3498 = vpop.f32.mrf.mxu0
  %3499 = vmatprep.mubr.bf16.mxu0 %v3240
  %3500 = vmatmul.mubr.bf16.gmra.mxu0 %v3073
  %v3501 = vpop.f32.mrf.mxu0
  %v3502 = vadd.f32 0.0, %v3501
  %v3503 = vpop.f32.mrf.mxu0
  %v3504 = vpop.f32.mrf.mxu0
  %v3505 = vadd.f32 0.0, %v3504
  %v3506 = vpop.f32.mrf.mxu0
  %3507 = vmatprep.mubr.bf16.mxu0 %v3243
  %3508 = vmatmul.mubr.bf16.gmra.mxu0 %v3076
  %v3509 = vpop.f32.mrf.mxu0
  %v3510 = vadd.f32 0.0, %v3509
  %v3511 = vpop.f32.mrf.mxu0
  %v3512 = vpop.f32.mrf.mxu0
  %v3513 = vadd.f32 0.0, %v3512
  %v3514 = vpop.f32.mrf.mxu0
  %3515 = vmatprep.mubr.bf16.mxu0 %v3246
  %3516 = vmatmul.mubr.bf16.gmra.mxu0 %v3079
  %v3517 = vpop.f32.mrf.mxu0
  %v3518 = vadd.f32 0.0, %v3517
  %v3519 = vpop.f32.mrf.mxu0
  %v3520 = vpop.f32.mrf.mxu0
  %v3521 = vadd.f32 0.0, %v3520
  %v3522 = vpop.f32.mrf.mxu0
  %3523 = vmatprep.mubr.bf16.mxu0 %v3249
  %3524 = vmatmul.mubr.bf16.gmra.mxu0 %v3082
  %v3525 = vpop.f32.mrf.mxu0
  %v3526 = vadd.f32 0.0, %v3525
  %v3527 = vpop.f32.mrf.mxu0
  %v3528 = vpop.f32.mrf.mxu0
  %v3529 = vadd.f32 0.0, %v3528
  %v3530 = vpop.f32.mrf.mxu0
  %3531 = vmatprep.mubr.bf16.mxu0 %v3204
  %3532 = vmatmul.mubr.bf16.gmra.mxu0 %v3084
  %v3533 = vpop.f32.mrf.mxu0
  %v3534 = vadd.f32 0.0, %v3533
  %v3535 = vpop.f32.mrf.mxu0
  %v3536 = vpop.f32.mrf.mxu0
  %v3537 = vadd.f32 0.0, %v3536
  %v3538 = vpop.f32.mrf.mxu0
  %3539 = vdwg.mxu0
  %v3540 = vld [vmem:[%s5] sm:$0x1]
  %v3541 = vld [vmem:[%s6] sm:$0x1]
  %v3542 = vsel %vm536, %v3286, 0.0
  %v3543 = vsel %vm536, %v3289, 0.0
  %v3544 = vadd.f32 %v3542, %v3543
  %v3545 = vsel %vm536, %v3294, 0.0
  %v3546 = vadd.f32 %v3544, %v3545
  %v3547 = vsel %vm536, %v3297, 0.0
  %v3548 = vadd.f32 %v3546, %v3547
  %v3549 = vsel %vm536, %v3302, 0.0
  %v3550 = vadd.f32 %v3548, %v3549
  %v3551 = vsel %vm536, %v3305, 0.0
  %v3552 = vadd.f32 %v3550, %v3551
  %v3553 = vsel %vm536, %v3310, 0.0
  %v3554 = vadd.f32 %v3552, %v3553
  %v3555 = vsel %vm536, %v3313, 0.0
  %v3556 = vadd.f32 %v3554, %v3555
  %v3557 = vsel %vm536, %v3318, 0.0
  %v3558 = vadd.f32 %v3556, %v3557
  %v3559 = vsel %vm536, %v3321, 0.0
  %v3560 = vadd.f32 %v3558, %v3559
  %v3561 = vsel %vm536, %v3326, 0.0
  %v3562 = vadd.f32 %v3560, %v3561
  %v3563 = vsel %vm536, %v3329, 0.0
  %v3564 = vadd.f32 %v3562, %v3563
  %v3565 = vsel %vm536, %v3334, 0.0
  %v3566 = vadd.f32 %v3564, %v3565
  %v3567 = vsel %vm536, %v3337, 0.0
  %v3568 = vadd.f32 %v3566, %v3567
  %v3569 = vsel %vm536, %v3342, 0.0
  %v3570 = vadd.f32 %v3568, %v3569
  %v3571 = vsel %vm536, %v3345, 0.0
  %v3572 = vadd.f32 %v3570, %v3571
  %v3573 = vsel %vm536, %v3350, 0.0
  %v3574 = vadd.f32 %v3572, %v3573
  %v3575 = vsel %vm536, %v3353, 0.0
  %v3576 = vadd.f32 %v3574, %v3575
  %v3577 = vsel %vm536, %v3358, 0.0
  %v3578 = vadd.f32 %v3576, %v3577
  %v3579 = vsel %vm536, %v3361, 0.0
  %v3580 = vadd.f32 %v3578, %v3579
  %v3581 = vsel %vm536, %v3366, 0.0
  %v3582 = vadd.f32 %v3580, %v3581
  %v3583 = vsel %vm536, %v3369, 0.0
  %v3584 = vadd.f32 %v3582, %v3583
  %v3585 = vsel %vm536, %v3374, 0.0
  %v3586 = vadd.f32 %v3584, %v3585
  %v3587 = vsel %vm536, %v3377, 0.0
  %v3588 = vadd.f32 %v3586, %v3587
  %v3589 = vsel %vm536, %v3382, 0.0
  %v3590 = vadd.f32 %v3588, %v3589
  %v3591 = vsel %vm536, %v3385, 0.0
  %v3592 = vadd.f32 %v3590, %v3591
  %v3593 = vsel %vm536, %v3390, 0.0
  %v3594 = vadd.f32 %v3592, %v3593
  %v3595 = vsel %vm536, %v3393, 0.0
  %v3596 = vadd.f32 %v3594, %v3595
  %v3597 = vsel %vm536, %v3398, 0.0
  %v3598 = vadd.f32 %v3596, %v3597
  %v3599 = vsel %vm536, %v3401, 0.0
  %v3600 = vadd.f32 %v3598, %v3599
  %v3601 = vsel %vm536, %v3406, 0.0
  %v3602 = vadd.f32 %v3600, %v3601
  %v3603 = vsel %vm536, %v3409, 0.0
  %v3604 = vadd.f32 %v3602, %v3603
  %v3605 = vsel %vm536, %v3414, 0.0
  %v3606 = vadd.f32 %v3604, %v3605
  %v3607 = vsel %vm536, %v3417, 0.0
  %v3608 = vadd.f32 %v3606, %v3607
  %v3609 = vsel %vm536, %v3422, 0.0
  %v3610 = vadd.f32 %v3608, %v3609
  %v3611 = vsel %vm536, %v3425, 0.0
  %v3612 = vadd.f32 %v3610, %v3611
  %v3613 = vsel %vm536, %v3430, 0.0
  %v3614 = vadd.f32 %v3612, %v3613
  %v3615 = vsel %vm536, %v3433, 0.0
  %v3616 = vadd.f32 %v3614, %v3615
  %v3617 = vsel %vm536, %v3438, 0.0
  %v3618 = vadd.f32 %v3616, %v3617
  %v3619 = vsel %vm536, %v3441, 0.0
  %v3620 = vadd.f32 %v3618, %v3619
  %v3621 = vsel %vm536, %v3446, 0.0
  %v3622 = vadd.f32 %v3620, %v3621
  %v3623 = vsel %vm536, %v3449, 0.0
  %v3624 = vadd.f32 %v3622, %v3623
  %v3625 = vsel %vm536, %v3454, 0.0
  %v3626 = vadd.f32 %v3624, %v3625
  %v3627 = vsel %vm536, %v3457, 0.0
  %v3628 = vadd.f32 %v3626, %v3627
  %v3629 = vsel %vm536, %v3462, 0.0
  %v3630 = vadd.f32 %v3628, %v3629
  %v3631 = vsel %vm536, %v3465, 0.0
  %v3632 = vadd.f32 %v3630, %v3631
  %v3633 = vsel %vm536, %v3470, 0.0
  %v3634 = vadd.f32 %v3632, %v3633
  %v3635 = vsel %vm536, %v3473, 0.0
  %v3636 = vadd.f32 %v3634, %v3635
  %v3637 = vsel %vm536, %v3478, 0.0
  %v3638 = vadd.f32 %v3636, %v3637
  %v3639 = vsel %vm536, %v3481, 0.0
  %v3640 = vadd.f32 %v3638, %v3639
  %v3641 = vsel %vm536, %v3486, 0.0
  %v3642 = vadd.f32 %v3640, %v3641
  %v3643 = vsel %vm536, %v3489, 0.0
  %v3644 = vadd.f32 %v3642, %v3643
  %v3645 = vsel %vm536, %v3494, 0.0
  %v3646 = vadd.f32 %v3644, %v3645
  %v3647 = vsel %vm536, %v3497, 0.0
  %v3648 = vadd.f32 %v3646, %v3647
  %v3649 = vsel %vm536, %v3502, 0.0
  %v3650 = vadd.f32 %v3648, %v3649
  %v3651 = vsel %vm536, %v3505, 0.0
  %v3652 = vadd.f32 %v3650, %v3651
  %v3653 = vsel %vm536, %v3510, 0.0
  %v3654 = vadd.f32 %v3652, %v3653
  %v3655 = vsel %vm536, %v3513, 0.0
  %v3656 = vadd.f32 %v3654, %v3655
  %v3657 = vsel %vm536, %v3518, 0.0
  %v3658 = vadd.f32 %v3656, %v3657
  %v3659 = vsel %vm536, %v3521, 0.0
  %v3660 = vadd.f32 %v3658, %v3659
  %v3661 = vsel %vm536, %v3526, 0.0
  %v3662 = vadd.f32 %v3660, %v3661
  %v3663 = vsel %vm536, %v3529, 0.0
  %v3664 = vadd.f32 %v3662, %v3663
  %v3665 = vsel %vm536, %v3534, 0.0
  %v3666 = vadd.f32 %v3664, %v3665
  %v3667 = vsel %vm536, %v3537, 0.0
  %v3668 = vadd.f32 %v3666, %v3667
  %v3669 = vrot.slane %v3668, 4
  %v3670 = vadd.f32 %v3668, %v3669
  %v3671 = vrot.slane %v3670, 2
  %v3672 = vadd.f32 %v3670, %v3671
  %v3673 = vrot.slane %v3672, 1
  %v3674 = vadd.f32 %v3672, %v3673
  %v3675 = vmul.f32 %v3286, %v3286
  %v3676 = vmul.f32 %v3289, %v3289
  %v3677 = vmul.f32 %v3294, %v3294
  %v3678 = vmul.f32 %v3297, %v3297
  %v3679 = vmul.f32 %v3302, %v3302
  %v3680 = vmul.f32 %v3305, %v3305
  %v3681 = vmul.f32 %v3310, %v3310
  %v3682 = vmul.f32 %v3313, %v3313
  %v3683 = vmul.f32 %v3318, %v3318
  %v3684 = vmul.f32 %v3321, %v3321
  %v3685 = vmul.f32 %v3326, %v3326
  %v3686 = vmul.f32 %v3329, %v3329
  %v3687 = vmul.f32 %v3334, %v3334
  %v3688 = vmul.f32 %v3337, %v3337
  %v3689 = vmul.f32 %v3342, %v3342
  %v3690 = vmul.f32 %v3345, %v3345
  %v3691 = vmul.f32 %v3350, %v3350
  %v3692 = vmul.f32 %v3353, %v3353
  %v3693 = vmul.f32 %v3358, %v3358
  %v3694 = vmul.f32 %v3361, %v3361
  %v3695 = vmul.f32 %v3366, %v3366
  %v3696 = vmul.f32 %v3369, %v3369
  %v3697 = vmul.f32 %v3374, %v3374
  %v3698 = vmul.f32 %v3377, %v3377
  %v3699 = vmul.f32 %v3382, %v3382
  %v3700 = vmul.f32 %v3385, %v3385
  %v3701 = vmul.f32 %v3390, %v3390
  %v3702 = vmul.f32 %v3393, %v3393
  %v3703 = vmul.f32 %v3398, %v3398
  %v3704 = vmul.f32 %v3401, %v3401
  %v3705 = vmul.f32 %v3406, %v3406
  %v3706 = vmul.f32 %v3409, %v3409
  %v3707 = vmul.f32 %v3414, %v3414
  %v3708 = vmul.f32 %v3417, %v3417
  %v3709 = vmul.f32 %v3422, %v3422
  %v3710 = vmul.f32 %v3425, %v3425
  %v3711 = vmul.f32 %v3430, %v3430
  %v3712 = vmul.f32 %v3433, %v3433
  %v3713 = vmul.f32 %v3438, %v3438
  %v3714 = vmul.f32 %v3441, %v3441
  %v3715 = vmul.f32 %v3446, %v3446
  %v3716 = vmul.f32 %v3449, %v3449
  %v3717 = vmul.f32 %v3454, %v3454
  %v3718 = vmul.f32 %v3457, %v3457
  %v3719 = vmul.f32 %v3462, %v3462
  %v3720 = vmul.f32 %v3465, %v3465
  %v3721 = vmul.f32 %v3470, %v3470
  %v3722 = vmul.f32 %v3473, %v3473
  %v3723 = vmul.f32 %v3478, %v3478
  %v3724 = vmul.f32 %v3481, %v3481
  %v3725 = vmul.f32 %v3486, %v3486
  %v3726 = vmul.f32 %v3489, %v3489
  %v3727 = vmul.f32 %v3494, %v3494
  %v3728 = vmul.f32 %v3497, %v3497
  %v3729 = vmul.f32 %v3502, %v3502
  %v3730 = vmul.f32 %v3505, %v3505
  %v3731 = vmul.f32 %v3510, %v3510
  %v3732 = vmul.f32 %v3513, %v3513
  %v3733 = vmul.f32 %v3518, %v3518
  %v3734 = vmul.f32 %v3521, %v3521
  %v3735 = vmul.f32 %v3526, %v3526
  %v3736 = vmul.f32 %v3529, %v3529
  %v3737 = vmul.f32 %v3534, %v3534
  %v3738 = vmul.f32 %v3537, %v3537
  %v3739 = vsel %vm536, %v3675, 0.0
  %v3740 = vsel %vm536, %v3676, 0.0
  %v3741 = vadd.f32 %v3739, %v3740
  %v3742 = vsel %vm536, %v3677, 0.0
  %v3743 = vadd.f32 %v3741, %v3742
  %v3744 = vsel %vm536, %v3678, 0.0
  %v3745 = vadd.f32 %v3743, %v3744
  %v3746 = vsel %vm536, %v3679, 0.0
  %v3747 = vadd.f32 %v3745, %v3746
  %v3748 = vsel %vm536, %v3680, 0.0
  %v3749 = vadd.f32 %v3747, %v3748
  %v3750 = vsel %vm536, %v3681, 0.0
  %v3751 = vadd.f32 %v3749, %v3750
  %v3752 = vsel %vm536, %v3682, 0.0
  %v3753 = vadd.f32 %v3751, %v3752
  %v3754 = vsel %vm536, %v3683, 0.0
  %v3755 = vadd.f32 %v3753, %v3754
  %v3756 = vsel %vm536, %v3684, 0.0
  %v3757 = vadd.f32 %v3755, %v3756
  %v3758 = vsel %vm536, %v3685, 0.0
  %v3759 = vadd.f32 %v3757, %v3758
  %v3760 = vsel %vm536, %v3686, 0.0
  %v3761 = vadd.f32 %v3759, %v3760
  %v3762 = vsel %vm536, %v3687, 0.0
  %v3763 = vadd.f32 %v3761, %v3762
  %v3764 = vsel %vm536, %v3688, 0.0
  %v3765 = vadd.f32 %v3763, %v3764
  %v3766 = vsel %vm536, %v3689, 0.0
  %v3767 = vadd.f32 %v3765, %v3766
  %v3768 = vsel %vm536, %v3690, 0.0
  %v3769 = vadd.f32 %v3767, %v3768
  %v3770 = vsel %vm536, %v3691, 0.0
  %v3771 = vadd.f32 %v3769, %v3770
  %v3772 = vsel %vm536, %v3692, 0.0
  %v3773 = vadd.f32 %v3771, %v3772
  %v3774 = vsel %vm536, %v3693, 0.0
  %v3775 = vadd.f32 %v3773, %v3774
  %v3776 = vsel %vm536, %v3694, 0.0
  %v3777 = vadd.f32 %v3775, %v3776
  %v3778 = vsel %vm536, %v3695, 0.0
  %v3779 = vadd.f32 %v3777, %v3778
  %v3780 = vsel %vm536, %v3696, 0.0
  %v3781 = vadd.f32 %v3779, %v3780
  %v3782 = vsel %vm536, %v3697, 0.0
  %v3783 = vadd.f32 %v3781, %v3782
  %v3784 = vsel %vm536, %v3698, 0.0
  %v3785 = vadd.f32 %v3783, %v3784
  %v3786 = vsel %vm536, %v3699, 0.0
  %v3787 = vadd.f32 %v3785, %v3786
  %v3788 = vsel %vm536, %v3700, 0.0
  %v3789 = vadd.f32 %v3787, %v3788
  %v3790 = vsel %vm536, %v3701, 0.0
  %v3791 = vadd.f32 %v3789, %v3790
  %v3792 = vsel %vm536, %v3702, 0.0
  %v3793 = vadd.f32 %v3791, %v3792
  %v3794 = vsel %vm536, %v3703, 0.0
  %v3795 = vadd.f32 %v3793, %v3794
  %v3796 = vsel %vm536, %v3704, 0.0
  %v3797 = vadd.f32 %v3795, %v3796
  %v3798 = vsel %vm536, %v3705, 0.0
  %v3799 = vadd.f32 %v3797, %v3798
  %v3800 = vsel %vm536, %v3706, 0.0
  %v3801 = vadd.f32 %v3799, %v3800
  %v3802 = vsel %vm536, %v3707, 0.0
  %v3803 = vadd.f32 %v3801, %v3802
  %v3804 = vsel %vm536, %v3708, 0.0
  %v3805 = vadd.f32 %v3803, %v3804
  %v3806 = vsel %vm536, %v3709, 0.0
  %v3807 = vadd.f32 %v3805, %v3806
  %v3808 = vsel %vm536, %v3710, 0.0
  %v3809 = vadd.f32 %v3807, %v3808
  %v3810 = vsel %vm536, %v3711, 0.0
  %v3811 = vadd.f32 %v3809, %v3810
  %v3812 = vsel %vm536, %v3712, 0.0
  %v3813 = vadd.f32 %v3811, %v3812
  %v3814 = vsel %vm536, %v3713, 0.0
  %v3815 = vadd.f32 %v3813, %v3814
  %v3816 = vsel %vm536, %v3714, 0.0
  %v3817 = vadd.f32 %v3815, %v3816
  %v3818 = vsel %vm536, %v3715, 0.0
  %v3819 = vadd.f32 %v3817, %v3818
  %v3820 = vsel %vm536, %v3716, 0.0
  %v3821 = vadd.f32 %v3819, %v3820
  %v3822 = vsel %vm536, %v3717, 0.0
  %v3823 = vadd.f32 %v3821, %v3822
  %v3824 = vsel %vm536, %v3718, 0.0
  %v3825 = vadd.f32 %v3823, %v3824
  %v3826 = vsel %vm536, %v3719, 0.0
  %v3827 = vadd.f32 %v3825, %v3826
  %v3828 = vsel %vm536, %v3720, 0.0
  %v3829 = vadd.f32 %v3827, %v3828
  %v3830 = vsel %vm536, %v3721, 0.0
  %v3831 = vadd.f32 %v3829, %v3830
  %v3832 = vsel %vm536, %v3722, 0.0
  %v3833 = vadd.f32 %v3831, %v3832
  %v3834 = vsel %vm536, %v3723, 0.0
  %v3835 = vadd.f32 %v3833, %v3834
  %v3836 = vsel %vm536, %v3724, 0.0
  %v3837 = vadd.f32 %v3835, %v3836
  %v3838 = vsel %vm536, %v3725, 0.0
  %v3839 = vadd.f32 %v3837, %v3838
  %v3840 = vsel %vm536, %v3726, 0.0
  %v3841 = vadd.f32 %v3839, %v3840
  %v3842 = vsel %vm536, %v3727, 0.0
  %v3843 = vadd.f32 %v3841, %v3842
  %v3844 = vsel %vm536, %v3728, 0.0
  %v3845 = vadd.f32 %v3843, %v3844
  %v3846 = vsel %vm536, %v3729, 0.0
  %v3847 = vadd.f32 %v3845, %v3846
  %v3848 = vsel %vm536, %v3730, 0.0
  %v3849 = vadd.f32 %v3847, %v3848
  %v3850 = vsel %vm536, %v3731, 0.0
  %v3851 = vadd.f32 %v3849, %v3850
  %v3852 = vsel %vm536, %v3732, 0.0
  %v3853 = vadd.f32 %v3851, %v3852
  %v3854 = vsel %vm536, %v3733, 0.0
  %v3855 = vadd.f32 %v3853, %v3854
  %v3856 = vsel %vm536, %v3734, 0.0
  %v3857 = vadd.f32 %v3855, %v3856
  %v3858 = vsel %vm536, %v3735, 0.0
  %v3859 = vadd.f32 %v3857, %v3858
  %v3860 = vsel %vm536, %v3736, 0.0
  %v3861 = vadd.f32 %v3859, %v3860
  %v3862 = vsel %vm536, %v3737, 0.0
  %v3863 = vadd.f32 %v3861, %v3862
  %v3864 = vsel %vm536, %v3738, 0.0
  %v3865 = vadd.f32 %v3863, %v3864
  %v3866 = vrot.slane %v3865, 4
  %v3867 = vadd.f32 %v3865, %v3866
  %v3868 = vrot.slane %v3867, 2
  %v3869 = vadd.f32 %v3867, %v3868
  %v3870 = vrot.slane %v3869, 1
  %v3871 = vadd.f32 %v3869, %v3870
  %v3872 = vmul.f32 %v3674, 0.001953125
  %v3873 = vmul.f32 %v3871, 0.001953125
  %v3874 = vmul.f32 %v3872, %v3872
  %v3875 = vsub.f32 %v3873, %v3874
  %v3876 = vmax.f32 %v3875, 0.0
  %v3877 = vsub.f32 %v3286, %v3872
  %v3878 = vsub.f32 %v3289, %v3872
  %v3879 = vsub.f32 %v3294, %v3872
  %v3880 = vsub.f32 %v3297, %v3872
  %v3881 = vsub.f32 %v3302, %v3872
  %v3882 = vsub.f32 %v3305, %v3872
  %v3883 = vsub.f32 %v3310, %v3872
  %v3884 = vsub.f32 %v3313, %v3872
  %v3885 = vsub.f32 %v3318, %v3872
  %v3886 = vsub.f32 %v3321, %v3872
  %v3887 = vsub.f32 %v3326, %v3872
  %v3888 = vsub.f32 %v3329, %v3872
  %v3889 = vsub.f32 %v3334, %v3872
  %v3890 = vsub.f32 %v3337, %v3872
  %v3891 = vsub.f32 %v3342, %v3872
  %v3892 = vsub.f32 %v3345, %v3872
  %v3893 = vsub.f32 %v3350, %v3872
  %v3894 = vsub.f32 %v3353, %v3872
  %v3895 = vsub.f32 %v3358, %v3872
  %v3896 = vsub.f32 %v3361, %v3872
  %v3897 = vsub.f32 %v3366, %v3872
  %v3898 = vsub.f32 %v3369, %v3872
  %v3899 = vsub.f32 %v3374, %v3872
  %v3900 = vsub.f32 %v3377, %v3872
  %v3901 = vsub.f32 %v3382, %v3872
  %v3902 = vsub.f32 %v3385, %v3872
  %v3903 = vsub.f32 %v3390, %v3872
  %v3904 = vsub.f32 %v3393, %v3872
  %v3905 = vsub.f32 %v3398, %v3872
  %v3906 = vsub.f32 %v3401, %v3872
  %v3907 = vsub.f32 %v3406, %v3872
  %v3908 = vsub.f32 %v3409, %v3872
  %v3909 = vsub.f32 %v3414, %v3872
  %v3910 = vsub.f32 %v3417, %v3872
  %v3911 = vsub.f32 %v3422, %v3872
  %v3912 = vsub.f32 %v3425, %v3872
  %v3913 = vsub.f32 %v3430, %v3872
  %v3914 = vsub.f32 %v3433, %v3872
  %v3915 = vsub.f32 %v3438, %v3872
  %v3916 = vsub.f32 %v3441, %v3872
  %v3917 = vsub.f32 %v3446, %v3872
  %v3918 = vsub.f32 %v3449, %v3872
  %v3919 = vsub.f32 %v3454, %v3872
  %v3920 = vsub.f32 %v3457, %v3872
  %v3921 = vsub.f32 %v3462, %v3872
  %v3922 = vsub.f32 %v3465, %v3872
  %v3923 = vsub.f32 %v3470, %v3872
  %v3924 = vsub.f32 %v3473, %v3872
  %v3925 = vsub.f32 %v3478, %v3872
  %v3926 = vsub.f32 %v3481, %v3872
  %v3927 = vsub.f32 %v3486, %v3872
  %v3928 = vsub.f32 %v3489, %v3872
  %v3929 = vsub.f32 %v3494, %v3872
  %v3930 = vsub.f32 %v3497, %v3872
  %v3931 = vsub.f32 %v3502, %v3872
  %v3932 = vsub.f32 %v3505, %v3872
  %v3933 = vsub.f32 %v3510, %v3872
  %v3934 = vsub.f32 %v3513, %v3872
  %v3935 = vsub.f32 %v3518, %v3872
  %v3936 = vsub.f32 %v3521, %v3872
  %v3937 = vsub.f32 %v3526, %v3872
  %v3938 = vsub.f32 %v3529, %v3872
  %v3939 = vsub.f32 %v3534, %v3872
  %v3940 = vsub.f32 %v3537, %v3872
  %v3941 = vadd.f32 %v3876, 1e-05
  %v3942 = vrsqrt.pop %v3941
  %v3943 = vmul.f32 %v3877, %v3942
  %v3944 = vmul.f32 %v3878, %v3942
  %v3945 = vmul.f32 %v3879, %v3942
  %v3946 = vmul.f32 %v3880, %v3942
  %v3947 = vmul.f32 %v3881, %v3942
  %v3948 = vmul.f32 %v3882, %v3942
  %v3949 = vmul.f32 %v3883, %v3942
  %v3950 = vmul.f32 %v3884, %v3942
  %v3951 = vmul.f32 %v3885, %v3942
  %v3952 = vmul.f32 %v3886, %v3942
  %v3953 = vmul.f32 %v3887, %v3942
  %v3954 = vmul.f32 %v3888, %v3942
  %v3955 = vmul.f32 %v3889, %v3942
  %v3956 = vmul.f32 %v3890, %v3942
  %v3957 = vmul.f32 %v3891, %v3942
  %v3958 = vmul.f32 %v3892, %v3942
  %v3959 = vmul.f32 %v3893, %v3942
  %v3960 = vmul.f32 %v3894, %v3942
  %v3961 = vmul.f32 %v3895, %v3942
  %v3962 = vmul.f32 %v3896, %v3942
  %v3963 = vmul.f32 %v3897, %v3942
  %v3964 = vmul.f32 %v3898, %v3942
  %v3965 = vmul.f32 %v3899, %v3942
  %v3966 = vmul.f32 %v3900, %v3942
  %v3967 = vmul.f32 %v3901, %v3942
  %v3968 = vmul.f32 %v3902, %v3942
  %v3969 = vmul.f32 %v3903, %v3942
  %v3970 = vmul.f32 %v3904, %v3942
  %v3971 = vmul.f32 %v3905, %v3942
  %v3972 = vmul.f32 %v3906, %v3942
  %v3973 = vmul.f32 %v3907, %v3942
  %v3974 = vmul.f32 %v3908, %v3942
  %v3975 = vmul.f32 %v3909, %v3942
  %v3976 = vmul.f32 %v3910, %v3942
  %v3977 = vmul.f32 %v3911, %v3942
  %v3978 = vmul.f32 %v3912, %v3942
  %v3979 = vmul.f32 %v3913, %v3942
  %v3980 = vmul.f32 %v3914, %v3942
  %v3981 = vmul.f32 %v3915, %v3942
  %v3982 = vmul.f32 %v3916, %v3942
  %v3983 = vmul.f32 %v3917, %v3942
  %v3984 = vmul.f32 %v3918, %v3942
  %v3985 = vmul.f32 %v3919, %v3942
  %v3986 = vmul.f32 %v3920, %v3942
  %v3987 = vmul.f32 %v3921, %v3942
  %v3988 = vmul.f32 %v3922, %v3942
  %v3989 = vmul.f32 %v3923, %v3942
  %v3990 = vmul.f32 %v3924, %v3942
  %v3991 = vmul.f32 %v3925, %v3942
  %v3992 = vmul.f32 %v3926, %v3942
  %v3993 = vmul.f32 %v3927, %v3942
  %v3994 = vmul.f32 %v3928, %v3942
  %v3995 = vmul.f32 %v3929, %v3942
  %v3996 = vmul.f32 %v3930, %v3942
  %v3997 = vmul.f32 %v3931, %v3942
  %v3998 = vmul.f32 %v3932, %v3942
  %v3999 = vmul.f32 %v3933, %v3942
  %v4000 = vmul.f32 %v3934, %v3942
  %v4001 = vmul.f32 %v3935, %v3942
  %v4002 = vmul.f32 %v3936, %v3942
  %v4003 = vmul.f32 %v3937, %v3942
  %v4004 = vmul.f32 %v3938, %v3942
  %v4005 = vmul.f32 %v3939, %v3942
  %v4006 = vmul.f32 %v3940, %v3942
  %v4008 = vlaneseq
  %v4009 = vshrl.u32 %v4008, 7
  %v4010 = vsub.s32 0, %v4009
  %v4011 = vrot.slane %v3540, %v4010
  %v4013 = vmul.f32 %v3943, %v4011
  %v4014 = vmul.f32 %v3944, %v4011
  %v4015 = vmul.f32 %v3945, %v4011
  %v4016 = vmul.f32 %v3946, %v4011
  %v4017 = vmul.f32 %v3947, %v4011
  %v4018 = vmul.f32 %v3948, %v4011
  %v4019 = vmul.f32 %v3949, %v4011
  %v4020 = vmul.f32 %v3950, %v4011
  %v4021 = vmul.f32 %v3951, %v4011
  %v4022 = vmul.f32 %v3952, %v4011
  %v4023 = vmul.f32 %v3953, %v4011
  %v4024 = vmul.f32 %v3954, %v4011
  %v4025 = vmul.f32 %v3955, %v4011
  %v4026 = vmul.f32 %v3956, %v4011
  %v4027 = vmul.f32 %v3957, %v4011
  %v4028 = vmul.f32 %v3958, %v4011
  %v4029 = vmul.f32 %v3959, %v4011
  %v4030 = vmul.f32 %v3960, %v4011
  %v4031 = vmul.f32 %v3961, %v4011
  %v4032 = vmul.f32 %v3962, %v4011
  %v4033 = vmul.f32 %v3963, %v4011
  %v4034 = vmul.f32 %v3964, %v4011
  %v4035 = vmul.f32 %v3965, %v4011
  %v4036 = vmul.f32 %v3966, %v4011
  %v4037 = vmul.f32 %v3967, %v4011
  %v4038 = vmul.f32 %v3968, %v4011
  %v4039 = vmul.f32 %v3969, %v4011
  %v4040 = vmul.f32 %v3970, %v4011
  %v4041 = vmul.f32 %v3971, %v4011
  %v4042 = vmul.f32 %v3972, %v4011
  %v4043 = vmul.f32 %v3973, %v4011
  %v4044 = vmul.f32 %v3974, %v4011
  %v4045 = vmul.f32 %v3975, %v4011
  %v4046 = vmul.f32 %v3976, %v4011
  %v4047 = vmul.f32 %v3977, %v4011
  %v4048 = vmul.f32 %v3978, %v4011
  %v4049 = vmul.f32 %v3979, %v4011
  %v4050 = vmul.f32 %v3980, %v4011
  %v4051 = vmul.f32 %v3981, %v4011
  %v4052 = vmul.f32 %v3982, %v4011
  %v4053 = vmul.f32 %v3983, %v4011
  %v4054 = vmul.f32 %v3984, %v4011
  %v4055 = vmul.f32 %v3985, %v4011
  %v4056 = vmul.f32 %v3986, %v4011
  %v4057 = vmul.f32 %v3987, %v4011
  %v4058 = vmul.f32 %v3988, %v4011
  %v4059 = vmul.f32 %v3989, %v4011
  %v4060 = vmul.f32 %v3990, %v4011
  %v4061 = vmul.f32 %v3991, %v4011
  %v4062 = vmul.f32 %v3992, %v4011
  %v4063 = vmul.f32 %v3993, %v4011
  %v4064 = vmul.f32 %v3994, %v4011
  %v4065 = vmul.f32 %v3995, %v4011
  %v4066 = vmul.f32 %v3996, %v4011
  %v4067 = vmul.f32 %v3997, %v4011
  %v4068 = vmul.f32 %v3998, %v4011
  %v4069 = vmul.f32 %v3999, %v4011
  %v4070 = vmul.f32 %v4000, %v4011
  %v4071 = vmul.f32 %v4001, %v4011
  %v4072 = vmul.f32 %v4002, %v4011
  %v4073 = vmul.f32 %v4003, %v4011
  %v4074 = vmul.f32 %v4004, %v4011
  %v4075 = vmul.f32 %v4005, %v4011
  %v4076 = vmul.f32 %v4006, %v4011
  %v4078 = vlaneseq
  %v4079 = vshrl.u32 %v4078, 7
  %v4080 = vsub.s32 0, %v4079
  %v4081 = vrot.slane %v3541, %v4080
  %v4083 = vadd.f32 %v4013, %v4081
  %v4084 = vadd.f32 %v4014, %v4081
  %v4085 = vadd.f32 %v4015, %v4081
  %v4086 = vadd.f32 %v4016, %v4081
  %v4087 = vadd.f32 %v4017, %v4081
  %v4088 = vadd.f32 %v4018, %v4081
  %v4089 = vadd.f32 %v4019, %v4081
  %v4090 = vadd.f32 %v4020, %v4081
  %v4091 = vadd.f32 %v4021, %v4081
  %v4092 = vadd.f32 %v4022, %v4081
  %v4093 = vadd.f32 %v4023, %v4081
  %v4094 = vadd.f32 %v4024, %v4081
  %v4095 = vadd.f32 %v4025, %v4081
  %v4096 = vadd.f32 %v4026, %v4081
  %v4097 = vadd.f32 %v4027, %v4081
  %v4098 = vadd.f32 %v4028, %v4081
  %v4099 = vadd.f32 %v4029, %v4081
  %v4100 = vadd.f32 %v4030, %v4081
  %v4101 = vadd.f32 %v4031, %v4081
  %v4102 = vadd.f32 %v4032, %v4081
  %v4103 = vadd.f32 %v4033, %v4081
  %v4104 = vadd.f32 %v4034, %v4081
  %v4105 = vadd.f32 %v4035, %v4081
  %v4106 = vadd.f32 %v4036, %v4081
  %v4107 = vadd.f32 %v4037, %v4081
  %v4108 = vadd.f32 %v4038, %v4081
  %v4109 = vadd.f32 %v4039, %v4081
  %v4110 = vadd.f32 %v4040, %v4081
  %v4111 = vadd.f32 %v4041, %v4081
  %v4112 = vadd.f32 %v4042, %v4081
  %v4113 = vadd.f32 %v4043, %v4081
  %v4114 = vadd.f32 %v4044, %v4081
  %v4115 = vadd.f32 %v4045, %v4081
  %v4116 = vadd.f32 %v4046, %v4081
  %v4117 = vadd.f32 %v4047, %v4081
  %v4118 = vadd.f32 %v4048, %v4081
  %v4119 = vadd.f32 %v4049, %v4081
  %v4120 = vadd.f32 %v4050, %v4081
  %v4121 = vadd.f32 %v4051, %v4081
  %v4122 = vadd.f32 %v4052, %v4081
  %v4123 = vadd.f32 %v4053, %v4081
  %v4124 = vadd.f32 %v4054, %v4081
  %v4125 = vadd.f32 %v4055, %v4081
  %v4126 = vadd.f32 %v4056, %v4081
  %v4127 = vadd.f32 %v4057, %v4081
  %v4128 = vadd.f32 %v4058, %v4081
  %v4129 = vadd.f32 %v4059, %v4081
  %v4130 = vadd.f32 %v4060, %v4081
  %v4131 = vadd.f32 %v4061, %v4081
  %v4132 = vadd.f32 %v4062, %v4081
  %v4133 = vadd.f32 %v4063, %v4081
  %v4134 = vadd.f32 %v4064, %v4081
  %v4135 = vadd.f32 %v4065, %v4081
  %v4136 = vadd.f32 %v4066, %v4081
  %v4137 = vadd.f32 %v4067, %v4081
  %v4138 = vadd.f32 %v4068, %v4081
  %v4139 = vadd.f32 %v4069, %v4081
  %v4140 = vadd.f32 %v4070, %v4081
  %v4141 = vadd.f32 %v4071, %v4081
  %v4142 = vadd.f32 %v4072, %v4081
  %v4143 = vadd.f32 %v4073, %v4081
  %v4144 = vadd.f32 %v4074, %v4081
  %v4145 = vadd.f32 %v4075, %v4081
  %v4146 = vadd.f32 %v4076, %v4081
  %v4147 = vmax.f32 %v4083, 0.0
  %v4148 = vmax.f32 %v4084, 0.0
  %v4149 = vmax.f32 %v4085, 0.0
  %v4150 = vmax.f32 %v4086, 0.0
  %v4151 = vmax.f32 %v4087, 0.0
  %v4152 = vmax.f32 %v4088, 0.0
  %v4153 = vmax.f32 %v4089, 0.0
  %v4154 = vmax.f32 %v4090, 0.0
  %v4155 = vmax.f32 %v4091, 0.0
  %v4156 = vmax.f32 %v4092, 0.0
  %v4157 = vmax.f32 %v4093, 0.0
  %v4158 = vmax.f32 %v4094, 0.0
  %v4159 = vmax.f32 %v4095, 0.0
  %v4160 = vmax.f32 %v4096, 0.0
  %v4161 = vmax.f32 %v4097, 0.0
  %v4162 = vmax.f32 %v4098, 0.0
  %v4163 = vmax.f32 %v4099, 0.0
  %v4164 = vmax.f32 %v4100, 0.0
  %v4165 = vmax.f32 %v4101, 0.0
  %v4166 = vmax.f32 %v4102, 0.0
  %v4167 = vmax.f32 %v4103, 0.0
  %v4168 = vmax.f32 %v4104, 0.0
  %v4169 = vmax.f32 %v4105, 0.0
  %v4170 = vmax.f32 %v4106, 0.0
  %v4171 = vmax.f32 %v4107, 0.0
  %v4172 = vmax.f32 %v4108, 0.0
  %v4173 = vmax.f32 %v4109, 0.0
  %v4174 = vmax.f32 %v4110, 0.0
  %v4175 = vmax.f32 %v4111, 0.0
  %v4176 = vmax.f32 %v4112, 0.0
  %v4177 = vmax.f32 %v4113, 0.0
  %v4178 = vmax.f32 %v4114, 0.0
  %v4179 = vmax.f32 %v4115, 0.0
  %v4180 = vmax.f32 %v4116, 0.0
  %v4181 = vmax.f32 %v4117, 0.0
  %v4182 = vmax.f32 %v4118, 0.0
  %v4183 = vmax.f32 %v4119, 0.0
  %v4184 = vmax.f32 %v4120, 0.0
  %v4185 = vmax.f32 %v4121, 0.0
  %v4186 = vmax.f32 %v4122, 0.0
  %v4187 = vmax.f32 %v4123, 0.0
  %v4188 = vmax.f32 %v4124, 0.0
  %v4189 = vmax.f32 %v4125, 0.0
  %v4190 = vmax.f32 %v4126, 0.0
  %v4191 = vmax.f32 %v4127, 0.0
  %v4192 = vmax.f32 %v4128, 0.0
  %v4193 = vmax.f32 %v4129, 0.0
  %v4194 = vmax.f32 %v4130, 0.0
  %v4195 = vmax.f32 %v4131, 0.0
  %v4196 = vmax.f32 %v4132, 0.0
  %v4197 = vmax.f32 %v4133, 0.0
  %v4198 = vmax.f32 %v4134, 0.0
  %v4199 = vmax.f32 %v4135, 0.0
  %v4200 = vmax.f32 %v4136, 0.0
  %v4201 = vmax.f32 %v4137, 0.0
  %v4202 = vmax.f32 %v4138, 0.0
  %v4203 = vmax.f32 %v4139, 0.0
  %v4204 = vmax.f32 %v4140, 0.0
  %v4205 = vmax.f32 %v4141, 0.0
  %v4206 = vmax.f32 %v4142, 0.0
  %v4207 = vmax.f32 %v4143, 0.0
  %v4208 = vmax.f32 %v4144, 0.0
  %v4209 = vmax.f32 %v4145, 0.0
  %v4210 = vmax.f32 %v4146, 0.0
  %v4211 = vpack.c.bf16 %v4148, %v4147
  %v4212 = vpack.c.bf16 %v4150, %v4149
  %v4213 = vpack.c.bf16 %v4152, %v4151
  %v4214 = vpack.c.bf16 %v4154, %v4153
  %v4215 = vpack.c.bf16 %v4156, %v4155
  %v4216 = vpack.c.bf16 %v4158, %v4157
  %v4217 = vpack.c.bf16 %v4160, %v4159
  %v4218 = vpack.c.bf16 %v4162, %v4161
  %v4219 = vpack.c.bf16 %v4164, %v4163
  %v4220 = vpack.c.bf16 %v4166, %v4165
  %v4221 = vpack.c.bf16 %v4168, %v4167
  %v4222 = vpack.c.bf16 %v4170, %v4169
  %v4223 = vpack.c.bf16 %v4172, %v4171
  %v4224 = vpack.c.bf16 %v4174, %v4173
  %v4225 = vpack.c.bf16 %v4176, %v4175
  %v4226 = vpack.c.bf16 %v4178, %v4177
  %v4227 = vpack.c.bf16 %v4180, %v4179
  %v4228 = vpack.c.bf16 %v4182, %v4181
  %v4229 = vpack.c.bf16 %v4184, %v4183
  %v4230 = vpack.c.bf16 %v4186, %v4185
  %v4231 = vpack.c.bf16 %v4188, %v4187
  %v4232 = vpack.c.bf16 %v4190, %v4189
  %v4233 = vpack.c.bf16 %v4192, %v4191
  %v4234 = vpack.c.bf16 %v4194, %v4193
  %v4235 = vpack.c.bf16 %v4196, %v4195
  %v4236 = vpack.c.bf16 %v4198, %v4197
  %v4237 = vpack.c.bf16 %v4200, %v4199
  %v4238 = vpack.c.bf16 %v4202, %v4201
  %v4239 = vpack.c.bf16 %v4204, %v4203
  %v4240 = vpack.c.bf16 %v4206, %v4205
  %v4241 = vpack.c.bf16 %v4208, %v4207
  %v4242 = vpack.c.bf16 %v4210, %v4209
  %v4243 = vld [vmem:[%s7] sm:$0xf]
  %v4244 = vld [vmem:[%s7 + $0x4] sm:$0xf]
  %v4247 = vunpack.c.l.b16 %v4243
  %v4248 = vunpack.c.l.b16 %v4244
  %v4249 = vpack.c.b16 %v4248, %v4247
  %v4252 = vsel %vm536, %v4211, 0
  %v4255 = vsel %vm536, %v4212, 0
  %v4258 = vsel %vm536, %v4213, 0
  %v4261 = vsel %vm536, %v4214, 0
  %v4264 = vsel %vm536, %v4215, 0
  %v4267 = vsel %vm536, %v4216, 0
  %v4270 = vsel %vm536, %v4217, 0
  %v4273 = vsel %vm536, %v4218, 0
  %v4276 = vsel %vm536, %v4219, 0
  %v4279 = vsel %vm536, %v4220, 0
  %v4282 = vsel %vm536, %v4221, 0
  %v4285 = vsel %vm536, %v4222, 0
  %v4288 = vsel %vm536, %v4223, 0
  %v4291 = vsel %vm536, %v4224, 0
  %v4294 = vsel %vm536, %v4225, 0
  %v4297 = vsel %vm536, %v4226, 0
  %v4300 = vsel %vm536, %v4227, 0
  %v4303 = vsel %vm536, %v4228, 0
  %v4306 = vsel %vm536, %v4229, 0
  %v4309 = vsel %vm536, %v4230, 0
  %v4312 = vsel %vm536, %v4231, 0
  %v4315 = vsel %vm536, %v4232, 0
  %v4318 = vsel %vm536, %v4233, 0
  %v4321 = vsel %vm536, %v4234, 0
  %v4324 = vsel %vm536, %v4235, 0
  %v4327 = vsel %vm536, %v4236, 0
  %v4330 = vsel %vm536, %v4237, 0
  %v4333 = vsel %vm536, %v4238, 0
  %v4336 = vsel %vm536, %v4239, 0
  %v4339 = vsel %vm536, %v4240, 0
  %v4342 = vsel %vm536, %v4241, 0
  %v4345 = vsel %vm536, %v4242, 0
  %4347 = vmatprep.subr.bf16.mxu0 0
  %4348 = vmatpush1.bf16.msra.mxu0 0
  %4349 = vmatprep.subr.bf16.mxu0 0
  %4350 = vmatpush1.bf16.msra.mxu0 0
  %4351 = vmatprep.subr.bf16.mxu0 0
  %4352 = vmatpush1.bf16.msra.mxu0 0
  %4353 = vmatprep.subr.bf16.mxu0 0
  %4354 = vmatpush1.bf16.msra.mxu0 0
  %4355 = vmatprep.subr.bf16.mxu0 0
  %4356 = vmatpush1.bf16.msra.mxu0 0
  %4357 = vmatprep.subr.bf16.mxu0 0
  %4358 = vmatpush1.bf16.msra.mxu0 0
  %4359 = vmatprep.subr.bf16.mxu0 0
  %4360 = vmatpush1.bf16.msra.mxu0 0
  %4361 = vmatprep.subr.bf16.mxu0 0
  %4362 = vmatpush1.bf16.msra.mxu0 %v4249
  %4363 = vmatprep.subr.bf16.mxu0 0
  %4364 = vmatpush2.bf16.msra.mxu0 0
  %4365 = vmatprep.subr.bf16.mxu0 0
  %4366 = vmatpush2.bf16.msra.mxu0 0
  %4367 = vmatprep.subr.bf16.mxu0 0
  %4368 = vmatpush2.bf16.msra.mxu0 0
  %4369 = vmatprep.subr.bf16.mxu0 0
  %4370 = vmatpush2.bf16.msra.mxu0 0
  %4371 = vmatprep.subr.bf16.mxu0 0
  %4372 = vmatpush2.bf16.msra.mxu0 0
  %4373 = vmatprep.subr.bf16.mxu0 0
  %4374 = vmatpush2.bf16.msra.mxu0 0
  %4375 = vmatprep.subr.bf16.mxu0 0
  %4376 = vmatpush2.bf16.msra.mxu0 0
  %4377 = vmatprep.subr.bf16.mxu0 0
  %4378 = vmatpush2.bf16.msra.mxu0 0
  %4379 = vmatprep.mubr.bf16.mxu0 0
  %4380 = vmatmul.mubr.bf16.gmra.mxu0 %v4252
  %v4381 = vpop.f32.mrf.mxu0
  %v4382 = vadd.f32 0.0, %v4381
  %v4383 = vpop.f32.mrf.mxu0
  %v4384 = vpop.f32.mrf.mxu0
  %v4385 = vadd.f32 0.0, %v4384
  %v4386 = vpop.f32.mrf.mxu0
  %4387 = vmatprep.mubr.bf16.mxu0 0
  %4388 = vmatmul.mubr.bf16.gmra.mxu0 %v4255
  %v4389 = vpop.f32.mrf.mxu0
  %v4390 = vadd.f32 0.0, %v4389
  %v4391 = vpop.f32.mrf.mxu0
  %v4392 = vpop.f32.mrf.mxu0
  %v4393 = vadd.f32 0.0, %v4392
  %v4394 = vpop.f32.mrf.mxu0
  %4395 = vmatprep.mubr.bf16.mxu0 0
  %4396 = vmatmul.mubr.bf16.gmra.mxu0 %v4258
  %v4397 = vpop.f32.mrf.mxu0
  %v4398 = vadd.f32 0.0, %v4397
  %v4399 = vpop.f32.mrf.mxu0
  %v4400 = vpop.f32.mrf.mxu0
  %v4401 = vadd.f32 0.0, %v4400
  %v4402 = vpop.f32.mrf.mxu0
  %4403 = vmatprep.mubr.bf16.mxu0 0
  %4404 = vmatmul.mubr.bf16.gmra.mxu0 %v4261
  %v4405 = vpop.f32.mrf.mxu0
  %v4406 = vadd.f32 0.0, %v4405
  %v4407 = vpop.f32.mrf.mxu0
  %v4408 = vpop.f32.mrf.mxu0
  %v4409 = vadd.f32 0.0, %v4408
  %v4410 = vpop.f32.mrf.mxu0
  %4411 = vmatprep.mubr.bf16.mxu0 0
  %4412 = vmatmul.mubr.bf16.gmra.mxu0 %v4264
  %v4413 = vpop.f32.mrf.mxu0
  %v4414 = vadd.f32 0.0, %v4413
  %v4415 = vpop.f32.mrf.mxu0
  %v4416 = vpop.f32.mrf.mxu0
  %v4417 = vadd.f32 0.0, %v4416
  %v4418 = vpop.f32.mrf.mxu0
  %4419 = vmatprep.mubr.bf16.mxu0 0
  %4420 = vmatmul.mubr.bf16.gmra.mxu0 %v4267
  %v4421 = vpop.f32.mrf.mxu0
  %v4422 = vadd.f32 0.0, %v4421
  %v4423 = vpop.f32.mrf.mxu0
  %v4424 = vpop.f32.mrf.mxu0
  %v4425 = vadd.f32 0.0, %v4424
  %v4426 = vpop.f32.mrf.mxu0
  %4427 = vmatprep.mubr.bf16.mxu0 0
  %4428 = vmatmul.mubr.bf16.gmra.mxu0 %v4270
  %v4429 = vpop.f32.mrf.mxu0
  %v4430 = vadd.f32 0.0, %v4429
  %v4431 = vpop.f32.mrf.mxu0
  %v4432 = vpop.f32.mrf.mxu0
  %v4433 = vadd.f32 0.0, %v4432
  %v4434 = vpop.f32.mrf.mxu0
  %4435 = vmatprep.mubr.bf16.mxu0 0
  %4436 = vmatmul.mubr.bf16.gmra.mxu0 %v4273
  %v4437 = vpop.f32.mrf.mxu0
  %v4438 = vadd.f32 0.0, %v4437
  %v4439 = vpop.f32.mrf.mxu0
  %v4440 = vpop.f32.mrf.mxu0
  %v4441 = vadd.f32 0.0, %v4440
  %v4442 = vpop.f32.mrf.mxu0
  %4443 = vmatprep.mubr.bf16.mxu0 0
  %4444 = vmatmul.mubr.bf16.gmra.mxu0 %v4276
  %v4445 = vpop.f32.mrf.mxu0
  %v4446 = vadd.f32 0.0, %v4445
  %v4447 = vpop.f32.mrf.mxu0
  %v4448 = vpop.f32.mrf.mxu0
  %v4449 = vadd.f32 0.0, %v4448
  %v4450 = vpop.f32.mrf.mxu0
  %4451 = vmatprep.mubr.bf16.mxu0 0
  %4452 = vmatmul.mubr.bf16.gmra.mxu0 %v4279
  %v4453 = vpop.f32.mrf.mxu0
  %v4454 = vadd.f32 0.0, %v4453
  %v4455 = vpop.f32.mrf.mxu0
  %v4456 = vpop.f32.mrf.mxu0
  %v4457 = vadd.f32 0.0, %v4456
  %v4458 = vpop.f32.mrf.mxu0
  %4459 = vmatprep.mubr.bf16.mxu0 0
  %4460 = vmatmul.mubr.bf16.gmra.mxu0 %v4282
  %v4461 = vpop.f32.mrf.mxu0
  %v4462 = vadd.f32 0.0, %v4461
  %v4463 = vpop.f32.mrf.mxu0
  %v4464 = vpop.f32.mrf.mxu0
  %v4465 = vadd.f32 0.0, %v4464
  %v4466 = vpop.f32.mrf.mxu0
  %4467 = vmatprep.mubr.bf16.mxu0 0
  %4468 = vmatmul.mubr.bf16.gmra.mxu0 %v4285
  %v4469 = vpop.f32.mrf.mxu0
  %v4470 = vadd.f32 0.0, %v4469
  %v4471 = vpop.f32.mrf.mxu0
  %v4472 = vpop.f32.mrf.mxu0
  %v4473 = vadd.f32 0.0, %v4472
  %v4474 = vpop.f32.mrf.mxu0
  %4475 = vmatprep.mubr.bf16.mxu0 0
  %4476 = vmatmul.mubr.bf16.gmra.mxu0 %v4288
  %v4477 = vpop.f32.mrf.mxu0
  %v4478 = vadd.f32 0.0, %v4477
  %v4479 = vpop.f32.mrf.mxu0
  %v4480 = vpop.f32.mrf.mxu0
  %v4481 = vadd.f32 0.0, %v4480
  %v4482 = vpop.f32.mrf.mxu0
  %4483 = vmatprep.mubr.bf16.mxu0 0
  %4484 = vmatmul.mubr.bf16.gmra.mxu0 %v4291
  %v4485 = vpop.f32.mrf.mxu0
  %v4486 = vadd.f32 0.0, %v4485
  %v4487 = vpop.f32.mrf.mxu0
  %v4488 = vpop.f32.mrf.mxu0
  %v4489 = vadd.f32 0.0, %v4488
  %v4490 = vpop.f32.mrf.mxu0
  %4491 = vmatprep.mubr.bf16.mxu0 0
  %4492 = vmatmul.mubr.bf16.gmra.mxu0 %v4294
  %v4493 = vpop.f32.mrf.mxu0
  %v4494 = vadd.f32 0.0, %v4493
  %v4495 = vpop.f32.mrf.mxu0
  %v4496 = vpop.f32.mrf.mxu0
  %v4497 = vadd.f32 0.0, %v4496
  %v4498 = vpop.f32.mrf.mxu0
  %4499 = vmatprep.mubr.bf16.mxu0 0
  %4500 = vmatmul.mubr.bf16.gmra.mxu0 %v4297
  %v4501 = vpop.f32.mrf.mxu0
  %v4502 = vadd.f32 0.0, %v4501
  %v4503 = vpop.f32.mrf.mxu0
  %v4504 = vpop.f32.mrf.mxu0
  %v4505 = vadd.f32 0.0, %v4504
  %v4506 = vpop.f32.mrf.mxu0
  %4507 = vmatprep.mubr.bf16.mxu0 0
  %4508 = vmatmul.mubr.bf16.gmra.mxu0 %v4300
  %v4509 = vpop.f32.mrf.mxu0
  %v4510 = vadd.f32 0.0, %v4509
  %v4511 = vpop.f32.mrf.mxu0
  %v4512 = vpop.f32.mrf.mxu0
  %v4513 = vadd.f32 0.0, %v4512
  %v4514 = vpop.f32.mrf.mxu0
  %4515 = vmatprep.mubr.bf16.mxu0 0
  %4516 = vmatmul.mubr.bf16.gmra.mxu0 %v4303
  %v4517 = vpop.f32.mrf.mxu0
  %v4518 = vadd.f32 0.0, %v4517
  %v4519 = vpop.f32.mrf.mxu0
  %v4520 = vpop.f32.mrf.mxu0
  %v4521 = vadd.f32 0.0, %v4520
  %v4522 = vpop.f32.mrf.mxu0
  %4523 = vmatprep.mubr.bf16.mxu0 0
  %4524 = vmatmul.mubr.bf16.gmra.mxu0 %v4306
  %v4525 = vpop.f32.mrf.mxu0
  %v4526 = vadd.f32 0.0, %v4525
  %v4527 = vpop.f32.mrf.mxu0
  %v4528 = vpop.f32.mrf.mxu0
  %v4529 = vadd.f32 0.0, %v4528
  %v4530 = vpop.f32.mrf.mxu0
  %4531 = vmatprep.mubr.bf16.mxu0 0
  %4532 = vmatmul.mubr.bf16.gmra.mxu0 %v4309
  %v4533 = vpop.f32.mrf.mxu0
  %v4534 = vadd.f32 0.0, %v4533
  %v4535 = vpop.f32.mrf.mxu0
  %v4536 = vpop.f32.mrf.mxu0
  %v4537 = vadd.f32 0.0, %v4536
  %v4538 = vpop.f32.mrf.mxu0
  %4539 = vmatprep.mubr.bf16.mxu0 0
  %4540 = vmatmul.mubr.bf16.gmra.mxu0 %v4312
  %v4541 = vpop.f32.mrf.mxu0
  %v4542 = vadd.f32 0.0, %v4541
  %v4543 = vpop.f32.mrf.mxu0
  %v4544 = vpop.f32.mrf.mxu0
  %v4545 = vadd.f32 0.0, %v4544
  %v4546 = vpop.f32.mrf.mxu0
  %4547 = vmatprep.mubr.bf16.mxu0 0
  %4548 = vmatmul.mubr.bf16.gmra.mxu0 %v4315
  %v4549 = vpop.f32.mrf.mxu0
  %v4550 = vadd.f32 0.0, %v4549
  %v4551 = vpop.f32.mrf.mxu0
  %v4552 = vpop.f32.mrf.mxu0
  %v4553 = vadd.f32 0.0, %v4552
  %v4554 = vpop.f32.mrf.mxu0
  %4555 = vmatprep.mubr.bf16.mxu0 0
  %4556 = vmatmul.mubr.bf16.gmra.mxu0 %v4318
  %v4557 = vpop.f32.mrf.mxu0
  %v4558 = vadd.f32 0.0, %v4557
  %v4559 = vpop.f32.mrf.mxu0
  %v4560 = vpop.f32.mrf.mxu0
  %v4561 = vadd.f32 0.0, %v4560
  %v4562 = vpop.f32.mrf.mxu0
  %4563 = vmatprep.mubr.bf16.mxu0 0
  %4564 = vmatmul.mubr.bf16.gmra.mxu0 %v4321
  %v4565 = vpop.f32.mrf.mxu0
  %v4566 = vadd.f32 0.0, %v4565
  %v4567 = vpop.f32.mrf.mxu0
  %v4568 = vpop.f32.mrf.mxu0
  %v4569 = vadd.f32 0.0, %v4568
  %v4570 = vpop.f32.mrf.mxu0
  %4571 = vmatprep.mubr.bf16.mxu0 0
  %4572 = vmatmul.mubr.bf16.gmra.mxu0 %v4324
  %v4573 = vpop.f32.mrf.mxu0
  %v4574 = vadd.f32 0.0, %v4573
  %v4575 = vpop.f32.mrf.mxu0
  %v4576 = vpop.f32.mrf.mxu0
  %v4577 = vadd.f32 0.0, %v4576
  %v4578 = vpop.f32.mrf.mxu0
  %4579 = vmatprep.mubr.bf16.mxu0 0
  %4580 = vmatmul.mubr.bf16.gmra.mxu0 %v4327
  %v4581 = vpop.f32.mrf.mxu0
  %v4582 = vadd.f32 0.0, %v4581
  %v4583 = vpop.f32.mrf.mxu0
  %v4584 = vpop.f32.mrf.mxu0
  %v4585 = vadd.f32 0.0, %v4584
  %v4586 = vpop.f32.mrf.mxu0
  %4587 = vmatprep.mubr.bf16.mxu0 0
  %4588 = vmatmul.mubr.bf16.gmra.mxu0 %v4330
  %v4589 = vpop.f32.mrf.mxu0
  %v4590 = vadd.f32 0.0, %v4589
  %v4591 = vpop.f32.mrf.mxu0
  %v4592 = vpop.f32.mrf.mxu0
  %v4593 = vadd.f32 0.0, %v4592
  %v4594 = vpop.f32.mrf.mxu0
  %4595 = vmatprep.mubr.bf16.mxu0 0
  %4596 = vmatmul.mubr.bf16.gmra.mxu0 %v4333
  %v4597 = vpop.f32.mrf.mxu0
  %v4598 = vadd.f32 0.0, %v4597
  %v4599 = vpop.f32.mrf.mxu0
  %v4600 = vpop.f32.mrf.mxu0
  %v4601 = vadd.f32 0.0, %v4600
  %v4602 = vpop.f32.mrf.mxu0
  %4603 = vmatprep.mubr.bf16.mxu0 0
  %4604 = vmatmul.mubr.bf16.gmra.mxu0 %v4336
  %v4605 = vpop.f32.mrf.mxu0
  %v4606 = vadd.f32 0.0, %v4605
  %v4607 = vpop.f32.mrf.mxu0
  %v4608 = vpop.f32.mrf.mxu0
  %v4609 = vadd.f32 0.0, %v4608
  %v4610 = vpop.f32.mrf.mxu0
  %4611 = vmatprep.mubr.bf16.mxu0 0
  %4612 = vmatmul.mubr.bf16.gmra.mxu0 %v4339
  %v4613 = vpop.f32.mrf.mxu0
  %v4614 = vadd.f32 0.0, %v4613
  %v4615 = vpop.f32.mrf.mxu0
  %v4616 = vpop.f32.mrf.mxu0
  %v4617 = vadd.f32 0.0, %v4616
  %v4618 = vpop.f32.mrf.mxu0
  %4619 = vmatprep.mubr.bf16.mxu0 0
  %4620 = vmatmul.mubr.bf16.gmra.mxu0 %v4342
  %v4621 = vpop.f32.mrf.mxu0
  %v4622 = vadd.f32 0.0, %v4621
  %v4623 = vpop.f32.mrf.mxu0
  %v4624 = vpop.f32.mrf.mxu0
  %v4625 = vadd.f32 0.0, %v4624
  %v4626 = vpop.f32.mrf.mxu0
  %4627 = vmatprep.mubr.bf16.mxu0 0
  %4628 = vmatmul.mubr.bf16.gmra.mxu0 %v4345
  %v4629 = vpop.f32.mrf.mxu0
  %v4630 = vadd.f32 0.0, %v4629
  %v4631 = vpop.f32.mrf.mxu0
  %v4632 = vpop.f32.mrf.mxu0
  %v4633 = vadd.f32 0.0, %v4632
  %v4634 = vpop.f32.mrf.mxu0
  %4635 = vdwg.mxu0
  %v4636 = vld [vmem:[%s8] sm:$0x1]
  %v4637 = vld [vmem:[%s9] sm:$0x1]
  %v4638 = vsel %vm148, %v4382, 0.0
  %v4639 = vsel %vm148, %v4385, 0.0
  %v4640 = vadd.f32 %v4638, %v4639
  %v4641 = vsel %vm148, %v4390, 0.0
  %v4642 = vadd.f32 %v4640, %v4641
  %v4643 = vsel %vm148, %v4393, 0.0
  %v4644 = vadd.f32 %v4642, %v4643
  %v4645 = vsel %vm148, %v4398, 0.0
  %v4646 = vadd.f32 %v4644, %v4645
  %v4647 = vsel %vm148, %v4401, 0.0
  %v4648 = vadd.f32 %v4646, %v4647
  %v4649 = vsel %vm148, %v4406, 0.0
  %v4650 = vadd.f32 %v4648, %v4649
  %v4651 = vsel %vm148, %v4409, 0.0
  %v4652 = vadd.f32 %v4650, %v4651
  %v4653 = vsel %vm148, %v4414, 0.0
  %v4654 = vadd.f32 %v4652, %v4653
  %v4655 = vsel %vm148, %v4417, 0.0
  %v4656 = vadd.f32 %v4654, %v4655
  %v4657 = vsel %vm148, %v4422, 0.0
  %v4658 = vadd.f32 %v4656, %v4657
  %v4659 = vsel %vm148, %v4425, 0.0
  %v4660 = vadd.f32 %v4658, %v4659
  %v4661 = vsel %vm148, %v4430, 0.0
  %v4662 = vadd.f32 %v4660, %v4661
  %v4663 = vsel %vm148, %v4433, 0.0
  %v4664 = vadd.f32 %v4662, %v4663
  %v4665 = vsel %vm148, %v4438, 0.0
  %v4666 = vadd.f32 %v4664, %v4665
  %v4667 = vsel %vm148, %v4441, 0.0
  %v4668 = vadd.f32 %v4666, %v4667
  %v4669 = vsel %vm148, %v4446, 0.0
  %v4670 = vadd.f32 %v4668, %v4669
  %v4671 = vsel %vm148, %v4449, 0.0
  %v4672 = vadd.f32 %v4670, %v4671
  %v4673 = vsel %vm148, %v4454, 0.0
  %v4674 = vadd.f32 %v4672, %v4673
  %v4675 = vsel %vm148, %v4457, 0.0
  %v4676 = vadd.f32 %v4674, %v4675
  %v4677 = vsel %vm148, %v4462, 0.0
  %v4678 = vadd.f32 %v4676, %v4677
  %v4679 = vsel %vm148, %v4465, 0.0
  %v4680 = vadd.f32 %v4678, %v4679
  %v4681 = vsel %vm148, %v4470, 0.0
  %v4682 = vadd.f32 %v4680, %v4681
  %v4683 = vsel %vm148, %v4473, 0.0
  %v4684 = vadd.f32 %v4682, %v4683
  %v4685 = vsel %vm148, %v4478, 0.0
  %v4686 = vadd.f32 %v4684, %v4685
  %v4687 = vsel %vm148, %v4481, 0.0
  %v4688 = vadd.f32 %v4686, %v4687
  %v4689 = vsel %vm148, %v4486, 0.0
  %v4690 = vadd.f32 %v4688, %v4689
  %v4691 = vsel %vm148, %v4489, 0.0
  %v4692 = vadd.f32 %v4690, %v4691
  %v4693 = vsel %vm148, %v4494, 0.0
  %v4694 = vadd.f32 %v4692, %v4693
  %v4695 = vsel %vm148, %v4497, 0.0
  %v4696 = vadd.f32 %v4694, %v4695
  %v4697 = vsel %vm148, %v4502, 0.0
  %v4698 = vadd.f32 %v4696, %v4697
  %v4699 = vsel %vm148, %v4505, 0.0
  %v4700 = vadd.f32 %v4698, %v4699
  %v4701 = vsel %vm148, %v4510, 0.0
  %v4702 = vadd.f32 %v4700, %v4701
  %v4703 = vsel %vm148, %v4513, 0.0
  %v4704 = vadd.f32 %v4702, %v4703
  %v4705 = vsel %vm148, %v4518, 0.0
  %v4706 = vadd.f32 %v4704, %v4705
  %v4707 = vsel %vm148, %v4521, 0.0
  %v4708 = vadd.f32 %v4706, %v4707
  %v4709 = vsel %vm148, %v4526, 0.0
  %v4710 = vadd.f32 %v4708, %v4709
  %v4711 = vsel %vm148, %v4529, 0.0
  %v4712 = vadd.f32 %v4710, %v4711
  %v4713 = vsel %vm148, %v4534, 0.0
  %v4714 = vadd.f32 %v4712, %v4713
  %v4715 = vsel %vm148, %v4537, 0.0
  %v4716 = vadd.f32 %v4714, %v4715
  %v4717 = vsel %vm148, %v4542, 0.0
  %v4718 = vadd.f32 %v4716, %v4717
  %v4719 = vsel %vm148, %v4545, 0.0
  %v4720 = vadd.f32 %v4718, %v4719
  %v4721 = vsel %vm148, %v4550, 0.0
  %v4722 = vadd.f32 %v4720, %v4721
  %v4723 = vsel %vm148, %v4553, 0.0
  %v4724 = vadd.f32 %v4722, %v4723
  %v4725 = vsel %vm148, %v4558, 0.0
  %v4726 = vadd.f32 %v4724, %v4725
  %v4727 = vsel %vm148, %v4561, 0.0
  %v4728 = vadd.f32 %v4726, %v4727
  %v4729 = vsel %vm148, %v4566, 0.0
  %v4730 = vadd.f32 %v4728, %v4729
  %v4731 = vsel %vm148, %v4569, 0.0
  %v4732 = vadd.f32 %v4730, %v4731
  %v4733 = vsel %vm148, %v4574, 0.0
  %v4734 = vadd.f32 %v4732, %v4733
  %v4735 = vsel %vm148, %v4577, 0.0
  %v4736 = vadd.f32 %v4734, %v4735
  %v4737 = vsel %vm148, %v4582, 0.0
  %v4738 = vadd.f32 %v4736, %v4737
  %v4739 = vsel %vm148, %v4585, 0.0
  %v4740 = vadd.f32 %v4738, %v4739
  %v4741 = vsel %vm148, %v4590, 0.0
  %v4742 = vadd.f32 %v4740, %v4741
  %v4743 = vsel %vm148, %v4593, 0.0
  %v4744 = vadd.f32 %v4742, %v4743
  %v4745 = vsel %vm148, %v4598, 0.0
  %v4746 = vadd.f32 %v4744, %v4745
  %v4747 = vsel %vm148, %v4601, 0.0
  %v4748 = vadd.f32 %v4746, %v4747
  %v4749 = vsel %vm148, %v4606, 0.0
  %v4750 = vadd.f32 %v4748, %v4749
  %v4751 = vsel %vm148, %v4609, 0.0
  %v4752 = vadd.f32 %v4750, %v4751
  %v4753 = vsel %vm148, %v4614, 0.0
  %v4754 = vadd.f32 %v4752, %v4753
  %v4755 = vsel %vm148, %v4617, 0.0
  %v4756 = vadd.f32 %v4754, %v4755
  %v4757 = vsel %vm148, %v4622, 0.0
  %v4758 = vadd.f32 %v4756, %v4757
  %v4759 = vsel %vm148, %v4625, 0.0
  %v4760 = vadd.f32 %v4758, %v4759
  %v4761 = vsel %vm148, %v4630, 0.0
  %v4762 = vadd.f32 %v4760, %v4761
  %v4763 = vsel %vm148, %v4633, 0.0
  %v4764 = vadd.f32 %v4762, %v4763
  %v4765 = vrot.slane %v4764, 4
  %v4766 = vadd.f32 %v4764, %v4765
  %v4767 = vrot.slane %v4766, 2
  %v4768 = vadd.f32 %v4766, %v4767
  %v4769 = vrot.slane %v4768, 1
  %v4770 = vadd.f32 %v4768, %v4769
  %v4771 = vmul.f32 %v4382, %v4382
  %v4772 = vmul.f32 %v4385, %v4385
  %v4773 = vmul.f32 %v4390, %v4390
  %v4774 = vmul.f32 %v4393, %v4393
  %v4775 = vmul.f32 %v4398, %v4398
  %v4776 = vmul.f32 %v4401, %v4401
  %v4777 = vmul.f32 %v4406, %v4406
  %v4778 = vmul.f32 %v4409, %v4409
  %v4779 = vmul.f32 %v4414, %v4414
  %v4780 = vmul.f32 %v4417, %v4417
  %v4781 = vmul.f32 %v4422, %v4422
  %v4782 = vmul.f32 %v4425, %v4425
  %v4783 = vmul.f32 %v4430, %v4430
  %v4784 = vmul.f32 %v4433, %v4433
  %v4785 = vmul.f32 %v4438, %v4438
  %v4786 = vmul.f32 %v4441, %v4441
  %v4787 = vmul.f32 %v4446, %v4446
  %v4788 = vmul.f32 %v4449, %v4449
  %v4789 = vmul.f32 %v4454, %v4454
  %v4790 = vmul.f32 %v4457, %v4457
  %v4791 = vmul.f32 %v4462, %v4462
  %v4792 = vmul.f32 %v4465, %v4465
  %v4793 = vmul.f32 %v4470, %v4470
  %v4794 = vmul.f32 %v4473, %v4473
  %v4795 = vmul.f32 %v4478, %v4478
  %v4796 = vmul.f32 %v4481, %v4481
  %v4797 = vmul.f32 %v4486, %v4486
  %v4798 = vmul.f32 %v4489, %v4489
  %v4799 = vmul.f32 %v4494, %v4494
  %v4800 = vmul.f32 %v4497, %v4497
  %v4801 = vmul.f32 %v4502, %v4502
  %v4802 = vmul.f32 %v4505, %v4505
  %v4803 = vmul.f32 %v4510, %v4510
  %v4804 = vmul.f32 %v4513, %v4513
  %v4805 = vmul.f32 %v4518, %v4518
  %v4806 = vmul.f32 %v4521, %v4521
  %v4807 = vmul.f32 %v4526, %v4526
  %v4808 = vmul.f32 %v4529, %v4529
  %v4809 = vmul.f32 %v4534, %v4534
  %v4810 = vmul.f32 %v4537, %v4537
  %v4811 = vmul.f32 %v4542, %v4542
  %v4812 = vmul.f32 %v4545, %v4545
  %v4813 = vmul.f32 %v4550, %v4550
  %v4814 = vmul.f32 %v4553, %v4553
  %v4815 = vmul.f32 %v4558, %v4558
  %v4816 = vmul.f32 %v4561, %v4561
  %v4817 = vmul.f32 %v4566, %v4566
  %v4818 = vmul.f32 %v4569, %v4569
  %v4819 = vmul.f32 %v4574, %v4574
  %v4820 = vmul.f32 %v4577, %v4577
  %v4821 = vmul.f32 %v4582, %v4582
  %v4822 = vmul.f32 %v4585, %v4585
  %v4823 = vmul.f32 %v4590, %v4590
  %v4824 = vmul.f32 %v4593, %v4593
  %v4825 = vmul.f32 %v4598, %v4598
  %v4826 = vmul.f32 %v4601, %v4601
  %v4827 = vmul.f32 %v4606, %v4606
  %v4828 = vmul.f32 %v4609, %v4609
  %v4829 = vmul.f32 %v4614, %v4614
  %v4830 = vmul.f32 %v4617, %v4617
  %v4831 = vmul.f32 %v4622, %v4622
  %v4832 = vmul.f32 %v4625, %v4625
  %v4833 = vmul.f32 %v4630, %v4630
  %v4834 = vmul.f32 %v4633, %v4633
  %v4835 = vsel %vm148, %v4771, 0.0
  %v4836 = vsel %vm148, %v4772, 0.0
  %v4837 = vadd.f32 %v4835, %v4836
  %v4838 = vsel %vm148, %v4773, 0.0
  %v4839 = vadd.f32 %v4837, %v4838
  %v4840 = vsel %vm148, %v4774, 0.0
  %v4841 = vadd.f32 %v4839, %v4840
  %v4842 = vsel %vm148, %v4775, 0.0
  %v4843 = vadd.f32 %v4841, %v4842
  %v4844 = vsel %vm148, %v4776, 0.0
  %v4845 = vadd.f32 %v4843, %v4844
  %v4846 = vsel %vm148, %v4777, 0.0
  %v4847 = vadd.f32 %v4845, %v4846
  %v4848 = vsel %vm148, %v4778, 0.0
  %v4849 = vadd.f32 %v4847, %v4848
  %v4850 = vsel %vm148, %v4779, 0.0
  %v4851 = vadd.f32 %v4849, %v4850
  %v4852 = vsel %vm148, %v4780, 0.0
  %v4853 = vadd.f32 %v4851, %v4852
  %v4854 = vsel %vm148, %v4781, 0.0
  %v4855 = vadd.f32 %v4853, %v4854
  %v4856 = vsel %vm148, %v4782, 0.0
  %v4857 = vadd.f32 %v4855, %v4856
  %v4858 = vsel %vm148, %v4783, 0.0
  %v4859 = vadd.f32 %v4857, %v4858
  %v4860 = vsel %vm148, %v4784, 0.0
  %v4861 = vadd.f32 %v4859, %v4860
  %v4862 = vsel %vm148, %v4785, 0.0
  %v4863 = vadd.f32 %v4861, %v4862
  %v4864 = vsel %vm148, %v4786, 0.0
  %v4865 = vadd.f32 %v4863, %v4864
  %v4866 = vsel %vm148, %v4787, 0.0
  %v4867 = vadd.f32 %v4865, %v4866
  %v4868 = vsel %vm148, %v4788, 0.0
  %v4869 = vadd.f32 %v4867, %v4868
  %v4870 = vsel %vm148, %v4789, 0.0
  %v4871 = vadd.f32 %v4869, %v4870
  %v4872 = vsel %vm148, %v4790, 0.0
  %v4873 = vadd.f32 %v4871, %v4872
  %v4874 = vsel %vm148, %v4791, 0.0
  %v4875 = vadd.f32 %v4873, %v4874
  %v4876 = vsel %vm148, %v4792, 0.0
  %v4877 = vadd.f32 %v4875, %v4876
  %v4878 = vsel %vm148, %v4793, 0.0
  %v4879 = vadd.f32 %v4877, %v4878
  %v4880 = vsel %vm148, %v4794, 0.0
  %v4881 = vadd.f32 %v4879, %v4880
  %v4882 = vsel %vm148, %v4795, 0.0
  %v4883 = vadd.f32 %v4881, %v4882
  %v4884 = vsel %vm148, %v4796, 0.0
  %v4885 = vadd.f32 %v4883, %v4884
  %v4886 = vsel %vm148, %v4797, 0.0
  %v4887 = vadd.f32 %v4885, %v4886
  %v4888 = vsel %vm148, %v4798, 0.0
  %v4889 = vadd.f32 %v4887, %v4888
  %v4890 = vsel %vm148, %v4799, 0.0
  %v4891 = vadd.f32 %v4889, %v4890
  %v4892 = vsel %vm148, %v4800, 0.0
  %v4893 = vadd.f32 %v4891, %v4892
  %v4894 = vsel %vm148, %v4801, 0.0
  %v4895 = vadd.f32 %v4893, %v4894
  %v4896 = vsel %vm148, %v4802, 0.0
  %v4897 = vadd.f32 %v4895, %v4896
  %v4898 = vsel %vm148, %v4803, 0.0
  %v4899 = vadd.f32 %v4897, %v4898
  %v4900 = vsel %vm148, %v4804, 0.0
  %v4901 = vadd.f32 %v4899, %v4900
  %v4902 = vsel %vm148, %v4805, 0.0
  %v4903 = vadd.f32 %v4901, %v4902
  %v4904 = vsel %vm148, %v4806, 0.0
  %v4905 = vadd.f32 %v4903, %v4904
  %v4906 = vsel %vm148, %v4807, 0.0
  %v4907 = vadd.f32 %v4905, %v4906
  %v4908 = vsel %vm148, %v4808, 0.0
  %v4909 = vadd.f32 %v4907, %v4908
  %v4910 = vsel %vm148, %v4809, 0.0
  %v4911 = vadd.f32 %v4909, %v4910
  %v4912 = vsel %vm148, %v4810, 0.0
  %v4913 = vadd.f32 %v4911, %v4912
  %v4914 = vsel %vm148, %v4811, 0.0
  %v4915 = vadd.f32 %v4913, %v4914
  %v4916 = vsel %vm148, %v4812, 0.0
  %v4917 = vadd.f32 %v4915, %v4916
  %v4918 = vsel %vm148, %v4813, 0.0
  %v4919 = vadd.f32 %v4917, %v4918
  %v4920 = vsel %vm148, %v4814, 0.0
  %v4921 = vadd.f32 %v4919, %v4920
  %v4922 = vsel %vm148, %v4815, 0.0
  %v4923 = vadd.f32 %v4921, %v4922
  %v4924 = vsel %vm148, %v4816, 0.0
  %v4925 = vadd.f32 %v4923, %v4924
  %v4926 = vsel %vm148, %v4817, 0.0
  %v4927 = vadd.f32 %v4925, %v4926
  %v4928 = vsel %vm148, %v4818, 0.0
  %v4929 = vadd.f32 %v4927, %v4928
  %v4930 = vsel %vm148, %v4819, 0.0
  %v4931 = vadd.f32 %v4929, %v4930
  %v4932 = vsel %vm148, %v4820, 0.0
  %v4933 = vadd.f32 %v4931, %v4932
  %v4934 = vsel %vm148, %v4821, 0.0
  %v4935 = vadd.f32 %v4933, %v4934
  %v4936 = vsel %vm148, %v4822, 0.0
  %v4937 = vadd.f32 %v4935, %v4936
  %v4938 = vsel %vm148, %v4823, 0.0
  %v4939 = vadd.f32 %v4937, %v4938
  %v4940 = vsel %vm148, %v4824, 0.0
  %v4941 = vadd.f32 %v4939, %v4940
  %v4942 = vsel %vm148, %v4825, 0.0
  %v4943 = vadd.f32 %v4941, %v4942
  %v4944 = vsel %vm148, %v4826, 0.0
  %v4945 = vadd.f32 %v4943, %v4944
  %v4946 = vsel %vm148, %v4827, 0.0
  %v4947 = vadd.f32 %v4945, %v4946
  %v4948 = vsel %vm148, %v4828, 0.0
  %v4949 = vadd.f32 %v4947, %v4948
  %v4950 = vsel %vm148, %v4829, 0.0
  %v4951 = vadd.f32 %v4949, %v4950
  %v4952 = vsel %vm148, %v4830, 0.0
  %v4953 = vadd.f32 %v4951, %v4952
  %v4954 = vsel %vm148, %v4831, 0.0
  %v4955 = vadd.f32 %v4953, %v4954
  %v4956 = vsel %vm148, %v4832, 0.0
  %v4957 = vadd.f32 %v4955, %v4956
  %v4958 = vsel %vm148, %v4833, 0.0
  %v4959 = vadd.f32 %v4957, %v4958
  %v4960 = vsel %vm148, %v4834, 0.0
  %v4961 = vadd.f32 %v4959, %v4960
  %v4962 = vrot.slane %v4961, 4
  %v4963 = vadd.f32 %v4961, %v4962
  %v4964 = vrot.slane %v4963, 2
  %v4965 = vadd.f32 %v4963, %v4964
  %v4966 = vrot.slane %v4965, 1
  %v4967 = vadd.f32 %v4965, %v4966
  %v4968 = vmul.f32 %v4770, 0.001953125
  %v4969 = vmul.f32 %v4967, 0.001953125
  %v4970 = vmul.f32 %v4968, %v4968
  %v4971 = vsub.f32 %v4969, %v4970
  %v4972 = vmax.f32 %v4971, 0.0
  %v4973 = vsub.f32 %v4382, %v4968
  %v4974 = vsub.f32 %v4385, %v4968
  %v4975 = vsub.f32 %v4390, %v4968
  %v4976 = vsub.f32 %v4393, %v4968
  %v4977 = vsub.f32 %v4398, %v4968
  %v4978 = vsub.f32 %v4401, %v4968
  %v4979 = vsub.f32 %v4406, %v4968
  %v4980 = vsub.f32 %v4409, %v4968
  %v4981 = vsub.f32 %v4414, %v4968
  %v4982 = vsub.f32 %v4417, %v4968
  %v4983 = vsub.f32 %v4422, %v4968
  %v4984 = vsub.f32 %v4425, %v4968
  %v4985 = vsub.f32 %v4430, %v4968
  %v4986 = vsub.f32 %v4433, %v4968
  %v4987 = vsub.f32 %v4438, %v4968
  %v4988 = vsub.f32 %v4441, %v4968
  %v4989 = vsub.f32 %v4446, %v4968
  %v4990 = vsub.f32 %v4449, %v4968
  %v4991 = vsub.f32 %v4454, %v4968
  %v4992 = vsub.f32 %v4457, %v4968
  %v4993 = vsub.f32 %v4462, %v4968
  %v4994 = vsub.f32 %v4465, %v4968
  %v4995 = vsub.f32 %v4470, %v4968
  %v4996 = vsub.f32 %v4473, %v4968
  %v4997 = vsub.f32 %v4478, %v4968
  %v4998 = vsub.f32 %v4481, %v4968
  %v4999 = vsub.f32 %v4486, %v4968
  %v5000 = vsub.f32 %v4489, %v4968
  %v5001 = vsub.f32 %v4494, %v4968
  %v5002 = vsub.f32 %v4497, %v4968
  %v5003 = vsub.f32 %v4502, %v4968
  %v5004 = vsub.f32 %v4505, %v4968
  %v5005 = vsub.f32 %v4510, %v4968
  %v5006 = vsub.f32 %v4513, %v4968
  %v5007 = vsub.f32 %v4518, %v4968
  %v5008 = vsub.f32 %v4521, %v4968
  %v5009 = vsub.f32 %v4526, %v4968
  %v5010 = vsub.f32 %v4529, %v4968
  %v5011 = vsub.f32 %v4534, %v4968
  %v5012 = vsub.f32 %v4537, %v4968
  %v5013 = vsub.f32 %v4542, %v4968
  %v5014 = vsub.f32 %v4545, %v4968
  %v5015 = vsub.f32 %v4550, %v4968
  %v5016 = vsub.f32 %v4553, %v4968
  %v5017 = vsub.f32 %v4558, %v4968
  %v5018 = vsub.f32 %v4561, %v4968
  %v5019 = vsub.f32 %v4566, %v4968
  %v5020 = vsub.f32 %v4569, %v4968
  %v5021 = vsub.f32 %v4574, %v4968
  %v5022 = vsub.f32 %v4577, %v4968
  %v5023 = vsub.f32 %v4582, %v4968
  %v5024 = vsub.f32 %v4585, %v4968
  %v5025 = vsub.f32 %v4590, %v4968
  %v5026 = vsub.f32 %v4593, %v4968
  %v5027 = vsub.f32 %v4598, %v4968
  %v5028 = vsub.f32 %v4601, %v4968
  %v5029 = vsub.f32 %v4606, %v4968
  %v5030 = vsub.f32 %v4609, %v4968
  %v5031 = vsub.f32 %v4614, %v4968
  %v5032 = vsub.f32 %v4617, %v4968
  %v5033 = vsub.f32 %v4622, %v4968
  %v5034 = vsub.f32 %v4625, %v4968
  %v5035 = vsub.f32 %v4630, %v4968
  %v5036 = vsub.f32 %v4633, %v4968
  %v5037 = vadd.f32 %v4972, 1e-05
  %v5038 = vrsqrt.pop %v5037
  %v5039 = vmul.f32 %v4973, %v5038
  %v5040 = vmul.f32 %v4974, %v5038
  %v5041 = vmul.f32 %v4975, %v5038
  %v5042 = vmul.f32 %v4976, %v5038
  %v5043 = vmul.f32 %v4977, %v5038
  %v5044 = vmul.f32 %v4978, %v5038
  %v5045 = vmul.f32 %v4979, %v5038
  %v5046 = vmul.f32 %v4980, %v5038
  %v5047 = vmul.f32 %v4981, %v5038
  %v5048 = vmul.f32 %v4982, %v5038
  %v5049 = vmul.f32 %v4983, %v5038
  %v5050 = vmul.f32 %v4984, %v5038
  %v5051 = vmul.f32 %v4985, %v5038
  %v5052 = vmul.f32 %v4986, %v5038
  %v5053 = vmul.f32 %v4987, %v5038
  %v5054 = vmul.f32 %v4988, %v5038
  %v5055 = vmul.f32 %v4989, %v5038
  %v5056 = vmul.f32 %v4990, %v5038
  %v5057 = vmul.f32 %v4991, %v5038
  %v5058 = vmul.f32 %v4992, %v5038
  %v5059 = vmul.f32 %v4993, %v5038
  %v5060 = vmul.f32 %v4994, %v5038
  %v5061 = vmul.f32 %v4995, %v5038
  %v5062 = vmul.f32 %v4996, %v5038
  %v5063 = vmul.f32 %v4997, %v5038
  %v5064 = vmul.f32 %v4998, %v5038
  %v5065 = vmul.f32 %v4999, %v5038
  %v5066 = vmul.f32 %v5000, %v5038
  %v5067 = vmul.f32 %v5001, %v5038
  %v5068 = vmul.f32 %v5002, %v5038
  %v5069 = vmul.f32 %v5003, %v5038
  %v5070 = vmul.f32 %v5004, %v5038
  %v5071 = vmul.f32 %v5005, %v5038
  %v5072 = vmul.f32 %v5006, %v5038
  %v5073 = vmul.f32 %v5007, %v5038
  %v5074 = vmul.f32 %v5008, %v5038
  %v5075 = vmul.f32 %v5009, %v5038
  %v5076 = vmul.f32 %v5010, %v5038
  %v5077 = vmul.f32 %v5011, %v5038
  %v5078 = vmul.f32 %v5012, %v5038
  %v5079 = vmul.f32 %v5013, %v5038
  %v5080 = vmul.f32 %v5014, %v5038
  %v5081 = vmul.f32 %v5015, %v5038
  %v5082 = vmul.f32 %v5016, %v5038
  %v5083 = vmul.f32 %v5017, %v5038
  %v5084 = vmul.f32 %v5018, %v5038
  %v5085 = vmul.f32 %v5019, %v5038
  %v5086 = vmul.f32 %v5020, %v5038
  %v5087 = vmul.f32 %v5021, %v5038
  %v5088 = vmul.f32 %v5022, %v5038
  %v5089 = vmul.f32 %v5023, %v5038
  %v5090 = vmul.f32 %v5024, %v5038
  %v5091 = vmul.f32 %v5025, %v5038
  %v5092 = vmul.f32 %v5026, %v5038
  %v5093 = vmul.f32 %v5027, %v5038
  %v5094 = vmul.f32 %v5028, %v5038
  %v5095 = vmul.f32 %v5029, %v5038
  %v5096 = vmul.f32 %v5030, %v5038
  %v5097 = vmul.f32 %v5031, %v5038
  %v5098 = vmul.f32 %v5032, %v5038
  %v5099 = vmul.f32 %v5033, %v5038
  %v5100 = vmul.f32 %v5034, %v5038
  %v5101 = vmul.f32 %v5035, %v5038
  %v5102 = vmul.f32 %v5036, %v5038
  %v5104 = vlaneseq
  %v5105 = vshrl.u32 %v5104, 7
  %v5106 = vsub.s32 0, %v5105
  %v5107 = vrot.slane %v4636, %v5106
  %v5109 = vmul.f32 %v5039, %v5107
  %v5110 = vmul.f32 %v5040, %v5107
  %v5111 = vmul.f32 %v5041, %v5107
  %v5112 = vmul.f32 %v5042, %v5107
  %v5113 = vmul.f32 %v5043, %v5107
  %v5114 = vmul.f32 %v5044, %v5107
  %v5115 = vmul.f32 %v5045, %v5107
  %v5116 = vmul.f32 %v5046, %v5107
  %v5117 = vmul.f32 %v5047, %v5107
  %v5118 = vmul.f32 %v5048, %v5107
  %v5119 = vmul.f32 %v5049, %v5107
  %v5120 = vmul.f32 %v5050, %v5107
  %v5121 = vmul.f32 %v5051, %v5107
  %v5122 = vmul.f32 %v5052, %v5107
  %v5123 = vmul.f32 %v5053, %v5107
  %v5124 = vmul.f32 %v5054, %v5107
  %v5125 = vmul.f32 %v5055, %v5107
  %v5126 = vmul.f32 %v5056, %v5107
  %v5127 = vmul.f32 %v5057, %v5107
  %v5128 = vmul.f32 %v5058, %v5107
  %v5129 = vmul.f32 %v5059, %v5107
  %v5130 = vmul.f32 %v5060, %v5107
  %v5131 = vmul.f32 %v5061, %v5107
  %v5132 = vmul.f32 %v5062, %v5107
  %v5133 = vmul.f32 %v5063, %v5107
  %v5134 = vmul.f32 %v5064, %v5107
  %v5135 = vmul.f32 %v5065, %v5107
  %v5136 = vmul.f32 %v5066, %v5107
  %v5137 = vmul.f32 %v5067, %v5107
  %v5138 = vmul.f32 %v5068, %v5107
  %v5139 = vmul.f32 %v5069, %v5107
  %v5140 = vmul.f32 %v5070, %v5107
  %v5141 = vmul.f32 %v5071, %v5107
  %v5142 = vmul.f32 %v5072, %v5107
  %v5143 = vmul.f32 %v5073, %v5107
  %v5144 = vmul.f32 %v5074, %v5107
  %v5145 = vmul.f32 %v5075, %v5107
  %v5146 = vmul.f32 %v5076, %v5107
  %v5147 = vmul.f32 %v5077, %v5107
  %v5148 = vmul.f32 %v5078, %v5107
  %v5149 = vmul.f32 %v5079, %v5107
  %v5150 = vmul.f32 %v5080, %v5107
  %v5151 = vmul.f32 %v5081, %v5107
  %v5152 = vmul.f32 %v5082, %v5107
  %v5153 = vmul.f32 %v5083, %v5107
  %v5154 = vmul.f32 %v5084, %v5107
  %v5155 = vmul.f32 %v5085, %v5107
  %v5156 = vmul.f32 %v5086, %v5107
  %v5157 = vmul.f32 %v5087, %v5107
  %v5158 = vmul.f32 %v5088, %v5107
  %v5159 = vmul.f32 %v5089, %v5107
  %v5160 = vmul.f32 %v5090, %v5107
  %v5161 = vmul.f32 %v5091, %v5107
  %v5162 = vmul.f32 %v5092, %v5107
  %v5163 = vmul.f32 %v5093, %v5107
  %v5164 = vmul.f32 %v5094, %v5107
  %v5165 = vmul.f32 %v5095, %v5107
  %v5166 = vmul.f32 %v5096, %v5107
  %v5167 = vmul.f32 %v5097, %v5107
  %v5168 = vmul.f32 %v5098, %v5107
  %v5169 = vmul.f32 %v5099, %v5107
  %v5170 = vmul.f32 %v5100, %v5107
  %v5171 = vmul.f32 %v5101, %v5107
  %v5172 = vmul.f32 %v5102, %v5107
  %v5174 = vlaneseq
  %v5175 = vshrl.u32 %v5174, 7
  %v5176 = vsub.s32 0, %v5175
  %v5177 = vrot.slane %v4637, %v5176
  %v5179 = vadd.f32 %v5109, %v5177
  %v5180 = vadd.f32 %v5110, %v5177
  %v5181 = vadd.f32 %v5111, %v5177
  %v5182 = vadd.f32 %v5112, %v5177
  %v5183 = vadd.f32 %v5113, %v5177
  %v5184 = vadd.f32 %v5114, %v5177
  %v5185 = vadd.f32 %v5115, %v5177
  %v5186 = vadd.f32 %v5116, %v5177
  %v5187 = vadd.f32 %v5117, %v5177
  %v5188 = vadd.f32 %v5118, %v5177
  %v5189 = vadd.f32 %v5119, %v5177
  %v5190 = vadd.f32 %v5120, %v5177
  %v5191 = vadd.f32 %v5121, %v5177
  %v5192 = vadd.f32 %v5122, %v5177
  %v5193 = vadd.f32 %v5123, %v5177
  %v5194 = vadd.f32 %v5124, %v5177
  %v5195 = vadd.f32 %v5125, %v5177
  %v5196 = vadd.f32 %v5126, %v5177
  %v5197 = vadd.f32 %v5127, %v5177
  %v5198 = vadd.f32 %v5128, %v5177
  %v5199 = vadd.f32 %v5129, %v5177
  %v5200 = vadd.f32 %v5130, %v5177
  %v5201 = vadd.f32 %v5131, %v5177
  %v5202 = vadd.f32 %v5132, %v5177
  %v5203 = vadd.f32 %v5133, %v5177
  %v5204 = vadd.f32 %v5134, %v5177
  %v5205 = vadd.f32 %v5135, %v5177
  %v5206 = vadd.f32 %v5136, %v5177
  %v5207 = vadd.f32 %v5137, %v5177
  %v5208 = vadd.f32 %v5138, %v5177
  %v5209 = vadd.f32 %v5139, %v5177
  %v5210 = vadd.f32 %v5140, %v5177
  %v5211 = vadd.f32 %v5141, %v5177
  %v5212 = vadd.f32 %v5142, %v5177
  %v5213 = vadd.f32 %v5143, %v5177
  %v5214 = vadd.f32 %v5144, %v5177
  %v5215 = vadd.f32 %v5145, %v5177
  %v5216 = vadd.f32 %v5146, %v5177
  %v5217 = vadd.f32 %v5147, %v5177
  %v5218 = vadd.f32 %v5148, %v5177
  %v5219 = vadd.f32 %v5149, %v5177
  %v5220 = vadd.f32 %v5150, %v5177
  %v5221 = vadd.f32 %v5151, %v5177
  %v5222 = vadd.f32 %v5152, %v5177
  %v5223 = vadd.f32 %v5153, %v5177
  %v5224 = vadd.f32 %v5154, %v5177
  %v5225 = vadd.f32 %v5155, %v5177
  %v5226 = vadd.f32 %v5156, %v5177
  %v5227 = vadd.f32 %v5157, %v5177
  %v5228 = vadd.f32 %v5158, %v5177
  %v5229 = vadd.f32 %v5159, %v5177
  %v5230 = vadd.f32 %v5160, %v5177
  %v5231 = vadd.f32 %v5161, %v5177
  %v5232 = vadd.f32 %v5162, %v5177
  %v5233 = vadd.f32 %v5163, %v5177
  %v5234 = vadd.f32 %v5164, %v5177
  %v5235 = vadd.f32 %v5165, %v5177
  %v5236 = vadd.f32 %v5166, %v5177
  %v5237 = vadd.f32 %v5167, %v5177
  %v5238 = vadd.f32 %v5168, %v5177
  %v5239 = vadd.f32 %v5169, %v5177
  %v5240 = vadd.f32 %v5170, %v5177
  %v5241 = vadd.f32 %v5171, %v5177
  %v5242 = vadd.f32 %v5172, %v5177
  %v5243 = vadd.f32 %v5179, %v36
  %v5244 = vadd.f32 %v5180, %v37
  %v5245 = vadd.f32 %v5181, %v38
  %v5246 = vadd.f32 %v5182, %v39
  %v5247 = vadd.f32 %v5183, %v40
  %v5248 = vadd.f32 %v5184, %v41
  %v5249 = vadd.f32 %v5185, %v42
  %v5250 = vadd.f32 %v5186, %v43
  %v5251 = vadd.f32 %v5187, %v44
  %v5252 = vadd.f32 %v5188, %v45
  %v5253 = vadd.f32 %v5189, %v46
  %v5254 = vadd.f32 %v5190, %v47
  %v5255 = vadd.f32 %v5191, %v48
  %v5256 = vadd.f32 %v5192, %v49
  %v5257 = vadd.f32 %v5193, %v50
  %v5258 = vadd.f32 %v5194, %v51
  %v5259 = vadd.f32 %v5195, %v52
  %v5260 = vadd.f32 %v5196, %v53
  %v5261 = vadd.f32 %v5197, %v54
  %v5262 = vadd.f32 %v5198, %v55
  %v5263 = vadd.f32 %v5199, %v56
  %v5264 = vadd.f32 %v5200, %v57
  %v5265 = vadd.f32 %v5201, %v58
  %v5266 = vadd.f32 %v5202, %v59
  %v5267 = vadd.f32 %v5203, %v60
  %v5268 = vadd.f32 %v5204, %v61
  %v5269 = vadd.f32 %v5205, %v62
  %v5270 = vadd.f32 %v5206, %v63
  %v5271 = vadd.f32 %v5207, %v64
  %v5272 = vadd.f32 %v5208, %v65
  %v5273 = vadd.f32 %v5209, %v66
  %v5274 = vadd.f32 %v5210, %v67
  %v5275 = vadd.f32 %v5211, %v68
  %v5276 = vadd.f32 %v5212, %v69
  %v5277 = vadd.f32 %v5213, %v70
  %v5278 = vadd.f32 %v5214, %v71
  %v5279 = vadd.f32 %v5215, %v72
  %v5280 = vadd.f32 %v5216, %v73
  %v5281 = vadd.f32 %v5217, %v74
  %v5282 = vadd.f32 %v5218, %v75
  %v5283 = vadd.f32 %v5219, %v76
  %v5284 = vadd.f32 %v5220, %v77
  %v5285 = vadd.f32 %v5221, %v78
  %v5286 = vadd.f32 %v5222, %v79
  %v5287 = vadd.f32 %v5223, %v80
  %v5288 = vadd.f32 %v5224, %v81
  %v5289 = vadd.f32 %v5225, %v82
  %v5290 = vadd.f32 %v5226, %v83
  %v5291 = vadd.f32 %v5227, %v84
  %v5292 = vadd.f32 %v5228, %v85
  %v5293 = vadd.f32 %v5229, %v86
  %v5294 = vadd.f32 %v5230, %v87
  %v5295 = vadd.f32 %v5231, %v88
  %v5296 = vadd.f32 %v5232, %v89
  %v5297 = vadd.f32 %v5233, %v90
  %v5298 = vadd.f32 %v5234, %v91
  %v5299 = vadd.f32 %v5235, %v92
  %v5300 = vadd.f32 %v5236, %v93
  %v5301 = vadd.f32 %v5237, %v94
  %v5302 = vadd.f32 %v5238, %v95
  %v5303 = vadd.f32 %v5239, %v96
  %v5304 = vadd.f32 %v5240, %v97
  %v5305 = vadd.f32 %v5241, %v98
  %v5306 = vadd.f32 %v5242, %v99
  %5307 = vst.msk [vmem:[%s10] sm:$0xff] %vm148, %v5243
  %5308 = vst.msk [vmem:[%s10 + $0x8] sm:$0xff] %vm148, %v5244
  %5309 = vst.msk [vmem:[%s10 + $0x10] sm:$0xff] %vm148, %v5245
  %5310 = vst.msk [vmem:[%s10 + $0x18] sm:$0xff] %vm148, %v5246
  %5311 = vst.msk [vmem:[%s10 + $0x20] sm:$0xff] %vm148, %v5247
  %5312 = vst.msk [vmem:[%s10 + $0x28] sm:$0xff] %vm148, %v5248
  %5313 = vst.msk [vmem:[%s10 + $0x30] sm:$0xff] %vm148, %v5249
  %5314 = vst.msk [vmem:[%s10 + $0x38] sm:$0xff] %vm148, %v5250
  %5315 = vst.msk [vmem:[%s10 + $0x40] sm:$0xff] %vm148, %v5251
  %5316 = vst.msk [vmem:[%s10 + $0x48] sm:$0xff] %vm148, %v5252
  %5317 = vst.msk [vmem:[%s10 + $0x50] sm:$0xff] %vm148, %v5253
  %5318 = vst.msk [vmem:[%s10 + $0x58] sm:$0xff] %vm148, %v5254
  %5319 = vst.msk [vmem:[%s10 + $0x60] sm:$0xff] %vm148, %v5255
  %5320 = vst.msk [vmem:[%s10 + $0x68] sm:$0xff] %vm148, %v5256
  %5321 = vst.msk [vmem:[%s10 + $0x70] sm:$0xff] %vm148, %v5257
  %5322 = vst.msk [vmem:[%s10 + $0x78] sm:$0xff] %vm148, %v5258
  %5323 = vst.msk [vmem:[%s10 + $0x80] sm:$0xff] %vm148, %v5259
  %5324 = vst.msk [vmem:[%s10 + $0x88] sm:$0xff] %vm148, %v5260
  %5325 = vst.msk [vmem:[%s10 + $0x90] sm:$0xff] %vm148, %v5261
  %5326 = vst.msk [vmem:[%s10 + $0x98] sm:$0xff] %vm148, %v5262
  %5327 = vst.msk [vmem:[%s10 + $0xa0] sm:$0xff] %vm148, %v5263
  %5328 = vst.msk [vmem:[%s10 + $0xa8] sm:$0xff] %vm148, %v5264
  %5329 = vst.msk [vmem:[%s10 + $0xb0] sm:$0xff] %vm148, %v5265
  %5330 = vst.msk [vmem:[%s10 + $0xb8] sm:$0xff] %vm148, %v5266
  %5331 = vst.msk [vmem:[%s10 + $0xc0] sm:$0xff] %vm148, %v5267
  %5332 = vst.msk [vmem:[%s10 + $0xc8] sm:$0xff] %vm148, %v5268
  %5333 = vst.msk [vmem:[%s10 + $0xd0] sm:$0xff] %vm148, %v5269
  %5334 = vst.msk [vmem:[%s10 + $0xd8] sm:$0xff] %vm148, %v5270
  %5335 = vst.msk [vmem:[%s10 + $0xe0] sm:$0xff] %vm148, %v5271
  %5336 = vst.msk [vmem:[%s10 + $0xe8] sm:$0xff] %vm148, %v5272
  %5337 = vst.msk [vmem:[%s10 + $0xf0] sm:$0xff] %vm148, %v5273
  %5338 = vst.msk [vmem:[%s10 + $0xf8] sm:$0xff] %vm148, %v5274
  %5339 = vst.msk [vmem:[%s10 + $0x100] sm:$0xff] %vm148, %v5275
  %5340 = vst.msk [vmem:[%s10 + $0x108] sm:$0xff] %vm148, %v5276
  %5341 = vst.msk [vmem:[%s10 + $0x110] sm:$0xff] %vm148, %v5277
  %5342 = vst.msk [vmem:[%s10 + $0x118] sm:$0xff] %vm148, %v5278
  %5343 = vst.msk [vmem:[%s10 + $0x120] sm:$0xff] %vm148, %v5279
  %5344 = vst.msk [vmem:[%s10 + $0x128] sm:$0xff] %vm148, %v5280
  %5345 = vst.msk [vmem:[%s10 + $0x130] sm:$0xff] %vm148, %v5281
  %5346 = vst.msk [vmem:[%s10 + $0x138] sm:$0xff] %vm148, %v5282
  %5347 = vst.msk [vmem:[%s10 + $0x140] sm:$0xff] %vm148, %v5283
  %5348 = vst.msk [vmem:[%s10 + $0x148] sm:$0xff] %vm148, %v5284
  %5349 = vst.msk [vmem:[%s10 + $0x150] sm:$0xff] %vm148, %v5285
  %5350 = vst.msk [vmem:[%s10 + $0x158] sm:$0xff] %vm148, %v5286
  %5351 = vst.msk [vmem:[%s10 + $0x160] sm:$0xff] %vm148, %v5287
  %5352 = vst.msk [vmem:[%s10 + $0x168] sm:$0xff] %vm148, %v5288
  %5353 = vst.msk [vmem:[%s10 + $0x170] sm:$0xff] %vm148, %v5289
  %5354 = vst.msk [vmem:[%s10 + $0x178] sm:$0xff] %vm148, %v5290
  %5355 = vst.msk [vmem:[%s10 + $0x180] sm:$0xff] %vm148, %v5291
  %5356 = vst.msk [vmem:[%s10 + $0x188] sm:$0xff] %vm148, %v5292
  %5357 = vst.msk [vmem:[%s10 + $0x190] sm:$0xff] %vm148, %v5293
  %5358 = vst.msk [vmem:[%s10 + $0x198] sm:$0xff] %vm148, %v5294
  %5359 = vst.msk [vmem:[%s10 + $0x1a0] sm:$0xff] %vm148, %v5295
  %5360 = vst.msk [vmem:[%s10 + $0x1a8] sm:$0xff] %vm148, %v5296
  %5361 = vst.msk [vmem:[%s10 + $0x1b0] sm:$0xff] %vm148, %v5297
  %5362 = vst.msk [vmem:[%s10 + $0x1b8] sm:$0xff] %vm148, %v5298
  %5363 = vst.msk [vmem:[%s10 + $0x1c0] sm:$0xff] %vm148, %v5299
  %5364 = vst.msk [vmem:[%s10 + $0x1c8] sm:$0xff] %vm148, %v5300
  %5365 = vst.msk [vmem:[%s10 + $0x1d0] sm:$0xff] %vm148, %v5301
  %5366 = vst.msk [vmem:[%s10 + $0x1d8] sm:$0xff] %vm148, %v5302
  %5367 = vst.msk [vmem:[%s10 + $0x1e0] sm:$0xff] %vm148, %v5303
  %5368 = vst.msk [vmem:[%s10 + $0x1e8] sm:$0xff] %vm148, %v5304
  %5369 = vst.msk [vmem:[%s10 + $0x1f0] sm:$0xff] %vm148, %v5305
  %5370 = vst.msk [vmem:[%s10 + $0x1f8] sm:$0xff] %vm148, %v5306
  // Predicated region
  $region42: #{tpu_custom_call.1} parent=0 // pred_check
    _
  $region43: #{tpu_custom_call.1} parent=0 // pred_check_branch
    %5372 = sbr.rel (0) target = $region45
  $region44: #{tpu_custom_call.1} parent=0 // pred_region
    _
  $region45: #{tpu_custom_call.1} parent=0 // pred_fallthru
    _
  // Predicated region
  $region46: #{tpu_custom_call.1} parent=0 // pred_check
    _
  $region47: #{tpu_custom_call.1} parent=0 // pred_check_branch
    %5374 = sbr.rel (0) target = $region49
  $region48: #{tpu_custom_call.1} parent=0 // pred_region
    _
  $region49: #{tpu_custom_call.1} parent=0 // pred_fallthru
    _

</llo_original>
